<compile_context>
chip_gen: v7x
topology: tpu7x:2x2x1
jax: 0.10.0
libtpu: 0.0.40
codegen_flags: <defaults>
</compile_context>

<pallas_src>
import jax
import jax.numpy as jnp
from jax.experimental import pallas as pl
from jax.experimental.pallas import tpu as pltpu


def _round_up(x, m):
    return (x + m - 1) // m * m


# ----------------------------- Pallas kernel ------------------------------ #

def _skipgram_fused_kernel(arg_idx_ref, func_idx_ref, ctx_idx_ref,
                           arg_tab_ref, func_tab_ref, ctx_tab_ref,
                           out_ref):
    """One tile of TS samples (samples on the lane axis), gathers fused.

    arg_idx_ref / func_idx_ref / ctx_idx_ref : [1, TS] int32 sample indices
    arg_tab_ref : [E,   Vn_pad]  transposed argument table (VMEM-resident)
    func_tab_ref: [E*E, Vf_pad]  transposed functor table, row i*E+j = M[i, j]
    ctx_tab_ref : [E,   Vc_pad]  transposed context table
    out_ref     : [1, TS]        per-sample score
    """
    E, Vn = arg_tab_ref.shape
    EE, Vf = func_tab_ref.shape
    _, Vc = ctx_tab_ref.shape
    TS = out_ref.shape[1]

    def onehot(idx_ref, V, dtype):
        idx = idx_ref[...]                                        # [1, TS] int32
        iota = jax.lax.broadcasted_iota(jnp.int32, (V, TS), 0)    # [V, TS]
        return (iota == idx).astype(dtype)                        # [V, TS]

    oh_arg = onehot(arg_idx_ref, Vn, arg_tab_ref.dtype)
    oh_ctx = onehot(ctx_idx_ref, Vc, ctx_tab_ref.dtype)
    oh_func = onehot(func_idx_ref, Vf, func_tab_ref.dtype)

    # Gather == table @ one-hot on the MXU (K = 128 multiples), f32 results.
    arg_t = jnp.dot(arg_tab_ref[...], oh_arg,
                    preferred_element_type=jnp.float32)           # [E,  TS]
    ctx_t = jnp.dot(ctx_tab_ref[...], oh_ctx,
                    preferred_element_type=jnp.float32)           # [E,  TS]
    func_t = jnp.dot(func_tab_ref[...], oh_func,
                     preferred_element_type=jnp.float32)          # [EE, TS]

    # score[s] = sum_j arg[j,s] * (sum_i func[i*E+j, s] * ctx[i, s])
    # Accumulate over i with lane-dense multiply-adds; one final 16-deep
    # sublane reduction (minimal XLU work).
    acc = jnp.zeros((E, TS), jnp.float32)
    for i in range(E):
        acc = acc + func_t[i * E:(i + 1) * E, :] * ctx_t[i:i + 1, :]
    out_ref[...] = jnp.sum(acc * arg_t, axis=0, keepdims=True)    # [1, TS]


# ------------------------------ Host wrapper ------------------------------- #

def matrix_skipgram_scores(arg_idx, func_idx, ctx_idx,
                           arg_table_t, func_table_t, ctx_table_t, *, ts=2048):
    """arg_idx/func_idx/ctx_idx: [S] int32.  Tables transposed & vocab-padded.
    Returns scores [S] float32."""
    S = arg_idx.shape[0]
    E, Vn = arg_table_t.shape
    EE, Vf = func_table_t.shape
    E2, Vc = ctx_table_t.shape
    assert EE == E * E and E2 == E

    # Lane-dense sample tiles; keep >=2 grid steps when possible so the
    # 'parallel' axis can feed both v7x TensorCores.
    S128 = _round_up(S, 128)
    tile = _round_up(min(ts, S128), 128)
    if S128 >= 256 and S128 // tile < 2:
        tile = _round_up(-(-S128 // 2), 128)
    S_pad = _round_up(S, tile)

    # Pad the cheap int32 indices (4 B/sample), not gathered embeddings.
    # Index 0 is a valid row; padded lanes are sliced off below.
    def prep_idx(x):
        x = x.astype(jnp.int32)
        if S_pad != S:
            x = jnp.pad(x, (0, S_pad - S))
        return x.reshape(1, S_pad)

    arg_idx = prep_idx(arg_idx)
    func_idx = prep_idx(func_idx)
    ctx_idx = prep_idx(ctx_idx)

    idx_spec = pl.BlockSpec((1, tile), lambda i: (0, i))
    tab_spec = lambda shp: pl.BlockSpec(shp, lambda i: (0, 0))   # whole table, VMEM-resident

    elt = jnp.dtype(arg_table_t.dtype).itemsize
    flops = int(2 * S_pad * (EE * Vf + E * Vn + E * Vc))
    bytes_accessed = int(S_pad * (3 * 4 + 4)
                         + elt * (E * Vn + EE * Vf + E * Vc))

    out = pl.pallas_call(
        _skipgram_fused_kernel,
        out_shape=jax.ShapeDtypeStruct((1, S_pad), jnp.float32),
        grid_spec=pltpu.PrefetchScalarGridSpec(
            num_scalar_prefetch=0,
            grid=(S_pad // tile,),
            in_specs=[idx_spec, idx_spec, idx_spec,
                      tab_spec((E, Vn)), tab_spec((EE, Vf)), tab_spec((E, Vc))],
            out_specs=pl.BlockSpec((1, tile), lambda i: (0, i)),
        ),
        compiler_params=pltpu.CompilerParams(
            dimension_semantics=("parallel",),
            vmem_limit_bytes=32 * 1024 * 1024,
        ),
        cost_estimate=pl.CostEstimate(flops=flops, transcendentals=0,
                                      bytes_accessed=bytes_accessed),
    )(arg_idx, func_idx, ctx_idx, arg_table_t, func_table_t, ctx_table_t)
    return out[0, :S]


# ----------------------------- Module wrapper ------------------------------ #

class MatrixSkipgramPallas:
    """JAX/Pallas equivalent of the PyTorch MatrixSkipgram module."""

    def __init__(self, noun_vocab_size, functor_vocab_size, context_vocab_size,
                 embed_size, noun_matrix, key, param_dtype=jnp.float32):
        assert noun_matrix.shape == (noun_vocab_size, embed_size)
        self.embed_size = embed_size
        k1, k2 = jax.random.split(key)

        def pad_vocab(tab_t):  # [F, V] -> [F, round_up(V, 128)] (zero columns)
            F, V = tab_t.shape
            Vp = _round_up(V, 128)
            return jnp.pad(tab_t, ((0, 0), (0, Vp - V))) if Vp != V else tab_t

        # Tables stored transposed ([features, vocab]) and vocab-padded to 128
        # so the in-kernel one-hot MXU gather is lane/K aligned.
        # Embedding.from_pretrained -> fixed weight.
        self.argument_table_t = pad_vocab(
            jnp.asarray(noun_matrix, jnp.float32).astype(param_dtype).T)        # [E,   Vn_pad]
        # nn.Embedding default init ~ N(0, 1); deterministic here.
        self.functor_table_t = pad_vocab(jax.random.normal(
            k1, (functor_vocab_size, embed_size * embed_size), jnp.float32)
            .astype(param_dtype).T)                                             # [E*E, Vf_pad]
        self.context_table_t = pad_vocab(jax.random.normal(
            k2, (context_vocab_size, embed_size), jnp.float32)
            .astype(param_dtype).T)                                             # [E,   Vc_pad]
        # TODO(synk): the one-hot MXU gather assumes small vocabularies (tables
        # resident in VMEM); very large vocabularies need a DMA-gather variant.

    def __call__(self, X_argument, X_functor, X_context, *, ts=2048):
        B, N = X_argument.shape
        scores = matrix_skipgram_scores(
            X_argument.reshape(-1), X_functor.reshape(-1), X_context.reshape(-1),
            self.argument_table_t, self.functor_table_t, self.context_table_t,
            ts=ts)
        return scores.reshape(B, N)


# --------------------------------- Main ------------------------------------ #

if __name__ == "__main__":
    key = jax.random.PRNGKey(0)
    k_noun, k_model, k_a, k_f, k_c = jax.random.split(key, 5)

    noun_vocab_size = 50
    functor_vocab_size = 30
    context_vocab_size = 40
    embed_size = 16
    batch_size, num_samples = 4, 300      # S = 1200 (ragged vs 128-lane tiles)

    noun_matrix = jax.random.normal(
        k_noun, (noun_vocab_size, embed_size), jnp.float32)

    model = MatrixSkipgramPallas(noun_vocab_size, functor_vocab_size,
                                 context_vocab_size, embed_size,
                                 noun_matrix, k_model)

    X_argument = jax.random.randint(
        k_a, (batch_size, num_samples), 0, noun_vocab_size, jnp.int32)
    X_functor = jax.random.randint(
        k_f, (batch_size, num_samples), 0, functor_vocab_size, jnp.int32)
    X_context = jax.random.randint(
        k_c, (batch_size, num_samples), 0, context_vocab_size, jnp.int32)

    out = jax.block_until_ready(model(X_argument, X_functor, X_context))
    assert out.shape == (batch_size, num_samples)

    # Pure-JAX reference (same math as torch.bmm + sum). Padded table columns
    # are never selected because every index is < its true vocab size.
    E = embed_size
    arg = jnp.take(model.argument_table_t.astype(jnp.float32),
                   X_argument.reshape(-1), axis=1)                    # [E,   S]
    fun = jnp.take(model.functor_table_t.astype(jnp.float32),
                   X_functor.reshape(-1), axis=1)                     # [E*E, S]
    ctx = jnp.take(model.context_table_t.astype(jnp.float32),
                   X_context.reshape(-1), axis=1)                     # [E,   S]
    fun3 = fun.reshape(E, E, -1)                                      # [E, E, S]
    funcarg = jnp.einsum("ijs,js->is", fun3, arg)                     # [E, S]
    ref = jnp.sum(funcarg * ctx, axis=0).reshape(batch_size, num_samples)

    assert jnp.allclose(out, ref, atol=1e-3, rtol=1e-3), (out, ref)
    print("KERNEL_OK")
</pallas_src>

<mosaic_0001>
module attributes {stable_mosaic.version = 11 : i64} {
  func.func @_skipgram_fused_kernel(%arg0: i32, %arg1: memref<1x640xi32, #tpu.memory_space<vmem>>, %arg2: memref<1x640xi32, #tpu.memory_space<vmem>>, %arg3: memref<1x640xi32, #tpu.memory_space<vmem>>, %arg4: memref<16x128xf32, #tpu.memory_space<vmem>>, %arg5: memref<256x128xf32, #tpu.memory_space<vmem>>, %arg6: memref<16x128xf32, #tpu.memory_space<vmem>>, %arg7: memref<1x640xf32, #tpu.memory_space<vmem>>) attributes {dimension_semantics = [#tpu.dimension_semantics<parallel>], iteration_bounds = array<i64: 2>, scalar_prefetch = 0 : i64, scratch_operands = 0 : i64, tpu.core_type = #tpu.core_type<tc>, window_params = [{transform_indices = @transform_0, window_bounds = array<i64: 1, 640>}, {transform_indices = @transform_1, window_bounds = array<i64: 1, 640>}, {transform_indices = @transform_2, window_bounds = array<i64: 1, 640>}, {pipeline_mode = #tpu.pipeline_mode<synchronous>, transform_indices = @transform_3, window_bounds = array<i64: 16, 128>}, {pipeline_mode = #tpu.pipeline_mode<synchronous>, transform_indices = @transform_4, window_bounds = array<i64: 256, 128>}, {pipeline_mode = #tpu.pipeline_mode<synchronous>, transform_indices = @transform_5, window_bounds = array<i64: 16, 128>}, {transform_indices = @transform_6, window_bounds = array<i64: 1, 640>}]} {
    %c0 = arith.constant 0 : index
    %c0_0 = arith.constant 0 : index
    %0 = vector.load %arg1[%c0, %c0_0] : memref<1x640xi32, #tpu.memory_space<vmem>>, vector<1x640xi32>
    %1 = tpu.iota {dimensions = array<i32: 0>} : vector<128x640xi32>
    %2 = vector.broadcast %0 : vector<1x640xi32> to vector<128x640xi32>
    %3 = arith.cmpi eq, %1, %2 : vector<128x640xi32>
    %4 = arith.extui %3 : vector<128x640xi1> to vector<128x640xi32>
    %5 = arith.sitofp %4 : vector<128x640xi32> to vector<128x640xf32>
    %c0_1 = arith.constant 0 : index
    %c0_2 = arith.constant 0 : index
    %6 = vector.load %arg3[%c0_1, %c0_2] : memref<1x640xi32, #tpu.memory_space<vmem>>, vector<1x640xi32>
    %7 = tpu.iota {dimensions = array<i32: 0>} : vector<128x640xi32>
    %8 = vector.broadcast %6 : vector<1x640xi32> to vector<128x640xi32>
    %9 = arith.cmpi eq, %7, %8 : vector<128x640xi32>
    %10 = arith.extui %9 : vector<128x640xi1> to vector<128x640xi32>
    %11 = arith.sitofp %10 : vector<128x640xi32> to vector<128x640xf32>
    %c0_3 = arith.constant 0 : index
    %c0_4 = arith.constant 0 : index
    %12 = vector.load %arg2[%c0_3, %c0_4] : memref<1x640xi32, #tpu.memory_space<vmem>>, vector<1x640xi32>
    %13 = tpu.iota {dimensions = array<i32: 0>} : vector<128x640xi32>
    %14 = vector.broadcast %12 : vector<1x640xi32> to vector<128x640xi32>
    %15 = arith.cmpi eq, %13, %14 : vector<128x640xi32>
    %16 = arith.extui %15 : vector<128x640xi1> to vector<128x640xi32>
    %17 = arith.sitofp %16 : vector<128x640xi32> to vector<128x640xf32>
    %c0_5 = arith.constant 0 : index
    %c0_6 = arith.constant 0 : index
    %18 = vector.load %arg4[%c0_5, %c0_6] : memref<16x128xf32, #tpu.memory_space<vmem>>, vector<16x128xf32>
    %cst = arith.constant dense<0.000000e+00> : vector<16x640xf32>
    %19 = tpu.matmul %18, %5, %cst {dimension_numbers = #tpu.dot_dimension_numbers<[1], [0], [0], [1], [0, 0, 1, 1], [], []>} : vector<16x128xf32>, vector<128x640xf32>, vector<16x640xf32> -> vector<16x640xf32>
    %c0_7 = arith.constant 0 : index
    %c0_8 = arith.constant 0 : index
    %20 = vector.load %arg6[%c0_7, %c0_8] : memref<16x128xf32, #tpu.memory_space<vmem>>, vector<16x128xf32>
    %cst_9 = arith.constant dense<0.000000e+00> : vector<16x640xf32>
    %21 = tpu.matmul %20, %11, %cst_9 {dimension_numbers = #tpu.dot_dimension_numbers<[1], [0], [0], [1], [0, 0, 1, 1], [], []>} : vector<16x128xf32>, vector<128x640xf32>, vector<16x640xf32> -> vector<16x640xf32>
    %c0_10 = arith.constant 0 : index
    %c0_11 = arith.constant 0 : index
    %22 = vector.load %arg5[%c0_10, %c0_11] : memref<256x128xf32, #tpu.memory_space<vmem>>, vector<256x128xf32>
    %cst_12 = arith.constant dense<0.000000e+00> : vector<256x640xf32>
    %23 = tpu.matmul %22, %17, %cst_12 {dimension_numbers = #tpu.dot_dimension_numbers<[1], [0], [0], [1], [0, 0, 1, 1], [], []>} : vector<256x128xf32>, vector<128x640xf32>, vector<256x640xf32> -> vector<256x640xf32>
    %cst_13 = arith.constant 0.000000e+00 : f32
    %24 = vector.broadcast %cst_13 : f32 to vector<16x640xf32>
    %25 = vector.extract_strided_slice %23 {offsets = [0, 0], sizes = [16, 640], strides = [1, 1]} : vector<256x640xf32> to vector<16x640xf32>
    %26 = vector.extract_strided_slice %21 {offsets = [0, 0], sizes = [1, 640], strides = [1, 1]} : vector<16x640xf32> to vector<1x640xf32>
    %27 = vector.broadcast %26 : vector<1x640xf32> to vector<16x640xf32>
    %28 = arith.mulf %25, %27 : vector<16x640xf32>
    %29 = arith.addf %24, %28 : vector<16x640xf32>
    %30 = vector.extract_strided_slice %23 {offsets = [16, 0], sizes = [16, 640], strides = [1, 1]} : vector<256x640xf32> to vector<16x640xf32>
    %31 = vector.extract_strided_slice %21 {offsets = [1, 0], sizes = [1, 640], strides = [1, 1]} : vector<16x640xf32> to vector<1x640xf32>
    %32 = vector.broadcast %31 : vector<1x640xf32> to vector<16x640xf32>
    %33 = arith.mulf %30, %32 : vector<16x640xf32>
    %34 = arith.addf %29, %33 : vector<16x640xf32>
    %35 = vector.extract_strided_slice %23 {offsets = [32, 0], sizes = [16, 640], strides = [1, 1]} : vector<256x640xf32> to vector<16x640xf32>
    %36 = vector.extract_strided_slice %21 {offsets = [2, 0], sizes = [1, 640], strides = [1, 1]} : vector<16x640xf32> to vector<1x640xf32>
    %37 = vector.broadcast %36 : vector<1x640xf32> to vector<16x640xf32>
    %38 = arith.mulf %35, %37 : vector<16x640xf32>
    %39 = arith.addf %34, %38 : vector<16x640xf32>
    %40 = vector.extract_strided_slice %23 {offsets = [48, 0], sizes = [16, 640], strides = [1, 1]} : vector<256x640xf32> to vector<16x640xf32>
    %41 = vector.extract_strided_slice %21 {offsets = [3, 0], sizes = [1, 640], strides = [1, 1]} : vector<16x640xf32> to vector<1x640xf32>
    %42 = vector.broadcast %41 : vector<1x640xf32> to vector<16x640xf32>
    %43 = arith.mulf %40, %42 : vector<16x640xf32>
    %44 = arith.addf %39, %43 : vector<16x640xf32>
    %45 = vector.extract_strided_slice %23 {offsets = [64, 0], sizes = [16, 640], strides = [1, 1]} : vector<256x640xf32> to vector<16x640xf32>
    %46 = vector.extract_strided_slice %21 {offsets = [4, 0], sizes = [1, 640], strides = [1, 1]} : vector<16x640xf32> to vector<1x640xf32>
    %47 = vector.broadcast %46 : vector<1x640xf32> to vector<16x640xf32>
    %48 = arith.mulf %45, %47 : vector<16x640xf32>
    %49 = arith.addf %44, %48 : vector<16x640xf32>
    %50 = vector.extract_strided_slice %23 {offsets = [80, 0], sizes = [16, 640], strides = [1, 1]} : vector<256x640xf32> to vector<16x640xf32>
    %51 = vector.extract_strided_slice %21 {offsets = [5, 0], sizes = [1, 640], strides = [1, 1]} : vector<16x640xf32> to vector<1x640xf32>
    %52 = vector.broadcast %51 : vector<1x640xf32> to vector<16x640xf32>
    %53 = arith.mulf %50, %52 : vector<16x640xf32>
    %54 = arith.addf %49, %53 : vector<16x640xf32>
    %55 = vector.extract_strided_slice %23 {offsets = [96, 0], sizes = [16, 640], strides = [1, 1]} : vector<256x640xf32> to vector<16x640xf32>
    %56 = vector.extract_strided_slice %21 {offsets = [6, 0], sizes = [1, 640], strides = [1, 1]} : vector<16x640xf32> to vector<1x640xf32>
    %57 = vector.broadcast %56 : vector<1x640xf32> to vector<16x640xf32>
    %58 = arith.mulf %55, %57 : vector<16x640xf32>
    %59 = arith.addf %54, %58 : vector<16x640xf32>
    %60 = vector.extract_strided_slice %23 {offsets = [112, 0], sizes = [16, 640], strides = [1, 1]} : vector<256x640xf32> to vector<16x640xf32>
    %61 = vector.extract_strided_slice %21 {offsets = [7, 0], sizes = [1, 640], strides = [1, 1]} : vector<16x640xf32> to vector<1x640xf32>
    %62 = vector.broadcast %61 : vector<1x640xf32> to vector<16x640xf32>
    %63 = arith.mulf %60, %62 : vector<16x640xf32>
    %64 = arith.addf %59, %63 : vector<16x640xf32>
    %65 = vector.extract_strided_slice %23 {offsets = [128, 0], sizes = [16, 640], strides = [1, 1]} : vector<256x640xf32> to vector<16x640xf32>
    %66 = vector.extract_strided_slice %21 {offsets = [8, 0], sizes = [1, 640], strides = [1, 1]} : vector<16x640xf32> to vector<1x640xf32>
    %67 = vector.broadcast %66 : vector<1x640xf32> to vector<16x640xf32>
    %68 = arith.mulf %65, %67 : vector<16x640xf32>
    %69 = arith.addf %64, %68 : vector<16x640xf32>
    %70 = vector.extract_strided_slice %23 {offsets = [144, 0], sizes = [16, 640], strides = [1, 1]} : vector<256x640xf32> to vector<16x640xf32>
    %71 = vector.extract_strided_slice %21 {offsets = [9, 0], sizes = [1, 640], strides = [1, 1]} : vector<16x640xf32> to vector<1x640xf32>
    %72 = vector.broadcast %71 : vector<1x640xf32> to vector<16x640xf32>
    %73 = arith.mulf %70, %72 : vector<16x640xf32>
    %74 = arith.addf %69, %73 : vector<16x640xf32>
    %75 = vector.extract_strided_slice %23 {offsets = [160, 0], sizes = [16, 640], strides = [1, 1]} : vector<256x640xf32> to vector<16x640xf32>
    %76 = vector.extract_strided_slice %21 {offsets = [10, 0], sizes = [1, 640], strides = [1, 1]} : vector<16x640xf32> to vector<1x640xf32>
    %77 = vector.broadcast %76 : vector<1x640xf32> to vector<16x640xf32>
    %78 = arith.mulf %75, %77 : vector<16x640xf32>
    %79 = arith.addf %74, %78 : vector<16x640xf32>
    %80 = vector.extract_strided_slice %23 {offsets = [176, 0], sizes = [16, 640], strides = [1, 1]} : vector<256x640xf32> to vector<16x640xf32>
    %81 = vector.extract_strided_slice %21 {offsets = [11, 0], sizes = [1, 640], strides = [1, 1]} : vector<16x640xf32> to vector<1x640xf32>
    %82 = vector.broadcast %81 : vector<1x640xf32> to vector<16x640xf32>
    %83 = arith.mulf %80, %82 : vector<16x640xf32>
    %84 = arith.addf %79, %83 : vector<16x640xf32>
    %85 = vector.extract_strided_slice %23 {offsets = [192, 0], sizes = [16, 640], strides = [1, 1]} : vector<256x640xf32> to vector<16x640xf32>
    %86 = vector.extract_strided_slice %21 {offsets = [12, 0], sizes = [1, 640], strides = [1, 1]} : vector<16x640xf32> to vector<1x640xf32>
    %87 = vector.broadcast %86 : vector<1x640xf32> to vector<16x640xf32>
    %88 = arith.mulf %85, %87 : vector<16x640xf32>
    %89 = arith.addf %84, %88 : vector<16x640xf32>
    %90 = vector.extract_strided_slice %23 {offsets = [208, 0], sizes = [16, 640], strides = [1, 1]} : vector<256x640xf32> to vector<16x640xf32>
    %91 = vector.extract_strided_slice %21 {offsets = [13, 0], sizes = [1, 640], strides = [1, 1]} : vector<16x640xf32> to vector<1x640xf32>
    %92 = vector.broadcast %91 : vector<1x640xf32> to vector<16x640xf32>
    %93 = arith.mulf %90, %92 : vector<16x640xf32>
    %94 = arith.addf %89, %93 : vector<16x640xf32>
    %95 = vector.extract_strided_slice %23 {offsets = [224, 0], sizes = [16, 640], strides = [1, 1]} : vector<256x640xf32> to vector<16x640xf32>
    %96 = vector.extract_strided_slice %21 {offsets = [14, 0], sizes = [1, 640], strides = [1, 1]} : vector<16x640xf32> to vector<1x640xf32>
    %97 = vector.broadcast %96 : vector<1x640xf32> to vector<16x640xf32>
    %98 = arith.mulf %95, %97 : vector<16x640xf32>
    %99 = arith.addf %94, %98 : vector<16x640xf32>
    %100 = vector.extract_strided_slice %23 {offsets = [240, 0], sizes = [16, 640], strides = [1, 1]} : vector<256x640xf32> to vector<16x640xf32>
    %101 = vector.extract_strided_slice %21 {offsets = [15, 0], sizes = [1, 640], strides = [1, 1]} : vector<16x640xf32> to vector<1x640xf32>
    %102 = vector.broadcast %101 : vector<1x640xf32> to vector<16x640xf32>
    %103 = arith.mulf %100, %102 : vector<16x640xf32>
    %104 = arith.addf %99, %103 : vector<16x640xf32>
    %105 = arith.mulf %104, %19 : vector<16x640xf32>
    %cst_14 = arith.constant dense<0.000000e+00> : vector<640xf32>
    %106 = vector.multi_reduction <add>, %105, %cst_14 [0] : vector<16x640xf32> to vector<640xf32>
    %107 = vector.shape_cast %106 : vector<640xf32> to vector<1x640xf32>
    %c0_15 = arith.constant 0 : index
    %c0_16 = arith.constant 0 : index
    %108 = vector.load %arg7[%c0_15, %c0_16] : memref<1x640xf32, #tpu.memory_space<vmem>>, vector<1x640xf32>
    tpu.vector_store %arg7[%c0_15, %c0_16], %107 {strides = array<i32>} : memref<1x640xf32, #tpu.memory_space<vmem>>, vector<1x640xf32>,
    return
  }
  func.func @transform_0(%arg0: i32) -> (i32, i32) {
    %c0_i32 = arith.constant 0 : i32
    %c0_i32_0 = arith.constant 0 : i32
    return %c0_i32, %arg0 : i32, i32
  }
  func.func @transform_1(%arg0: i32) -> (i32, i32) {
    %c0_i32 = arith.constant 0 : i32
    %c0_i32_0 = arith.constant 0 : i32
    return %c0_i32, %arg0 : i32, i32
  }
  func.func @transform_2(%arg0: i32) -> (i32, i32) {
    %c0_i32 = arith.constant 0 : i32
    %c0_i32_0 = arith.constant 0 : i32
    return %c0_i32, %arg0 : i32, i32
  }
  func.func @transform_3(%arg0: i32) -> (i32, i32) {
    %c0_i32 = arith.constant 0 : i32
    %c0_i32_0 = arith.constant 0 : i32
    %c0_i32_1 = arith.constant 0 : i32
    return %c0_i32, %c0_i32_0 : i32, i32
  }
  func.func @transform_4(%arg0: i32) -> (i32, i32) {
    %c0_i32 = arith.constant 0 : i32
    %c0_i32_0 = arith.constant 0 : i32
    %c0_i32_1 = arith.constant 0 : i32
    return %c0_i32, %c0_i32_0 : i32, i32
  }
  func.func @transform_5(%arg0: i32) -> (i32, i32) {
    %c0_i32 = arith.constant 0 : i32
    %c0_i32_0 = arith.constant 0 : i32
    %c0_i32_1 = arith.constant 0 : i32
    return %c0_i32, %c0_i32_0 : i32, i32
  }
  func.func @transform_6(%arg0: i32) -> (i32, i32) {
    %c0_i32 = arith.constant 0 : i32
    %c0_i32_0 = arith.constant 0 : i32
    return %c0_i32, %arg0 : i32, i32
  }
}

</mosaic_0001>

<llo_original>
// kernel: tpu_custom_call.1
$region0: #{tpu_custom_call.1}
  #allocation0 [shape = 'u32[]', space=smem, size = 0x4, offset = 0x4, fixed_abs, tag = 'smem constant byte address 0x4 - core index']
  #allocation1 [shape = 'u32[144,128]{1,0:T(1,128)}', space=vmem, size = 0x12000, scoped, tag = 'internal scratch']
  %s0 = inlined_call_operand.hbm [shape: s32[1,1280], index: 0, kind: input, shape index: {}]
  %s1 = inlined_call_operand.hbm [shape: s32[1,1280], index: 1, kind: input, shape index: {}]
  %s2 = inlined_call_operand.hbm [shape: s32[1,1280], index: 2, kind: input, shape index: {}]
  %s3 = inlined_call_operand.hbm [shape: f32[16,128], index: 3, kind: input, shape index: {}]
  %s4 = inlined_call_operand.hbm [shape: f32[256,128], index: 4, kind: input, shape index: {}]
  %s5 = inlined_call_operand.vmem [shape: f32[16,128], index: 5, kind: input, shape index: {}]
  %s6 = inlined_call_operand.hbm [shape: f32[1,1280], index: 6, kind: output, shape index: {}]
  %s7 = sld [smem:[#allocation0]]
  $region77: #{tpu_custom_call.1} parent=0
    _
  %s9 = ssub.s32 1, %s7
  %s10 = scalar_select 0, %s9, %s7
  $region1: #{tpu_custom_call.1} parent=0
    #allocation2 [shape = 'u8[5120]{0}', space=vmem, size = 0x1400, scoped, tag = 'input window, operand 0']
    #allocation3 [shape = 's32[2]{0}', space=sflag, size = 0x8, scoped, tag = 'scoped memory for tpu_custom_call.1']
    #allocation4 [shape = 's32[2]{0}', space=sflag, size = 0x8, scoped, tag = 'scoped memory for tpu_custom_call.1']
    #allocation5 [shape = 'u8[5120]{0}', space=vmem, size = 0x1400, scoped, tag = 'input window, operand 1']
    #allocation6 [shape = 's32[2]{0}', space=sflag, size = 0x8, scoped, tag = 'scoped memory for tpu_custom_call.1']
    #allocation7 [shape = 'u8[5120]{0}', space=vmem, size = 0x1400, scoped, tag = 'input window, operand 2']
    #allocation8 [shape = 'u8[8192]{0}', space=vmem, size = 0x2000, scoped, tag = 'input window, operand 3, single buffered']
    #allocation9 [shape = 's32[1]{0}', space=sflag, size = 0x4, scoped, tag = 'scoped memory for tpu_custom_call.1']
    #allocation10 [shape = 'u8[131072]{0}', space=vmem, size = 0x20000, scoped, tag = 'input window, operand 4, single buffered']
    #allocation11 [shape = 'u8[5120]{0}', space=vmem, size = 0x1400, scoped, tag = 'output window, operand 0']
    %11 = vsyncpa [#allocation3], 0
    %s12 = scalar_lea.sflag [#allocation3], 1
    %13 = vsyncpa %s12, 0
    %14 = vsyncpa [#allocation6], 0
    %s15 = scalar_lea.sflag [#allocation6], 1
    %16 = vsyncpa %s15, 0
    %17 = vsyncpa [#allocation9], 0
    %18 = vsyncpa [#allocation4], 0
    %s19 = scalar_lea.sflag [#allocation4], 1
    %20 = vsyncpa %s19, 0
    loop: start=0, step=1, limit=4
    $region2: #{tpu_custom_call.1} parent=1 // loop_pre_header
      _
    $region3: #{tpu_custom_call.1} parent=1 // loop_header
      %s22 = sphi 0, %s26
      %p23 = scmp.ge.s32.totalorder %s22, 4
      %s32 = sphi 0, %s34
      %s35 = sphi 0, %s32
      %s36 = sphi 0, %s35
      %s52 = sphi 0, %s36
      %s58 = sphi 0, %s60
      %s61 = sphi 0, %s58
      %s62 = sphi 0, %s61
      %s78 = sphi 0, %s62
      %s84 = sphi 0, %s86
      %s87 = sphi 0, %s84
      %s88 = sphi 0, %s87
      %s104 = sphi 0, %s88
      %s108 = sphi 0, %s108
      %s110 = sphi 0, %s108
      %s111 = sphi 0, %s110
      %s125 = sphi 0, %s111
      %s129 = sphi 0, %s129
      %s131 = sphi 0, %s129
      %s132 = sphi 0, %s131
      %s146 = sphi 0, %s132
      %s150 = sphi 0, %s150
      %s152 = sphi 0, %s150
      %s153 = sphi 0, %s152
      %s167 = sphi 0, %s153
      %s173 = sphi 0, %s175
      %s176 = sphi 0, %s173
      %s177 = sphi 0, %s176
      %s193 = sphi 0, %s177
    $region4: #{tpu_custom_call.1} parent=1 // loop_header_branch
      %25 = sbr.rel (%p23) target = $region8
    $region5: #{tpu_custom_call.1} parent=1 // loop_body
      %s27 = ssub.s32 %s22, 1
      %s28 = ssub.s32 %s22, 2
      %s29 = sadd.s32 %s22, 1
      %s30 = ssub.s32 %s22, %s29
      %p31 = scmp.eq.s32.totalorder %s30, 0
      %s33 = sadd.s32 %s32, 1
      %s34 = scalar_select %p31, %s32, %s33
      %p37 = pneg %p31
      %p38 = scmp.eq.s32.totalorder %s22, 1
      %p39 = por %p37, %p38
      %p40 = scmp.ne.s32.totalorder %s32, %s35
      %p41 = scmp.eq.s32.totalorder %s22, 0
      %p42 = por %p40, %p41
      %p43 = scmp.ne.s32.totalorder %s32, %s35
      %p44 = scmp.eq.s32.totalorder %s27, 1
      %p45 = por %p43, %p44
      %p46 = scmp.ne.s32.totalorder %s35, %s36
      %p47 = scmp.eq.s32.totalorder %s27, 0
      %p48 = por %p46, %p47
      %p49 = scmp.ne.s32.totalorder %s35, %s36
      %p50 = scmp.eq.s32.totalorder %s28, 1
      %p51 = por %p49, %p50
      %p53 = scmp.ne.s32.totalorder %s36, %s52
      %p54 = scmp.eq.s32.totalorder %s28, 0
      %p55 = por %p53, %p54
      %s56 = ssub.s32 %s22, %s29
      %p57 = scmp.eq.s32.totalorder %s56, 0
      %s59 = sadd.s32 %s58, 1
      %s60 = scalar_select %p57, %s58, %s59
      %p63 = pneg %p57
      %p64 = scmp.eq.s32.totalorder %s22, 1
      %p65 = por %p63, %p64
      %p66 = scmp.ne.s32.totalorder %s58, %s61
      %p67 = scmp.eq.s32.totalorder %s22, 0
      %p68 = por %p66, %p67
      %p69 = scmp.ne.s32.totalorder %s58, %s61
      %p70 = scmp.eq.s32.totalorder %s27, 1
      %p71 = por %p69, %p70
      %p72 = scmp.ne.s32.totalorder %s61, %s62
      %p73 = scmp.eq.s32.totalorder %s27, 0
      %p74 = por %p72, %p73
      %p75 = scmp.ne.s32.totalorder %s61, %s62
      %p76 = scmp.eq.s32.totalorder %s28, 1
      %p77 = por %p75, %p76
      %p79 = scmp.ne.s32.totalorder %s62, %s78
      %p80 = scmp.eq.s32.totalorder %s28, 0
      %p81 = por %p79, %p80
      %s82 = ssub.s32 %s22, %s29
      %p83 = scmp.eq.s32.totalorder %s82, 0
      %s85 = sadd.s32 %s84, 1
      %s86 = scalar_select %p83, %s84, %s85
      %p89 = pneg %p83
      %p90 = scmp.eq.s32.totalorder %s22, 1
      %p91 = por %p89, %p90
      %p92 = scmp.ne.s32.totalorder %s84, %s87
      %p93 = scmp.eq.s32.totalorder %s22, 0
      %p94 = por %p92, %p93
      %p95 = scmp.ne.s32.totalorder %s84, %s87
      %p96 = scmp.eq.s32.totalorder %s27, 1
      %p97 = por %p95, %p96
      %p98 = scmp.ne.s32.totalorder %s87, %s88
      %p99 = scmp.eq.s32.totalorder %s27, 0
      %p100 = por %p98, %p99
      %p101 = scmp.ne.s32.totalorder %s87, %s88
      %p102 = scmp.eq.s32.totalorder %s28, 1
      %p103 = por %p101, %p102
      %p105 = scmp.ne.s32.totalorder %s88, %s104
      %p106 = scmp.eq.s32.totalorder %s28, 0
      %p107 = por %p105, %p106
      %s109 = sadd.s32 %s108, 1
      %p112 = scmp.eq.s32.totalorder %s22, 1
      %p113 = scmp.ne.s32.totalorder %s108, %s110
      %p114 = scmp.eq.s32.totalorder %s22, 0
      %p115 = por %p113, %p114
      %p116 = scmp.ne.s32.totalorder %s108, %s110
      %p117 = scmp.eq.s32.totalorder %s27, 1
      %p118 = por %p116, %p117
      %p119 = scmp.ne.s32.totalorder %s110, %s111
      %p120 = scmp.eq.s32.totalorder %s27, 0
      %p121 = por %p119, %p120
      %p122 = scmp.ne.s32.totalorder %s110, %s111
      %p123 = scmp.eq.s32.totalorder %s28, 1
      %p124 = por %p122, %p123
      %p126 = scmp.ne.s32.totalorder %s111, %s125
      %p127 = scmp.eq.s32.totalorder %s28, 0
      %p128 = por %p126, %p127
      %s130 = sadd.s32 %s129, 1
      %p133 = scmp.eq.s32.totalorder %s22, 1
      %p134 = scmp.ne.s32.totalorder %s129, %s131
      %p135 = scmp.eq.s32.totalorder %s22, 0
      %p136 = por %p134, %p135
      %p137 = scmp.ne.s32.totalorder %s129, %s131
      %p138 = scmp.eq.s32.totalorder %s27, 1
      %p139 = por %p137, %p138
      %p140 = scmp.ne.s32.totalorder %s131, %s132
      %p141 = scmp.eq.s32.totalorder %s27, 0
      %p142 = por %p140, %p141
      %p143 = scmp.ne.s32.totalorder %s131, %s132
      %p144 = scmp.eq.s32.totalorder %s28, 1
      %p145 = por %p143, %p144
      %p147 = scmp.ne.s32.totalorder %s132, %s146
      %p148 = scmp.eq.s32.totalorder %s28, 0
      %p149 = por %p147, %p148
      %s151 = sadd.s32 %s150, 1
      %p154 = scmp.eq.s32.totalorder %s22, 1
      %p155 = scmp.ne.s32.totalorder %s150, %s152
      %p156 = scmp.eq.s32.totalorder %s22, 0
      %p157 = por %p155, %p156
      %p158 = scmp.ne.s32.totalorder %s150, %s152
      %p159 = scmp.eq.s32.totalorder %s27, 1
      %p160 = por %p158, %p159
      %p161 = scmp.ne.s32.totalorder %s152, %s153
      %p162 = scmp.eq.s32.totalorder %s27, 0
      %p163 = por %p161, %p162
      %p164 = scmp.ne.s32.totalorder %s152, %s153
      %p165 = scmp.eq.s32.totalorder %s28, 1
      %p166 = por %p164, %p165
      %p168 = scmp.ne.s32.totalorder %s153, %s167
      %p169 = scmp.eq.s32.totalorder %s28, 0
      %p170 = por %p168, %p169
      %s171 = ssub.s32 %s22, %s29
      %p172 = scmp.eq.s32.totalorder %s171, 0
      %s174 = sadd.s32 %s173, 1
      %s175 = scalar_select %p172, %s173, %s174
      %p178 = pneg %p172
      %p179 = scmp.eq.s32.totalorder %s22, 1
      %p180 = por %p178, %p179
      %p181 = scmp.ne.s32.totalorder %s173, %s176
      %p182 = scmp.eq.s32.totalorder %s22, 0
      %p183 = por %p181, %p182
      %p184 = scmp.ne.s32.totalorder %s173, %s176
      %p185 = scmp.eq.s32.totalorder %s27, 1
      %p186 = por %p184, %p185
      %p187 = scmp.ne.s32.totalorder %s176, %s177
      %p188 = scmp.eq.s32.totalorder %s27, 0
      %p189 = por %p187, %p188
      %p190 = scmp.ne.s32.totalorder %s176, %s177
      %p191 = scmp.eq.s32.totalorder %s28, 1
      %p192 = por %p190, %p191
      %p194 = scmp.ne.s32.totalorder %s177, %s193
      %p195 = scmp.eq.s32.totalorder %s28, 0
      %p196 = por %p194, %p195
      %p197 = scmp.le.s32.totalorder 1, %s22
      %p198 = scmp.lt.s32.totalorder %s22, 3
      %p199 = pnand %p197, %p198
      %p200 = pneg %p199
      // Predicated region
      $region9: #{tpu_custom_call.1} parent=5 // pred_check
        _
      $region10: #{tpu_custom_call.1} parent=5 // pred_check_branch
        %202 = sbr.rel (%p199) target = $region12
      $region11: #{tpu_custom_call.1} parent=5 // pred_region
        %s203 = ssub.s32 %s22, 1
        // Predicated region
        $region13: #{tpu_custom_call.1} parent=11 // pred_check
          %p204 = pneg %p121
        $region14: #{tpu_custom_call.1} parent=11 // pred_check_branch
          %206 = sbr.rel (%p204) target = $region16
        $region15: #{tpu_custom_call.1} parent=11 // pred_region
          %s208 = ssub.s32 256, 256
          %209 = vsyncadd [#allocation9], %s208
          %s210 = sshll.u32 [#allocation8], 4
          %s211 = int_to_ptr.vmem [resolvable:$true] %s210
          %216 = dma.hbm_to_vmem [thread:$0]  %s3, 256, %s211, [#allocation9], 128, 128, 8
        $region16: #{tpu_custom_call.1} parent=11 // pred_fallthru
          _
        // Predicated region
        $region17: #{tpu_custom_call.1} parent=11 // pred_check
          %p217 = pneg %p142
        $region18: #{tpu_custom_call.1} parent=11 // pred_check_branch
          %219 = sbr.rel (%p217) target = $region20
        $region19: #{tpu_custom_call.1} parent=11 // pred_region
          %s221 = ssub.s32 4096, 4096
          %222 = vsyncadd [#allocation9], %s221
          %s223 = sshll.u32 [#allocation10], 4
          %s224 = int_to_ptr.vmem [resolvable:$true] %s223
          %229 = dma.hbm_to_vmem [thread:$0]  %s4, 4096, %s224, [#allocation9], 128, 128, 8
        $region20: #{tpu_custom_call.1} parent=11 // pred_fallthru
          _
        // Predicated region
        $region21: #{tpu_custom_call.1} parent=11 // pred_check
          %p230 = pneg %p163
        $region22: #{tpu_custom_call.1} parent=11 // pred_check_branch
          %232 = sbr.rel (%p230) target = $region24
        $region23: #{tpu_custom_call.1} parent=11 // pred_region
          _
        $region24: #{tpu_custom_call.1} parent=11 // pred_fallthru
          _
      $region12: #{tpu_custom_call.1} parent=5 // pred_fallthru
        _
      %p233 = scmp.lt.s32.totalorder %s22, 2
      // Predicated region
      $region25: #{tpu_custom_call.1} parent=5 // pred_check
        %p234 = pneg %p233
      $region26: #{tpu_custom_call.1} parent=5 // pred_check_branch
        %236 = sbr.rel (%p234) target = $region28
      $region27: #{tpu_custom_call.1} parent=5 // pred_region
        // Predicated region
        $region29: #{tpu_custom_call.1} parent=27 // pred_check
          %p237 = pneg %p42
        $region30: #{tpu_custom_call.1} parent=27 // pred_check_branch
          %239 = sbr.rel (%p237) target = $region32
        $region31: #{tpu_custom_call.1} parent=27 // pred_region
          %s240 = sand.u32 %s32, 1
          %s241 = scalar_lea.sflag [#allocation3], %s240
          %s242 = sand.u32 %s32, 1
          %s243 = smul.addr %s242, 5
          %s244 = scalar_lea.vmem [#allocation2], %s243
          %s245 = smul.u32 5, %s22
          %s247 = ssub.s32 80, 80
          %248 = vsyncadd %s241, %s247
          %s249 = smul.addr %s245, 16
          %s250 = scalar_lea.hbm %s0, %s249
          %s252 = sshll.u32 %s244, 4
          %s253 = int_to_ptr.vmem [resolvable:$true] %s252
          %255 = dma.hbm_to_vmem [thread:$0]  %s250, 80, %s253, %s241
        $region32: #{tpu_custom_call.1} parent=27 // pred_fallthru
          _
        // Predicated region
        $region33: #{tpu_custom_call.1} parent=27 // pred_check
          %p256 = pneg %p68
        $region34: #{tpu_custom_call.1} parent=27 // pred_check_branch
          %258 = sbr.rel (%p256) target = $region36
        $region35: #{tpu_custom_call.1} parent=27 // pred_region
          %s259 = sand.u32 %s22, 1
          %s260 = scalar_lea.sflag [#allocation6], %s259
          %s261 = sand.u32 %s58, 1
          %s262 = smul.addr %s261, 5
          %s263 = scalar_lea.vmem [#allocation5], %s262
          %s264 = smul.u32 5, %s22
          %s266 = ssub.s32 80, 80
          %267 = vsyncadd %s260, %s266
          %s268 = smul.addr %s264, 16
          %s269 = scalar_lea.hbm %s1, %s268
          %s271 = sshll.u32 %s263, 4
          %s272 = int_to_ptr.vmem [resolvable:$true] %s271
          %274 = dma.hbm_to_vmem [thread:$0]  %s269, 80, %s272, %s260
        $region36: #{tpu_custom_call.1} parent=27 // pred_fallthru
          _
        // Predicated region
        $region37: #{tpu_custom_call.1} parent=27 // pred_check
          %p275 = pneg %p94
        $region38: #{tpu_custom_call.1} parent=27 // pred_check_branch
          %277 = sbr.rel (%p275) target = $region40
        $region39: #{tpu_custom_call.1} parent=27 // pred_region
          %s278 = sand.u32 %s22, 1
          %s279 = scalar_lea.sflag [#allocation6], %s278
          %s280 = sand.u32 %s84, 1
          %s281 = smul.addr %s280, 5
          %s282 = scalar_lea.vmem [#allocation7], %s281
          %s283 = smul.u32 5, %s22
          %s285 = ssub.s32 80, 80
          %286 = vsyncadd %s279, %s285
          %s287 = smul.addr %s283, 16
          %s288 = scalar_lea.hbm %s2, %s287
          %s290 = sshll.u32 %s282, 4
          %s291 = int_to_ptr.vmem [resolvable:$true] %s290
          %293 = dma.hbm_to_vmem [thread:$0]  %s288, 80, %s291, %s279
        $region40: #{tpu_custom_call.1} parent=27 // pred_fallthru
          _
      $region28: #{tpu_custom_call.1} parent=5 // pred_fallthru
        _
      %p294 = scmp.le.s32.totalorder 1, %s22
      %p295 = scmp.lt.s32.totalorder %s22, 3
      %p296 = pnand %p294, %p295
      %p297 = pneg %p296
      // Predicated region
      $region41: #{tpu_custom_call.1} parent=5 // pred_check
        _
      $region42: #{tpu_custom_call.1} parent=5 // pred_check_branch
        %299 = sbr.rel (%p296) target = $region44
      $region43: #{tpu_custom_call.1} parent=5 // pred_region
        %s300 = ssub.s32 %s22, 1
        %s301 = sand.u32 %s35, 1
        %s302 = scalar_lea.sflag [#allocation3], %s301
        %s303 = sand.u32 %s35, 1
        %s304 = smul.addr %s303, 5
        %s305 = scalar_lea.vmem [#allocation2], %s304
        // Predicated region
        $region45: #{tpu_custom_call.1} parent=43 // pred_check
          %p306 = pneg %p48
        $region46: #{tpu_custom_call.1} parent=43 // pred_check_branch
          %308 = sbr.rel (%p306) target = $region48
        $region47: #{tpu_custom_call.1} parent=43 // pred_region
          %309 = dma.done %s302, 80
        $region48: #{tpu_custom_call.1} parent=43 // pred_fallthru
          _
        %s310 = sand.u32 %s27, 1
        %s311 = scalar_lea.sflag [#allocation6], %s310
        %s312 = sand.u32 %s61, 1
        %s313 = smul.addr %s312, 5
        %s314 = scalar_lea.vmem [#allocation5], %s313
        // Predicated region
        $region49: #{tpu_custom_call.1} parent=43 // pred_check
          %p315 = pneg %p74
        $region50: #{tpu_custom_call.1} parent=43 // pred_check_branch
          %317 = sbr.rel (%p315) target = $region52
        $region51: #{tpu_custom_call.1} parent=43 // pred_region
          %318 = dma.done %s311, 80
        $region52: #{tpu_custom_call.1} parent=43 // pred_fallthru
          _
        %s319 = sand.u32 %s27, 1
        %s320 = scalar_lea.sflag [#allocation6], %s319
        %s321 = sand.u32 %s87, 1
        %s322 = smul.addr %s321, 5
        %s323 = scalar_lea.vmem [#allocation7], %s322
        // Predicated region
        $region53: #{tpu_custom_call.1} parent=43 // pred_check
          %p324 = pneg %p100
        $region54: #{tpu_custom_call.1} parent=43 // pred_check_branch
          %326 = sbr.rel (%p324) target = $region56
        $region55: #{tpu_custom_call.1} parent=43 // pred_region
          %327 = dma.done %s320, 80
        $region56: #{tpu_custom_call.1} parent=43 // pred_fallthru
          _
        // Predicated region
        $region57: #{tpu_custom_call.1} parent=43 // pred_check
          %p328 = pneg %p121
        $region58: #{tpu_custom_call.1} parent=43 // pred_check_branch
          %330 = sbr.rel (%p328) target = $region60
        $region59: #{tpu_custom_call.1} parent=43 // pred_region
          %331 = dma.done [#allocation9], 256
        $region60: #{tpu_custom_call.1} parent=43 // pred_fallthru
          _
        // Predicated region
        $region61: #{tpu_custom_call.1} parent=43 // pred_check
          %p332 = pneg %p142
        $region62: #{tpu_custom_call.1} parent=43 // pred_check_branch
          %334 = sbr.rel (%p332) target = $region64
        $region63: #{tpu_custom_call.1} parent=43 // pred_region
          %335 = dma.done [#allocation9], 4096
        $region64: #{tpu_custom_call.1} parent=43 // pred_fallthru
          _
        %s336 = sand.u32 %s35, 1
        %s337 = scalar_lea.sflag [#allocation3], %s336
        %s338 = sand.u32 %s35, 1
        %s339 = smul.addr %s338, 5
        %s340 = scalar_lea.vmem [#allocation2], %s339
        %p341 = pneg %p48
        %p342 = pneg %p45
        %s343 = sand.u32 %s27, 1
        %s344 = scalar_lea.sflag [#allocation6], %s343
        %s345 = sand.u32 %s61, 1
        %s346 = smul.addr %s345, 5
        %s347 = scalar_lea.vmem [#allocation5], %s346
        %p348 = pneg %p74
        %p349 = pneg %p71
        %s350 = sand.u32 %s27, 1
        %s351 = scalar_lea.sflag [#allocation6], %s350
        %s352 = sand.u32 %s87, 1
        %s353 = smul.addr %s352, 5
        %s354 = scalar_lea.vmem [#allocation7], %s353
        %p355 = pneg %p100
        %p356 = pneg %p97
        %p357 = pneg %p121
        %p358 = pneg %p118
        %p359 = pneg %p142
        %p360 = pneg %p139
        %p361 = pneg %p163
        %p362 = pneg %p160
        %p363 = pneg %p189
        %p364 = pneg %p186
        %s365 = sand.u32 %s176, 1
        %s366 = scalar_lea.sflag [#allocation4], %s365
        %s367 = sand.u32 %s176, 1
        %s368 = smul.addr %s367, 5
        %s369 = scalar_lea.vmem [#allocation11], %s368
        %s370 = smul.u32 5, %s27
        %s371 = smul.u32 5, %s27
        %s372 = smul.u32 5, %s27
        %s373 = smul.u32 5, %s27
        %v374 = vld [vmem:[%s305] sm:$0x1f]
        %v375 = vlaneseq
        %v376 = vshrl.u32 %v375, 7
        %v377 = vadd.s32 %v376, 8
        %v378 = vadd.s32 %v376, 16
        %v379 = vadd.s32 %v376, 24
        %v380 = vadd.s32 %v376, 32
        %v381 = vadd.s32 %v376, 40
        %v382 = vadd.s32 %v376, 48
        %v383 = vadd.s32 %v376, 56
        %v384 = vadd.s32 %v376, 64
        %v385 = vadd.s32 %v376, 72
        %v386 = vadd.s32 %v376, 80
        %v387 = vadd.s32 %v376, 88
        %v388 = vadd.s32 %v376, 96
        %v389 = vadd.s32 %v376, 104
        %v390 = vadd.s32 %v376, 112
        %v391 = vadd.s32 %v376, 120
        %v392 = vlaneseq
        %v393 = vshrl.u32 %v392, 7
        %v394 = vsub.s32 0, %v393
        %v395 = vrot.slane %v374, %v394
        %v396 = vlaneseq
        %v397 = vshrl.u32 %v396, 7
        %v398 = vsub.s32 1, %v397
        %v399 = vrot.slane %v374, %v398
        %v400 = vlaneseq
        %v401 = vshrl.u32 %v400, 7
        %v402 = vsub.s32 2, %v401
        %v403 = vrot.slane %v374, %v402
        %v404 = vlaneseq
        %v405 = vshrl.u32 %v404, 7
        %v406 = vsub.s32 3, %v405
        %v407 = vrot.slane %v374, %v406
        %v408 = vlaneseq
        %v409 = vshrl.u32 %v408, 7
        %v410 = vsub.s32 4, %v409
        %v411 = vrot.slane %v374, %v410
        %vm412 = vcmp.eq.s32.totalorder %v376, %v395
        %vm413 = vcmp.eq.s32.totalorder %v376, %v399
        %vm414 = vcmp.eq.s32.totalorder %v376, %v403
        %vm415 = vcmp.eq.s32.totalorder %v376, %v407
        %vm416 = vcmp.eq.s32.totalorder %v376, %v411
        %vm417 = vcmp.eq.s32.totalorder %v377, %v395
        %vm418 = vcmp.eq.s32.totalorder %v377, %v399
        %vm419 = vcmp.eq.s32.totalorder %v377, %v403
        %vm420 = vcmp.eq.s32.totalorder %v377, %v407
        %vm421 = vcmp.eq.s32.totalorder %v377, %v411
        %vm422 = vcmp.eq.s32.totalorder %v378, %v395
        %vm423 = vcmp.eq.s32.totalorder %v378, %v399
        %vm424 = vcmp.eq.s32.totalorder %v378, %v403
        %vm425 = vcmp.eq.s32.totalorder %v378, %v407
        %vm426 = vcmp.eq.s32.totalorder %v378, %v411
        %vm427 = vcmp.eq.s32.totalorder %v379, %v395
        %vm428 = vcmp.eq.s32.totalorder %v379, %v399
        %vm429 = vcmp.eq.s32.totalorder %v379, %v403
        %vm430 = vcmp.eq.s32.totalorder %v379, %v407
        %vm431 = vcmp.eq.s32.totalorder %v379, %v411
        %vm432 = vcmp.eq.s32.totalorder %v380, %v395
        %vm433 = vcmp.eq.s32.totalorder %v380, %v399
        %vm434 = vcmp.eq.s32.totalorder %v380, %v403
        %vm435 = vcmp.eq.s32.totalorder %v380, %v407
        %vm436 = vcmp.eq.s32.totalorder %v380, %v411
        %vm437 = vcmp.eq.s32.totalorder %v381, %v395
        %vm438 = vcmp.eq.s32.totalorder %v381, %v399
        %vm439 = vcmp.eq.s32.totalorder %v381, %v403
        %vm440 = vcmp.eq.s32.totalorder %v381, %v407
        %vm441 = vcmp.eq.s32.totalorder %v381, %v411
        %vm442 = vcmp.eq.s32.totalorder %v382, %v395
        %vm443 = vcmp.eq.s32.totalorder %v382, %v399
        %vm444 = vcmp.eq.s32.totalorder %v382, %v403
        %vm445 = vcmp.eq.s32.totalorder %v382, %v407
        %vm446 = vcmp.eq.s32.totalorder %v382, %v411
        %vm447 = vcmp.eq.s32.totalorder %v383, %v395
        %vm448 = vcmp.eq.s32.totalorder %v383, %v399
        %vm449 = vcmp.eq.s32.totalorder %v383, %v403
        %vm450 = vcmp.eq.s32.totalorder %v383, %v407
        %vm451 = vcmp.eq.s32.totalorder %v383, %v411
        %vm452 = vcmp.eq.s32.totalorder %v384, %v395
        %vm453 = vcmp.eq.s32.totalorder %v384, %v399
        %vm454 = vcmp.eq.s32.totalorder %v384, %v403
        %vm455 = vcmp.eq.s32.totalorder %v384, %v407
        %vm456 = vcmp.eq.s32.totalorder %v384, %v411
        %vm457 = vcmp.eq.s32.totalorder %v385, %v395
        %vm458 = vcmp.eq.s32.totalorder %v385, %v399
        %vm459 = vcmp.eq.s32.totalorder %v385, %v403
        %vm460 = vcmp.eq.s32.totalorder %v385, %v407
        %vm461 = vcmp.eq.s32.totalorder %v385, %v411
        %vm462 = vcmp.eq.s32.totalorder %v386, %v395
        %vm463 = vcmp.eq.s32.totalorder %v386, %v399
        %vm464 = vcmp.eq.s32.totalorder %v386, %v403
        %vm465 = vcmp.eq.s32.totalorder %v386, %v407
        %vm466 = vcmp.eq.s32.totalorder %v386, %v411
        %vm467 = vcmp.eq.s32.totalorder %v387, %v395
        %vm468 = vcmp.eq.s32.totalorder %v387, %v399
        %vm469 = vcmp.eq.s32.totalorder %v387, %v403
        %vm470 = vcmp.eq.s32.totalorder %v387, %v407
        %vm471 = vcmp.eq.s32.totalorder %v387, %v411
        %vm472 = vcmp.eq.s32.totalorder %v388, %v395
        %vm473 = vcmp.eq.s32.totalorder %v388, %v399
        %vm474 = vcmp.eq.s32.totalorder %v388, %v403
        %vm475 = vcmp.eq.s32.totalorder %v388, %v407
        %vm476 = vcmp.eq.s32.totalorder %v388, %v411
        %vm477 = vcmp.eq.s32.totalorder %v389, %v395
        %vm478 = vcmp.eq.s32.totalorder %v389, %v399
        %vm479 = vcmp.eq.s32.totalorder %v389, %v403
        %vm480 = vcmp.eq.s32.totalorder %v389, %v407
        %vm481 = vcmp.eq.s32.totalorder %v389, %v411
        %vm482 = vcmp.eq.s32.totalorder %v390, %v395
        %vm483 = vcmp.eq.s32.totalorder %v390, %v399
        %vm484 = vcmp.eq.s32.totalorder %v390, %v403
        %vm485 = vcmp.eq.s32.totalorder %v390, %v407
        %vm486 = vcmp.eq.s32.totalorder %v390, %v411
        %vm487 = vcmp.eq.s32.totalorder %v391, %v395
        %vm488 = vcmp.eq.s32.totalorder %v391, %v399
        %vm489 = vcmp.eq.s32.totalorder %v391, %v403
        %vm490 = vcmp.eq.s32.totalorder %v391, %v407
        %vm491 = vcmp.eq.s32.totalorder %v391, %v411
        %v492 = vsel %vm412, 1, 0
        %v493 = vsel %vm413, 1, 0
        %v494 = vsel %vm414, 1, 0
        %v495 = vsel %vm415, 1, 0
        %v496 = vsel %vm416, 1, 0
        %v497 = vsel %vm417, 1, 0
        %v498 = vsel %vm418, 1, 0
        %v499 = vsel %vm419, 1, 0
        %v500 = vsel %vm420, 1, 0
        %v501 = vsel %vm421, 1, 0
        %v502 = vsel %vm422, 1, 0
        %v503 = vsel %vm423, 1, 0
        %v504 = vsel %vm424, 1, 0
        %v505 = vsel %vm425, 1, 0
        %v506 = vsel %vm426, 1, 0
        %v507 = vsel %vm427, 1, 0
        %v508 = vsel %vm428, 1, 0
        %v509 = vsel %vm429, 1, 0
        %v510 = vsel %vm430, 1, 0
        %v511 = vsel %vm431, 1, 0
        %v512 = vsel %vm432, 1, 0
        %v513 = vsel %vm433, 1, 0
        %v514 = vsel %vm434, 1, 0
        %v515 = vsel %vm435, 1, 0
        %v516 = vsel %vm436, 1, 0
        %v517 = vsel %vm437, 1, 0
        %v518 = vsel %vm438, 1, 0
        %v519 = vsel %vm439, 1, 0
        %v520 = vsel %vm440, 1, 0
        %v521 = vsel %vm441, 1, 0
        %v522 = vsel %vm442, 1, 0
        %v523 = vsel %vm443, 1, 0
        %v524 = vsel %vm444, 1, 0
        %v525 = vsel %vm445, 1, 0
        %v526 = vsel %vm446, 1, 0
        %v527 = vsel %vm447, 1, 0
        %v528 = vsel %vm448, 1, 0
        %v529 = vsel %vm449, 1, 0
        %v530 = vsel %vm450, 1, 0
        %v531 = vsel %vm451, 1, 0
        %v532 = vsel %vm452, 1, 0
        %v533 = vsel %vm453, 1, 0
        %v534 = vsel %vm454, 1, 0
        %v535 = vsel %vm455, 1, 0
        %v536 = vsel %vm456, 1, 0
        %v537 = vsel %vm457, 1, 0
        %v538 = vsel %vm458, 1, 0
        %v539 = vsel %vm459, 1, 0
        %v540 = vsel %vm460, 1, 0
        %v541 = vsel %vm461, 1, 0
        %v542 = vsel %vm462, 1, 0
        %v543 = vsel %vm463, 1, 0
        %v544 = vsel %vm464, 1, 0
        %v545 = vsel %vm465, 1, 0
        %v546 = vsel %vm466, 1, 0
        %v547 = vsel %vm467, 1, 0
        %v548 = vsel %vm468, 1, 0
        %v549 = vsel %vm469, 1, 0
        %v550 = vsel %vm470, 1, 0
        %v551 = vsel %vm471, 1, 0
        %v552 = vsel %vm472, 1, 0
        %v553 = vsel %vm473, 1, 0
        %v554 = vsel %vm474, 1, 0
        %v555 = vsel %vm475, 1, 0
        %v556 = vsel %vm476, 1, 0
        %v557 = vsel %vm477, 1, 0
        %v558 = vsel %vm478, 1, 0
        %v559 = vsel %vm479, 1, 0
        %v560 = vsel %vm480, 1, 0
        %v561 = vsel %vm481, 1, 0
        %v562 = vsel %vm482, 1, 0
        %v563 = vsel %vm483, 1, 0
        %v564 = vsel %vm484, 1, 0
        %v565 = vsel %vm485, 1, 0
        %v566 = vsel %vm486, 1, 0
        %v567 = vsel %vm487, 1, 0
        %v568 = vsel %vm488, 1, 0
        %v569 = vsel %vm489, 1, 0
        %v570 = vsel %vm490, 1, 0
        %v571 = vsel %vm491, 1, 0
        %v572 = vcvt.s32.f32 %v492
        %v573 = vcvt.s32.f32 %v493
        %v574 = vcvt.s32.f32 %v494
        %v575 = vcvt.s32.f32 %v495
        %v576 = vcvt.s32.f32 %v496
        %v577 = vcvt.s32.f32 %v497
        %v578 = vcvt.s32.f32 %v498
        %v579 = vcvt.s32.f32 %v499
        %v580 = vcvt.s32.f32 %v500
        %v581 = vcvt.s32.f32 %v501
        %v582 = vcvt.s32.f32 %v502
        %v583 = vcvt.s32.f32 %v503
        %v584 = vcvt.s32.f32 %v504
        %v585 = vcvt.s32.f32 %v505
        %v586 = vcvt.s32.f32 %v506
        %v587 = vcvt.s32.f32 %v507
        %v588 = vcvt.s32.f32 %v508
        %v589 = vcvt.s32.f32 %v509
        %v590 = vcvt.s32.f32 %v510
        %v591 = vcvt.s32.f32 %v511
        %v592 = vcvt.s32.f32 %v512
        %v593 = vcvt.s32.f32 %v513
        %v594 = vcvt.s32.f32 %v514
        %v595 = vcvt.s32.f32 %v515
        %v596 = vcvt.s32.f32 %v516
        %v597 = vcvt.s32.f32 %v517
        %v598 = vcvt.s32.f32 %v518
        %v599 = vcvt.s32.f32 %v519
        %v600 = vcvt.s32.f32 %v520
        %v601 = vcvt.s32.f32 %v521
        %v602 = vcvt.s32.f32 %v522
        %v603 = vcvt.s32.f32 %v523
        %v604 = vcvt.s32.f32 %v524
        %v605 = vcvt.s32.f32 %v525
        %v606 = vcvt.s32.f32 %v526
        %v607 = vcvt.s32.f32 %v527
        %v608 = vcvt.s32.f32 %v528
        %v609 = vcvt.s32.f32 %v529
        %v610 = vcvt.s32.f32 %v530
        %v611 = vcvt.s32.f32 %v531
        %v612 = vcvt.s32.f32 %v532
        %v613 = vcvt.s32.f32 %v533
        %v614 = vcvt.s32.f32 %v534
        %v615 = vcvt.s32.f32 %v535
        %v616 = vcvt.s32.f32 %v536
        %v617 = vcvt.s32.f32 %v537
        %v618 = vcvt.s32.f32 %v538
        %v619 = vcvt.s32.f32 %v539
        %v620 = vcvt.s32.f32 %v540
        %v621 = vcvt.s32.f32 %v541
        %v622 = vcvt.s32.f32 %v542
        %v623 = vcvt.s32.f32 %v543
        %v624 = vcvt.s32.f32 %v544
        %v625 = vcvt.s32.f32 %v545
        %v626 = vcvt.s32.f32 %v546
        %v627 = vcvt.s32.f32 %v547
        %v628 = vcvt.s32.f32 %v548
        %v629 = vcvt.s32.f32 %v549
        %v630 = vcvt.s32.f32 %v550
        %v631 = vcvt.s32.f32 %v551
        %v632 = vcvt.s32.f32 %v552
        %v633 = vcvt.s32.f32 %v553
        %v634 = vcvt.s32.f32 %v554
        %v635 = vcvt.s32.f32 %v555
        %v636 = vcvt.s32.f32 %v556
        %v637 = vcvt.s32.f32 %v557
        %v638 = vcvt.s32.f32 %v558
        %v639 = vcvt.s32.f32 %v559
        %v640 = vcvt.s32.f32 %v560
        %v641 = vcvt.s32.f32 %v561
        %v642 = vcvt.s32.f32 %v562
        %v643 = vcvt.s32.f32 %v563
        %v644 = vcvt.s32.f32 %v564
        %v645 = vcvt.s32.f32 %v565
        %v646 = vcvt.s32.f32 %v566
        %v647 = vcvt.s32.f32 %v567
        %v648 = vcvt.s32.f32 %v568
        %v649 = vcvt.s32.f32 %v569
        %v650 = vcvt.s32.f32 %v570
        %v651 = vcvt.s32.f32 %v571
        %v652 = vld [vmem:[%s323] sm:$0x1f]
        %v653 = vlaneseq
        %v654 = vshrl.u32 %v653, 7
        %v655 = vsub.s32 0, %v654
        %v656 = vrot.slane %v652, %v655
        %v657 = vlaneseq
        %v658 = vshrl.u32 %v657, 7
        %v659 = vsub.s32 1, %v658
        %v660 = vrot.slane %v652, %v659
        %v661 = vlaneseq
        %v662 = vshrl.u32 %v661, 7
        %v663 = vsub.s32 2, %v662
        %v664 = vrot.slane %v652, %v663
        %v665 = vlaneseq
        %v666 = vshrl.u32 %v665, 7
        %v667 = vsub.s32 3, %v666
        %v668 = vrot.slane %v652, %v667
        %v669 = vlaneseq
        %v670 = vshrl.u32 %v669, 7
        %v671 = vsub.s32 4, %v670
        %v672 = vrot.slane %v652, %v671
        %vm673 = vcmp.eq.s32.totalorder %v376, %v656
        %vm674 = vcmp.eq.s32.totalorder %v376, %v660
        %vm675 = vcmp.eq.s32.totalorder %v376, %v664
        %vm676 = vcmp.eq.s32.totalorder %v376, %v668
        %vm677 = vcmp.eq.s32.totalorder %v376, %v672
        %vm678 = vcmp.eq.s32.totalorder %v377, %v656
        %vm679 = vcmp.eq.s32.totalorder %v377, %v660
        %vm680 = vcmp.eq.s32.totalorder %v377, %v664
        %vm681 = vcmp.eq.s32.totalorder %v377, %v668
        %vm682 = vcmp.eq.s32.totalorder %v377, %v672
        %vm683 = vcmp.eq.s32.totalorder %v378, %v656
        %vm684 = vcmp.eq.s32.totalorder %v378, %v660
        %vm685 = vcmp.eq.s32.totalorder %v378, %v664
        %vm686 = vcmp.eq.s32.totalorder %v378, %v668
        %vm687 = vcmp.eq.s32.totalorder %v378, %v672
        %vm688 = vcmp.eq.s32.totalorder %v379, %v656
        %vm689 = vcmp.eq.s32.totalorder %v379, %v660
        %vm690 = vcmp.eq.s32.totalorder %v379, %v664
        %vm691 = vcmp.eq.s32.totalorder %v379, %v668
        %vm692 = vcmp.eq.s32.totalorder %v379, %v672
        %vm693 = vcmp.eq.s32.totalorder %v380, %v656
        %vm694 = vcmp.eq.s32.totalorder %v380, %v660
        %vm695 = vcmp.eq.s32.totalorder %v380, %v664
        %vm696 = vcmp.eq.s32.totalorder %v380, %v668
        %vm697 = vcmp.eq.s32.totalorder %v380, %v672
        %vm698 = vcmp.eq.s32.totalorder %v381, %v656
        %vm699 = vcmp.eq.s32.totalorder %v381, %v660
        %vm700 = vcmp.eq.s32.totalorder %v381, %v664
        %vm701 = vcmp.eq.s32.totalorder %v381, %v668
        %vm702 = vcmp.eq.s32.totalorder %v381, %v672
        %vm703 = vcmp.eq.s32.totalorder %v382, %v656
        %vm704 = vcmp.eq.s32.totalorder %v382, %v660
        %vm705 = vcmp.eq.s32.totalorder %v382, %v664
        %vm706 = vcmp.eq.s32.totalorder %v382, %v668
        %vm707 = vcmp.eq.s32.totalorder %v382, %v672
        %vm708 = vcmp.eq.s32.totalorder %v383, %v656
        %vm709 = vcmp.eq.s32.totalorder %v383, %v660
        %vm710 = vcmp.eq.s32.totalorder %v383, %v664
        %vm711 = vcmp.eq.s32.totalorder %v383, %v668
        %vm712 = vcmp.eq.s32.totalorder %v383, %v672
        %vm713 = vcmp.eq.s32.totalorder %v384, %v656
        %vm714 = vcmp.eq.s32.totalorder %v384, %v660
        %vm715 = vcmp.eq.s32.totalorder %v384, %v664
        %vm716 = vcmp.eq.s32.totalorder %v384, %v668
        %vm717 = vcmp.eq.s32.totalorder %v384, %v672
        %vm718 = vcmp.eq.s32.totalorder %v385, %v656
        %vm719 = vcmp.eq.s32.totalorder %v385, %v660
        %vm720 = vcmp.eq.s32.totalorder %v385, %v664
        %vm721 = vcmp.eq.s32.totalorder %v385, %v668
        %vm722 = vcmp.eq.s32.totalorder %v385, %v672
        %vm723 = vcmp.eq.s32.totalorder %v386, %v656
        %vm724 = vcmp.eq.s32.totalorder %v386, %v660
        %vm725 = vcmp.eq.s32.totalorder %v386, %v664
        %vm726 = vcmp.eq.s32.totalorder %v386, %v668
        %vm727 = vcmp.eq.s32.totalorder %v386, %v672
        %vm728 = vcmp.eq.s32.totalorder %v387, %v656
        %vm729 = vcmp.eq.s32.totalorder %v387, %v660
        %vm730 = vcmp.eq.s32.totalorder %v387, %v664
        %vm731 = vcmp.eq.s32.totalorder %v387, %v668
        %vm732 = vcmp.eq.s32.totalorder %v387, %v672
        %vm733 = vcmp.eq.s32.totalorder %v388, %v656
        %vm734 = vcmp.eq.s32.totalorder %v388, %v660
        %vm735 = vcmp.eq.s32.totalorder %v388, %v664
        %vm736 = vcmp.eq.s32.totalorder %v388, %v668
        %vm737 = vcmp.eq.s32.totalorder %v388, %v672
        %vm738 = vcmp.eq.s32.totalorder %v389, %v656
        %vm739 = vcmp.eq.s32.totalorder %v389, %v660
        %vm740 = vcmp.eq.s32.totalorder %v389, %v664
        %vm741 = vcmp.eq.s32.totalorder %v389, %v668
        %vm742 = vcmp.eq.s32.totalorder %v389, %v672
        %vm743 = vcmp.eq.s32.totalorder %v390, %v656
        %vm744 = vcmp.eq.s32.totalorder %v390, %v660
        %vm745 = vcmp.eq.s32.totalorder %v390, %v664
        %vm746 = vcmp.eq.s32.totalorder %v390, %v668
        %vm747 = vcmp.eq.s32.totalorder %v390, %v672
        %vm748 = vcmp.eq.s32.totalorder %v391, %v656
        %vm749 = vcmp.eq.s32.totalorder %v391, %v660
        %vm750 = vcmp.eq.s32.totalorder %v391, %v664
        %vm751 = vcmp.eq.s32.totalorder %v391, %v668
        %vm752 = vcmp.eq.s32.totalorder %v391, %v672
        %v753 = vsel %vm673, 1, 0
        %v754 = vsel %vm674, 1, 0
        %v755 = vsel %vm675, 1, 0
        %v756 = vsel %vm676, 1, 0
        %v757 = vsel %vm677, 1, 0
        %v758 = vsel %vm678, 1, 0
        %v759 = vsel %vm679, 1, 0
        %v760 = vsel %vm680, 1, 0
        %v761 = vsel %vm681, 1, 0
        %v762 = vsel %vm682, 1, 0
        %v763 = vsel %vm683, 1, 0
        %v764 = vsel %vm684, 1, 0
        %v765 = vsel %vm685, 1, 0
        %v766 = vsel %vm686, 1, 0
        %v767 = vsel %vm687, 1, 0
        %v768 = vsel %vm688, 1, 0
        %v769 = vsel %vm689, 1, 0
        %v770 = vsel %vm690, 1, 0
        %v771 = vsel %vm691, 1, 0
        %v772 = vsel %vm692, 1, 0
        %v773 = vsel %vm693, 1, 0
        %v774 = vsel %vm694, 1, 0
        %v775 = vsel %vm695, 1, 0
        %v776 = vsel %vm696, 1, 0
        %v777 = vsel %vm697, 1, 0
        %v778 = vsel %vm698, 1, 0
        %v779 = vsel %vm699, 1, 0
        %v780 = vsel %vm700, 1, 0
        %v781 = vsel %vm701, 1, 0
        %v782 = vsel %vm702, 1, 0
        %v783 = vsel %vm703, 1, 0
        %v784 = vsel %vm704, 1, 0
        %v785 = vsel %vm705, 1, 0
        %v786 = vsel %vm706, 1, 0
        %v787 = vsel %vm707, 1, 0
        %v788 = vsel %vm708, 1, 0
        %v789 = vsel %vm709, 1, 0
        %v790 = vsel %vm710, 1, 0
        %v791 = vsel %vm711, 1, 0
        %v792 = vsel %vm712, 1, 0
        %v793 = vsel %vm713, 1, 0
        %v794 = vsel %vm714, 1, 0
        %v795 = vsel %vm715, 1, 0
        %v796 = vsel %vm716, 1, 0
        %v797 = vsel %vm717, 1, 0
        %v798 = vsel %vm718, 1, 0
        %v799 = vsel %vm719, 1, 0
        %v800 = vsel %vm720, 1, 0
        %v801 = vsel %vm721, 1, 0
        %v802 = vsel %vm722, 1, 0
        %v803 = vsel %vm723, 1, 0
        %v804 = vsel %vm724, 1, 0
        %v805 = vsel %vm725, 1, 0
        %v806 = vsel %vm726, 1, 0
        %v807 = vsel %vm727, 1, 0
        %v808 = vsel %vm728, 1, 0
        %v809 = vsel %vm729, 1, 0
        %v810 = vsel %vm730, 1, 0
        %v811 = vsel %vm731, 1, 0
        %v812 = vsel %vm732, 1, 0
        %v813 = vsel %vm733, 1, 0
        %v814 = vsel %vm734, 1, 0
        %v815 = vsel %vm735, 1, 0
        %v816 = vsel %vm736, 1, 0
        %v817 = vsel %vm737, 1, 0
        %v818 = vsel %vm738, 1, 0
        %v819 = vsel %vm739, 1, 0
        %v820 = vsel %vm740, 1, 0
        %v821 = vsel %vm741, 1, 0
        %v822 = vsel %vm742, 1, 0
        %v823 = vsel %vm743, 1, 0
        %v824 = vsel %vm744, 1, 0
        %v825 = vsel %vm745, 1, 0
        %v826 = vsel %vm746, 1, 0
        %v827 = vsel %vm747, 1, 0
        %v828 = vsel %vm748, 1, 0
        %v829 = vsel %vm749, 1, 0
        %v830 = vsel %vm750, 1, 0
        %v831 = vsel %vm751, 1, 0
        %v832 = vsel %vm752, 1, 0
        %v833 = vcvt.s32.f32 %v753
        %v834 = vcvt.s32.f32 %v754
        %v835 = vcvt.s32.f32 %v755
        %v836 = vcvt.s32.f32 %v756
        %v837 = vcvt.s32.f32 %v757
        %v838 = vcvt.s32.f32 %v758
        %v839 = vcvt.s32.f32 %v759
        %v840 = vcvt.s32.f32 %v760
        %v841 = vcvt.s32.f32 %v761
        %v842 = vcvt.s32.f32 %v762
        %v843 = vcvt.s32.f32 %v763
        %v844 = vcvt.s32.f32 %v764
        %v845 = vcvt.s32.f32 %v765
        %v846 = vcvt.s32.f32 %v766
        %v847 = vcvt.s32.f32 %v767
        %v848 = vcvt.s32.f32 %v768
        %v849 = vcvt.s32.f32 %v769
        %v850 = vcvt.s32.f32 %v770
        %v851 = vcvt.s32.f32 %v771
        %v852 = vcvt.s32.f32 %v772
        %v853 = vcvt.s32.f32 %v773
        %v854 = vcvt.s32.f32 %v774
        %v855 = vcvt.s32.f32 %v775
        %v856 = vcvt.s32.f32 %v776
        %v857 = vcvt.s32.f32 %v777
        %v858 = vcvt.s32.f32 %v778
        %v859 = vcvt.s32.f32 %v779
        %v860 = vcvt.s32.f32 %v780
        %v861 = vcvt.s32.f32 %v781
        %v862 = vcvt.s32.f32 %v782
        %v863 = vcvt.s32.f32 %v783
        %v864 = vcvt.s32.f32 %v784
        %v865 = vcvt.s32.f32 %v785
        %v866 = vcvt.s32.f32 %v786
        %v867 = vcvt.s32.f32 %v787
        %v868 = vcvt.s32.f32 %v788
        %v869 = vcvt.s32.f32 %v789
        %v870 = vcvt.s32.f32 %v790
        %v871 = vcvt.s32.f32 %v791
        %v872 = vcvt.s32.f32 %v792
        %v873 = vcvt.s32.f32 %v793
        %v874 = vcvt.s32.f32 %v794
        %v875 = vcvt.s32.f32 %v795
        %v876 = vcvt.s32.f32 %v796
        %v877 = vcvt.s32.f32 %v797
        %v878 = vcvt.s32.f32 %v798
        %v879 = vcvt.s32.f32 %v799
        %v880 = vcvt.s32.f32 %v800
        %v881 = vcvt.s32.f32 %v801
        %v882 = vcvt.s32.f32 %v802
        %v883 = vcvt.s32.f32 %v803
        %v884 = vcvt.s32.f32 %v804
        %v885 = vcvt.s32.f32 %v805
        %v886 = vcvt.s32.f32 %v806
        %v887 = vcvt.s32.f32 %v807
        %v888 = vcvt.s32.f32 %v808
        %v889 = vcvt.s32.f32 %v809
        %v890 = vcvt.s32.f32 %v810
        %v891 = vcvt.s32.f32 %v811
        %v892 = vcvt.s32.f32 %v812
        %v893 = vcvt.s32.f32 %v813
        %v894 = vcvt.s32.f32 %v814
        %v895 = vcvt.s32.f32 %v815
        %v896 = vcvt.s32.f32 %v816
        %v897 = vcvt.s32.f32 %v817
        %v898 = vcvt.s32.f32 %v818
        %v899 = vcvt.s32.f32 %v819
        %v900 = vcvt.s32.f32 %v820
        %v901 = vcvt.s32.f32 %v821
        %v902 = vcvt.s32.f32 %v822
        %v903 = vcvt.s32.f32 %v823
        %v904 = vcvt.s32.f32 %v824
        %v905 = vcvt.s32.f32 %v825
        %v906 = vcvt.s32.f32 %v826
        %v907 = vcvt.s32.f32 %v827
        %v908 = vcvt.s32.f32 %v828
        %v909 = vcvt.s32.f32 %v829
        %v910 = vcvt.s32.f32 %v830
        %v911 = vcvt.s32.f32 %v831
        %v912 = vcvt.s32.f32 %v832
        %v913 = vld [vmem:[%s314] sm:$0x1f]
        %v914 = vlaneseq
        %v915 = vshrl.u32 %v914, 7
        %v916 = vsub.s32 0, %v915
        %v917 = vrot.slane %v913, %v916
        %v918 = vlaneseq
        %v919 = vshrl.u32 %v918, 7
        %v920 = vsub.s32 1, %v919
        %v921 = vrot.slane %v913, %v920
        %v922 = vlaneseq
        %v923 = vshrl.u32 %v922, 7
        %v924 = vsub.s32 2, %v923
        %v925 = vrot.slane %v913, %v924
        %v926 = vlaneseq
        %v927 = vshrl.u32 %v926, 7
        %v928 = vsub.s32 3, %v927
        %v929 = vrot.slane %v913, %v928
        %v930 = vlaneseq
        %v931 = vshrl.u32 %v930, 7
        %v932 = vsub.s32 4, %v931
        %v933 = vrot.slane %v913, %v932
        %vm934 = vcmp.eq.s32.totalorder %v376, %v917
        %vm935 = vcmp.eq.s32.totalorder %v376, %v921
        %vm936 = vcmp.eq.s32.totalorder %v376, %v925
        %vm937 = vcmp.eq.s32.totalorder %v376, %v929
        %vm938 = vcmp.eq.s32.totalorder %v376, %v933
        %vm939 = vcmp.eq.s32.totalorder %v377, %v917
        %vm940 = vcmp.eq.s32.totalorder %v377, %v921
        %vm941 = vcmp.eq.s32.totalorder %v377, %v925
        %vm942 = vcmp.eq.s32.totalorder %v377, %v929
        %vm943 = vcmp.eq.s32.totalorder %v377, %v933
        %vm944 = vcmp.eq.s32.totalorder %v378, %v917
        %vm945 = vcmp.eq.s32.totalorder %v378, %v921
        %vm946 = vcmp.eq.s32.totalorder %v378, %v925
        %vm947 = vcmp.eq.s32.totalorder %v378, %v929
        %vm948 = vcmp.eq.s32.totalorder %v378, %v933
        %vm949 = vcmp.eq.s32.totalorder %v379, %v917
        %vm950 = vcmp.eq.s32.totalorder %v379, %v921
        %vm951 = vcmp.eq.s32.totalorder %v379, %v925
        %vm952 = vcmp.eq.s32.totalorder %v379, %v929
        %vm953 = vcmp.eq.s32.totalorder %v379, %v933
        %vm954 = vcmp.eq.s32.totalorder %v380, %v917
        %vm955 = vcmp.eq.s32.totalorder %v380, %v921
        %vm956 = vcmp.eq.s32.totalorder %v380, %v925
        %vm957 = vcmp.eq.s32.totalorder %v380, %v929
        %vm958 = vcmp.eq.s32.totalorder %v380, %v933
        %vm959 = vcmp.eq.s32.totalorder %v381, %v917
        %vm960 = vcmp.eq.s32.totalorder %v381, %v921
        %vm961 = vcmp.eq.s32.totalorder %v381, %v925
        %vm962 = vcmp.eq.s32.totalorder %v381, %v929
        %vm963 = vcmp.eq.s32.totalorder %v381, %v933
        %vm964 = vcmp.eq.s32.totalorder %v382, %v917
        %vm965 = vcmp.eq.s32.totalorder %v382, %v921
        %vm966 = vcmp.eq.s32.totalorder %v382, %v925
        %vm967 = vcmp.eq.s32.totalorder %v382, %v929
        %vm968 = vcmp.eq.s32.totalorder %v382, %v933
        %vm969 = vcmp.eq.s32.totalorder %v383, %v917
        %vm970 = vcmp.eq.s32.totalorder %v383, %v921
        %vm971 = vcmp.eq.s32.totalorder %v383, %v925
        %vm972 = vcmp.eq.s32.totalorder %v383, %v929
        %vm973 = vcmp.eq.s32.totalorder %v383, %v933
        %vm974 = vcmp.eq.s32.totalorder %v384, %v917
        %vm975 = vcmp.eq.s32.totalorder %v384, %v921
        %vm976 = vcmp.eq.s32.totalorder %v384, %v925
        %vm977 = vcmp.eq.s32.totalorder %v384, %v929
        %vm978 = vcmp.eq.s32.totalorder %v384, %v933
        %vm979 = vcmp.eq.s32.totalorder %v385, %v917
        %vm980 = vcmp.eq.s32.totalorder %v385, %v921
        %vm981 = vcmp.eq.s32.totalorder %v385, %v925
        %vm982 = vcmp.eq.s32.totalorder %v385, %v929
        %vm983 = vcmp.eq.s32.totalorder %v385, %v933
        %vm984 = vcmp.eq.s32.totalorder %v386, %v917
        %vm985 = vcmp.eq.s32.totalorder %v386, %v921
        %vm986 = vcmp.eq.s32.totalorder %v386, %v925
        %vm987 = vcmp.eq.s32.totalorder %v386, %v929
        %vm988 = vcmp.eq.s32.totalorder %v386, %v933
        %vm989 = vcmp.eq.s32.totalorder %v387, %v917
        %vm990 = vcmp.eq.s32.totalorder %v387, %v921
        %vm991 = vcmp.eq.s32.totalorder %v387, %v925
        %vm992 = vcmp.eq.s32.totalorder %v387, %v929
        %vm993 = vcmp.eq.s32.totalorder %v387, %v933
        %vm994 = vcmp.eq.s32.totalorder %v388, %v917
        %vm995 = vcmp.eq.s32.totalorder %v388, %v921
        %vm996 = vcmp.eq.s32.totalorder %v388, %v925
        %vm997 = vcmp.eq.s32.totalorder %v388, %v929
        %vm998 = vcmp.eq.s32.totalorder %v388, %v933
        %vm999 = vcmp.eq.s32.totalorder %v389, %v917
        %vm1000 = vcmp.eq.s32.totalorder %v389, %v921
        %vm1001 = vcmp.eq.s32.totalorder %v389, %v925
        %vm1002 = vcmp.eq.s32.totalorder %v389, %v929
        %vm1003 = vcmp.eq.s32.totalorder %v389, %v933
        %vm1004 = vcmp.eq.s32.totalorder %v390, %v917
        %vm1005 = vcmp.eq.s32.totalorder %v390, %v921
        %vm1006 = vcmp.eq.s32.totalorder %v390, %v925
        %vm1007 = vcmp.eq.s32.totalorder %v390, %v929
        %vm1008 = vcmp.eq.s32.totalorder %v390, %v933
        %vm1009 = vcmp.eq.s32.totalorder %v391, %v917
        %vm1010 = vcmp.eq.s32.totalorder %v391, %v921
        %vm1011 = vcmp.eq.s32.totalorder %v391, %v925
        %vm1012 = vcmp.eq.s32.totalorder %v391, %v929
        %vm1013 = vcmp.eq.s32.totalorder %v391, %v933
        %v1014 = vsel %vm934, 1, 0
        %v1015 = vsel %vm935, 1, 0
        %v1016 = vsel %vm936, 1, 0
        %v1017 = vsel %vm937, 1, 0
        %v1018 = vsel %vm938, 1, 0
        %v1019 = vsel %vm939, 1, 0
        %v1020 = vsel %vm940, 1, 0
        %v1021 = vsel %vm941, 1, 0
        %v1022 = vsel %vm942, 1, 0
        %v1023 = vsel %vm943, 1, 0
        %v1024 = vsel %vm944, 1, 0
        %v1025 = vsel %vm945, 1, 0
        %v1026 = vsel %vm946, 1, 0
        %v1027 = vsel %vm947, 1, 0
        %v1028 = vsel %vm948, 1, 0
        %v1029 = vsel %vm949, 1, 0
        %v1030 = vsel %vm950, 1, 0
        %v1031 = vsel %vm951, 1, 0
        %v1032 = vsel %vm952, 1, 0
        %v1033 = vsel %vm953, 1, 0
        %v1034 = vsel %vm954, 1, 0
        %v1035 = vsel %vm955, 1, 0
        %v1036 = vsel %vm956, 1, 0
        %v1037 = vsel %vm957, 1, 0
        %v1038 = vsel %vm958, 1, 0
        %v1039 = vsel %vm959, 1, 0
        %v1040 = vsel %vm960, 1, 0
        %v1041 = vsel %vm961, 1, 0
        %v1042 = vsel %vm962, 1, 0
        %v1043 = vsel %vm963, 1, 0
        %v1044 = vsel %vm964, 1, 0
        %v1045 = vsel %vm965, 1, 0
        %v1046 = vsel %vm966, 1, 0
        %v1047 = vsel %vm967, 1, 0
        %v1048 = vsel %vm968, 1, 0
        %v1049 = vsel %vm969, 1, 0
        %v1050 = vsel %vm970, 1, 0
        %v1051 = vsel %vm971, 1, 0
        %v1052 = vsel %vm972, 1, 0
        %v1053 = vsel %vm973, 1, 0
        %v1054 = vsel %vm974, 1, 0
        %v1055 = vsel %vm975, 1, 0
        %v1056 = vsel %vm976, 1, 0
        %v1057 = vsel %vm977, 1, 0
        %v1058 = vsel %vm978, 1, 0
        %v1059 = vsel %vm979, 1, 0
        %v1060 = vsel %vm980, 1, 0
        %v1061 = vsel %vm981, 1, 0
        %v1062 = vsel %vm982, 1, 0
        %v1063 = vsel %vm983, 1, 0
        %v1064 = vsel %vm984, 1, 0
        %v1065 = vsel %vm985, 1, 0
        %v1066 = vsel %vm986, 1, 0
        %v1067 = vsel %vm987, 1, 0
        %v1068 = vsel %vm988, 1, 0
        %v1069 = vsel %vm989, 1, 0
        %v1070 = vsel %vm990, 1, 0
        %v1071 = vsel %vm991, 1, 0
        %v1072 = vsel %vm992, 1, 0
        %v1073 = vsel %vm993, 1, 0
        %v1074 = vsel %vm994, 1, 0
        %v1075 = vsel %vm995, 1, 0
        %v1076 = vsel %vm996, 1, 0
        %v1077 = vsel %vm997, 1, 0
        %v1078 = vsel %vm998, 1, 0
        %v1079 = vsel %vm999, 1, 0
        %v1080 = vsel %vm1000, 1, 0
        %v1081 = vsel %vm1001, 1, 0
        %v1082 = vsel %vm1002, 1, 0
        %v1083 = vsel %vm1003, 1, 0
        %v1084 = vsel %vm1004, 1, 0
        %v1085 = vsel %vm1005, 1, 0
        %v1086 = vsel %vm1006, 1, 0
        %v1087 = vsel %vm1007, 1, 0
        %v1088 = vsel %vm1008, 1, 0
        %v1089 = vsel %vm1009, 1, 0
        %v1090 = vsel %vm1010, 1, 0
        %v1091 = vsel %vm1011, 1, 0
        %v1092 = vsel %vm1012, 1, 0
        %v1093 = vsel %vm1013, 1, 0
        %v1094 = vcvt.s32.f32 %v1014
        %v1095 = vcvt.s32.f32 %v1015
        %v1096 = vcvt.s32.f32 %v1016
        %v1097 = vcvt.s32.f32 %v1017
        %v1098 = vcvt.s32.f32 %v1018
        %v1099 = vcvt.s32.f32 %v1019
        %v1100 = vcvt.s32.f32 %v1020
        %v1101 = vcvt.s32.f32 %v1021
        %v1102 = vcvt.s32.f32 %v1022
        %v1103 = vcvt.s32.f32 %v1023
        %v1104 = vcvt.s32.f32 %v1024
        %v1105 = vcvt.s32.f32 %v1025
        %v1106 = vcvt.s32.f32 %v1026
        %v1107 = vcvt.s32.f32 %v1027
        %v1108 = vcvt.s32.f32 %v1028
        %v1109 = vcvt.s32.f32 %v1029
        %v1110 = vcvt.s32.f32 %v1030
        %v1111 = vcvt.s32.f32 %v1031
        %v1112 = vcvt.s32.f32 %v1032
        %v1113 = vcvt.s32.f32 %v1033
        %v1114 = vcvt.s32.f32 %v1034
        %v1115 = vcvt.s32.f32 %v1035
        %v1116 = vcvt.s32.f32 %v1036
        %v1117 = vcvt.s32.f32 %v1037
        %v1118 = vcvt.s32.f32 %v1038
        %v1119 = vcvt.s32.f32 %v1039
        %v1120 = vcvt.s32.f32 %v1040
        %v1121 = vcvt.s32.f32 %v1041
        %v1122 = vcvt.s32.f32 %v1042
        %v1123 = vcvt.s32.f32 %v1043
        %v1124 = vcvt.s32.f32 %v1044
        %v1125 = vcvt.s32.f32 %v1045
        %v1126 = vcvt.s32.f32 %v1046
        %v1127 = vcvt.s32.f32 %v1047
        %v1128 = vcvt.s32.f32 %v1048
        %v1129 = vcvt.s32.f32 %v1049
        %v1130 = vcvt.s32.f32 %v1050
        %v1131 = vcvt.s32.f32 %v1051
        %v1132 = vcvt.s32.f32 %v1052
        %v1133 = vcvt.s32.f32 %v1053
        %v1134 = vcvt.s32.f32 %v1054
        %v1135 = vcvt.s32.f32 %v1055
        %v1136 = vcvt.s32.f32 %v1056
        %v1137 = vcvt.s32.f32 %v1057
        %v1138 = vcvt.s32.f32 %v1058
        %v1139 = vcvt.s32.f32 %v1059
        %v1140 = vcvt.s32.f32 %v1060
        %v1141 = vcvt.s32.f32 %v1061
        %v1142 = vcvt.s32.f32 %v1062
        %v1143 = vcvt.s32.f32 %v1063
        %v1144 = vcvt.s32.f32 %v1064
        %v1145 = vcvt.s32.f32 %v1065
        %v1146 = vcvt.s32.f32 %v1066
        %v1147 = vcvt.s32.f32 %v1067
        %v1148 = vcvt.s32.f32 %v1068
        %v1149 = vcvt.s32.f32 %v1069
        %v1150 = vcvt.s32.f32 %v1070
        %v1151 = vcvt.s32.f32 %v1071
        %v1152 = vcvt.s32.f32 %v1072
        %v1153 = vcvt.s32.f32 %v1073
        %v1154 = vcvt.s32.f32 %v1074
        %v1155 = vcvt.s32.f32 %v1075
        %v1156 = vcvt.s32.f32 %v1076
        %v1157 = vcvt.s32.f32 %v1077
        %v1158 = vcvt.s32.f32 %v1078
        %v1159 = vcvt.s32.f32 %v1079
        %v1160 = vcvt.s32.f32 %v1080
        %v1161 = vcvt.s32.f32 %v1081
        %v1162 = vcvt.s32.f32 %v1082
        %v1163 = vcvt.s32.f32 %v1083
        %v1164 = vcvt.s32.f32 %v1084
        %v1165 = vcvt.s32.f32 %v1085
        %v1166 = vcvt.s32.f32 %v1086
        %v1167 = vcvt.s32.f32 %v1087
        %v1168 = vcvt.s32.f32 %v1088
        %v1169 = vcvt.s32.f32 %v1089
        %v1170 = vcvt.s32.f32 %v1090
        %v1171 = vcvt.s32.f32 %v1091
        %v1172 = vcvt.s32.f32 %v1092
        %v1173 = vcvt.s32.f32 %v1093
        %v1174 = vld [vmem:[#allocation8] sm:$0xff]
        %v1175 = vld [vmem:[#allocation8 + $0x8] sm:$0xff]
        %1176 = vmatprep.subr.mxu0 %v573
        %1177 = vmatpush1.msra.mxu0 %v572
        %1178 = vmatprep.subr.mxu0 %v578
        %1179 = vmatpush1.msra.mxu0 %v577
        %1180 = vmatprep.subr.mxu0 %v583
        %1181 = vmatpush1.msra.mxu0 %v582
        %1182 = vmatprep.subr.mxu0 %v588
        %1183 = vmatpush1.msra.mxu0 %v587
        %1184 = vmatprep.subr.mxu0 %v593
        %1185 = vmatpush1.msra.mxu0 %v592
        %1186 = vmatprep.subr.mxu0 %v598
        %1187 = vmatpush1.msra.mxu0 %v597
        %1188 = vmatprep.subr.mxu0 %v603
        %1189 = vmatpush1.msra.mxu0 %v602
        %1190 = vmatprep.subr.mxu0 %v608
        %1191 = vmatpush1.msra.mxu0 %v607
        %1192 = vmatprep.subr.mxu0 %v613
        %1193 = vmatpush1.msra.mxu0 %v612
        %1194 = vmatprep.subr.mxu0 %v618
        %1195 = vmatpush1.msra.mxu0 %v617
        %1196 = vmatprep.subr.mxu0 %v623
        %1197 = vmatpush1.msra.mxu0 %v622
        %1198 = vmatprep.subr.mxu0 %v628
        %1199 = vmatpush1.msra.mxu0 %v627
        %1200 = vmatprep.subr.mxu0 %v633
        %1201 = vmatpush1.msra.mxu0 %v632
        %1202 = vmatprep.subr.mxu0 %v638
        %1203 = vmatpush1.msra.mxu0 %v637
        %1204 = vmatprep.subr.mxu0 %v643
        %1205 = vmatpush1.msra.mxu0 %v642
        %1206 = vmatprep.subr.mxu0 %v648
        %1207 = vmatpush1.msra.mxu0 %v647
        %1208 = vmatprep.subr.mxu0 0.0
        %1209 = vmatpush1.msra.mxu0 0.0
        %1210 = vmatprep.subr.mxu0 0.0
        %1211 = vmatpush1.msra.mxu0 0.0
        %1212 = vmatprep.subr.mxu0 0.0
        %1213 = vmatpush1.msra.mxu0 0.0
        %1214 = vmatprep.subr.mxu0 0.0
        %1215 = vmatpush1.msra.mxu0 0.0
        %1216 = vmatprep.subr.mxu0 0.0
        %1217 = vmatpush1.msra.mxu0 0.0
        %1218 = vmatprep.subr.mxu0 0.0
        %1219 = vmatpush1.msra.mxu0 0.0
        %1220 = vmatprep.subr.mxu0 0.0
        %1221 = vmatpush1.msra.mxu0 0.0
        %1222 = vmatprep.subr.mxu0 0.0
        %1223 = vmatpush1.msra.mxu0 0.0
        %1224 = vmatprep.subr.mxu0 0.0
        %1225 = vmatpush1.msra.mxu0 0.0
        %1226 = vmatprep.subr.mxu0 0.0
        %1227 = vmatpush1.msra.mxu0 0.0
        %1228 = vmatprep.subr.mxu0 0.0
        %1229 = vmatpush1.msra.mxu0 0.0
        %1230 = vmatprep.subr.mxu0 0.0
        %1231 = vmatpush1.msra.mxu0 0.0
        %1232 = vmatprep.subr.mxu0 0.0
        %1233 = vmatpush1.msra.mxu0 0.0
        %1234 = vmatprep.subr.mxu0 0.0
        %1235 = vmatpush1.msra.mxu0 0.0
        %1236 = vmatprep.subr.mxu0 0.0
        %1237 = vmatpush1.msra.mxu0 0.0
        %1238 = vmatprep.subr.mxu0 0.0
        %1239 = vmatpush1.msra.mxu0 0.0
        %1240 = vmatprep.mubr.f32.mxu0 0.0
        %1241 = vmatmul.mubr.f32.gmra.mrb[0].mxu0 %v1174
        %v1242 = vpop.f32.mrb[0].mxu0
        %v1243 = vadd.f32 0.0, %v1242
        %v1244 = vpop.f32.mrb[0].mxu0
        %v1245 = vadd.f32 0.0, %v1244
        %1246 = vmatprep.mubr.f32.mxu0 0.0
        %1247 = vmatmul.mubr.f32.gmra.mrb[0].mxu0 %v1175
        %v1248 = vpop.f32.mrb[0].mxu0
        %v1249 = vadd.f32 0.0, %v1248
        %v1250 = vpop.f32.mrb[0].mxu0
        %v1251 = vadd.f32 0.0, %v1250
        %1252 = vdwg.mxu0
        %1253 = vmatprep.subr.mxu0 %v575
        %1254 = vmatpush1.msra.mxu0 %v574
        %1255 = vmatprep.subr.mxu0 %v580
        %1256 = vmatpush1.msra.mxu0 %v579
        %1257 = vmatprep.subr.mxu0 %v585
        %1258 = vmatpush1.msra.mxu0 %v584
        %1259 = vmatprep.subr.mxu0 %v590
        %1260 = vmatpush1.msra.mxu0 %v589
        %1261 = vmatprep.subr.mxu0 %v595
        %1262 = vmatpush1.msra.mxu0 %v594
        %1263 = vmatprep.subr.mxu0 %v600
        %1264 = vmatpush1.msra.mxu0 %v599
        %1265 = vmatprep.subr.mxu0 %v605
        %1266 = vmatpush1.msra.mxu0 %v604
        %1267 = vmatprep.subr.mxu0 %v610
        %1268 = vmatpush1.msra.mxu0 %v609
        %1269 = vmatprep.subr.mxu0 %v615
        %1270 = vmatpush1.msra.mxu0 %v614
        %1271 = vmatprep.subr.mxu0 %v620
        %1272 = vmatpush1.msra.mxu0 %v619
        %1273 = vmatprep.subr.mxu0 %v625
        %1274 = vmatpush1.msra.mxu0 %v624
        %1275 = vmatprep.subr.mxu0 %v630
        %1276 = vmatpush1.msra.mxu0 %v629
        %1277 = vmatprep.subr.mxu0 %v635
        %1278 = vmatpush1.msra.mxu0 %v634
        %1279 = vmatprep.subr.mxu0 %v640
        %1280 = vmatpush1.msra.mxu0 %v639
        %1281 = vmatprep.subr.mxu0 %v645
        %1282 = vmatpush1.msra.mxu0 %v644
        %1283 = vmatprep.subr.mxu0 %v650
        %1284 = vmatpush1.msra.mxu0 %v649
        %1285 = vmatprep.subr.mxu0 0.0
        %1286 = vmatpush1.msra.mxu0 0.0
        %1287 = vmatprep.subr.mxu0 0.0
        %1288 = vmatpush1.msra.mxu0 0.0
        %1289 = vmatprep.subr.mxu0 0.0
        %1290 = vmatpush1.msra.mxu0 0.0
        %1291 = vmatprep.subr.mxu0 0.0
        %1292 = vmatpush1.msra.mxu0 0.0
        %1293 = vmatprep.subr.mxu0 0.0
        %1294 = vmatpush1.msra.mxu0 0.0
        %1295 = vmatprep.subr.mxu0 0.0
        %1296 = vmatpush1.msra.mxu0 0.0
        %1297 = vmatprep.subr.mxu0 0.0
        %1298 = vmatpush1.msra.mxu0 0.0
        %1299 = vmatprep.subr.mxu0 0.0
        %1300 = vmatpush1.msra.mxu0 0.0
        %1301 = vmatprep.subr.mxu0 0.0
        %1302 = vmatpush1.msra.mxu0 0.0
        %1303 = vmatprep.subr.mxu0 0.0
        %1304 = vmatpush1.msra.mxu0 0.0
        %1305 = vmatprep.subr.mxu0 0.0
        %1306 = vmatpush1.msra.mxu0 0.0
        %1307 = vmatprep.subr.mxu0 0.0
        %1308 = vmatpush1.msra.mxu0 0.0
        %1309 = vmatprep.subr.mxu0 0.0
        %1310 = vmatpush1.msra.mxu0 0.0
        %1311 = vmatprep.subr.mxu0 0.0
        %1312 = vmatpush1.msra.mxu0 0.0
        %1313 = vmatprep.subr.mxu0 0.0
        %1314 = vmatpush1.msra.mxu0 0.0
        %1315 = vmatprep.subr.mxu0 0.0
        %1316 = vmatpush1.msra.mxu0 0.0
        %1317 = vmatprep.mubr.f32.mxu0 0.0
        %1318 = vmatmul.mubr.f32.gmra.mrb[0].mxu0 %v1174
        %v1319 = vpop.f32.mrb[0].mxu0
        %v1320 = vadd.f32 0.0, %v1319
        %v1321 = vpop.f32.mrb[0].mxu0
        %v1322 = vadd.f32 0.0, %v1321
        %1323 = vmatprep.mubr.f32.mxu0 0.0
        %1324 = vmatmul.mubr.f32.gmra.mrb[0].mxu0 %v1175
        %v1325 = vpop.f32.mrb[0].mxu0
        %v1326 = vadd.f32 0.0, %v1325
        %v1327 = vpop.f32.mrb[0].mxu0
        %v1328 = vadd.f32 0.0, %v1327
        %1329 = vdwg.mxu0
        %1330 = vmatprep.subr.mxu0 0.0
        %1331 = vmatpush1.msra.mxu0 %v576
        %1332 = vmatprep.subr.mxu0 0.0
        %1333 = vmatpush1.msra.mxu0 %v581
        %1334 = vmatprep.subr.mxu0 0.0
        %1335 = vmatpush1.msra.mxu0 %v586
        %1336 = vmatprep.subr.mxu0 0.0
        %1337 = vmatpush1.msra.mxu0 %v591
        %1338 = vmatprep.subr.mxu0 0.0
        %1339 = vmatpush1.msra.mxu0 %v596
        %1340 = vmatprep.subr.mxu0 0.0
        %1341 = vmatpush1.msra.mxu0 %v601
        %1342 = vmatprep.subr.mxu0 0.0
        %1343 = vmatpush1.msra.mxu0 %v606
        %1344 = vmatprep.subr.mxu0 0.0
        %1345 = vmatpush1.msra.mxu0 %v611
        %1346 = vmatprep.subr.mxu0 0.0
        %1347 = vmatpush1.msra.mxu0 %v616
        %1348 = vmatprep.subr.mxu0 0.0
        %1349 = vmatpush1.msra.mxu0 %v621
        %1350 = vmatprep.subr.mxu0 0.0
        %1351 = vmatpush1.msra.mxu0 %v626
        %1352 = vmatprep.subr.mxu0 0.0
        %1353 = vmatpush1.msra.mxu0 %v631
        %1354 = vmatprep.subr.mxu0 0.0
        %1355 = vmatpush1.msra.mxu0 %v636
        %1356 = vmatprep.subr.mxu0 0.0
        %1357 = vmatpush1.msra.mxu0 %v641
        %1358 = vmatprep.subr.mxu0 0.0
        %1359 = vmatpush1.msra.mxu0 %v646
        %1360 = vmatprep.subr.mxu0 0.0
        %1361 = vmatpush1.msra.mxu0 %v651
        %1362 = vmatprep.subr.mxu0 0.0
        %1363 = vmatpush1.msra.mxu0 0.0
        %1364 = vmatprep.subr.mxu0 0.0
        %1365 = vmatpush1.msra.mxu0 0.0
        %1366 = vmatprep.subr.mxu0 0.0
        %1367 = vmatpush1.msra.mxu0 0.0
        %1368 = vmatprep.subr.mxu0 0.0
        %1369 = vmatpush1.msra.mxu0 0.0
        %1370 = vmatprep.subr.mxu0 0.0
        %1371 = vmatpush1.msra.mxu0 0.0
        %1372 = vmatprep.subr.mxu0 0.0
        %1373 = vmatpush1.msra.mxu0 0.0
        %1374 = vmatprep.subr.mxu0 0.0
        %1375 = vmatpush1.msra.mxu0 0.0
        %1376 = vmatprep.subr.mxu0 0.0
        %1377 = vmatpush1.msra.mxu0 0.0
        %1378 = vmatprep.subr.mxu0 0.0
        %1379 = vmatpush1.msra.mxu0 0.0
        %1380 = vmatprep.subr.mxu0 0.0
        %1381 = vmatpush1.msra.mxu0 0.0
        %1382 = vmatprep.subr.mxu0 0.0
        %1383 = vmatpush1.msra.mxu0 0.0
        %1384 = vmatprep.subr.mxu0 0.0
        %1385 = vmatpush1.msra.mxu0 0.0
        %1386 = vmatprep.subr.mxu0 0.0
        %1387 = vmatpush1.msra.mxu0 0.0
        %1388 = vmatprep.subr.mxu0 0.0
        %1389 = vmatpush1.msra.mxu0 0.0
        %1390 = vmatprep.subr.mxu0 0.0
        %1391 = vmatpush1.msra.mxu0 0.0
        %1392 = vmatprep.subr.mxu0 0.0
        %1393 = vmatpush1.msra.mxu0 0.0
        %1394 = vmatprep.mubr.f32.mxu0 0.0
        %1395 = vmatmul.mubr.f32.gmra.mrb[0].mxu0 %v1174
        %v1396 = vpop.f32.mrb[0].mxu0
        %v1397 = vadd.f32 0.0, %v1396
        %v1398 = vpop.f32.mrb[0].mxu0
        %1399 = vmatprep.mubr.f32.mxu0 0.0
        %1400 = vmatmul.mubr.f32.gmra.mrb[0].mxu0 %v1175
        %v1401 = vpop.f32.mrb[0].mxu0
        %v1402 = vadd.f32 0.0, %v1401
        %v1403 = vpop.f32.mrb[0].mxu0
        %1404 = vdwg.mxu0
        %v1405 = vld [vmem:[%s5] sm:$0xff]
        %v1406 = vld [vmem:[%s5 + $0x8] sm:$0xff]
        %1407 = vmatprep.subr.mxu0 %v834
        %1408 = vmatpush1.msra.mxu0 %v833
        %1409 = vmatprep.subr.mxu0 %v839
        %1410 = vmatpush1.msra.mxu0 %v838
        %1411 = vmatprep.subr.mxu0 %v844
        %1412 = vmatpush1.msra.mxu0 %v843
        %1413 = vmatprep.subr.mxu0 %v849
        %1414 = vmatpush1.msra.mxu0 %v848
        %1415 = vmatprep.subr.mxu0 %v854
        %1416 = vmatpush1.msra.mxu0 %v853
        %1417 = vmatprep.subr.mxu0 %v859
        %1418 = vmatpush1.msra.mxu0 %v858
        %1419 = vmatprep.subr.mxu0 %v864
        %1420 = vmatpush1.msra.mxu0 %v863
        %1421 = vmatprep.subr.mxu0 %v869
        %1422 = vmatpush1.msra.mxu0 %v868
        %1423 = vmatprep.subr.mxu0 %v874
        %1424 = vmatpush1.msra.mxu0 %v873
        %1425 = vmatprep.subr.mxu0 %v879
        %1426 = vmatpush1.msra.mxu0 %v878
        %1427 = vmatprep.subr.mxu0 %v884
        %1428 = vmatpush1.msra.mxu0 %v883
        %1429 = vmatprep.subr.mxu0 %v889
        %1430 = vmatpush1.msra.mxu0 %v888
        %1431 = vmatprep.subr.mxu0 %v894
        %1432 = vmatpush1.msra.mxu0 %v893
        %1433 = vmatprep.subr.mxu0 %v899
        %1434 = vmatpush1.msra.mxu0 %v898
        %1435 = vmatprep.subr.mxu0 %v904
        %1436 = vmatpush1.msra.mxu0 %v903
        %1437 = vmatprep.subr.mxu0 %v909
        %1438 = vmatpush1.msra.mxu0 %v908
        %1439 = vmatprep.subr.mxu0 0.0
        %1440 = vmatpush1.msra.mxu0 0.0
        %1441 = vmatprep.subr.mxu0 0.0
        %1442 = vmatpush1.msra.mxu0 0.0
        %1443 = vmatprep.subr.mxu0 0.0
        %1444 = vmatpush1.msra.mxu0 0.0
        %1445 = vmatprep.subr.mxu0 0.0
        %1446 = vmatpush1.msra.mxu0 0.0
        %1447 = vmatprep.subr.mxu0 0.0
        %1448 = vmatpush1.msra.mxu0 0.0
        %1449 = vmatprep.subr.mxu0 0.0
        %1450 = vmatpush1.msra.mxu0 0.0
        %1451 = vmatprep.subr.mxu0 0.0
        %1452 = vmatpush1.msra.mxu0 0.0
        %1453 = vmatprep.subr.mxu0 0.0
        %1454 = vmatpush1.msra.mxu0 0.0
        %1455 = vmatprep.subr.mxu0 0.0
        %1456 = vmatpush1.msra.mxu0 0.0
        %1457 = vmatprep.subr.mxu0 0.0
        %1458 = vmatpush1.msra.mxu0 0.0
        %1459 = vmatprep.subr.mxu0 0.0
        %1460 = vmatpush1.msra.mxu0 0.0
        %1461 = vmatprep.subr.mxu0 0.0
        %1462 = vmatpush1.msra.mxu0 0.0
        %1463 = vmatprep.subr.mxu0 0.0
        %1464 = vmatpush1.msra.mxu0 0.0
        %1465 = vmatprep.subr.mxu0 0.0
        %1466 = vmatpush1.msra.mxu0 0.0
        %1467 = vmatprep.subr.mxu0 0.0
        %1468 = vmatpush1.msra.mxu0 0.0
        %1469 = vmatprep.subr.mxu0 0.0
        %1470 = vmatpush1.msra.mxu0 0.0
        %1471 = vmatprep.mubr.f32.mxu0 0.0
        %1472 = vmatmul.mubr.f32.gmra.mrb[0].mxu0 %v1405
        %v1473 = vpop.f32.mrb[0].mxu0
        %v1474 = vadd.f32 0.0, %v1473
        %v1475 = vpop.f32.mrb[0].mxu0
        %v1476 = vadd.f32 0.0, %v1475
        %1477 = vmatprep.mubr.f32.mxu0 0.0
        %1478 = vmatmul.mubr.f32.gmra.mrb[0].mxu0 %v1406
        %v1479 = vpop.f32.mrb[0].mxu0
        %v1480 = vadd.f32 0.0, %v1479
        %v1481 = vpop.f32.mrb[0].mxu0
        %v1482 = vadd.f32 0.0, %v1481
        %1483 = vdwg.mxu0
        %1484 = vmatprep.subr.mxu0 %v836
        %1485 = vmatpush1.msra.mxu0 %v835
        %1486 = vmatprep.subr.mxu0 %v841
        %1487 = vmatpush1.msra.mxu0 %v840
        %1488 = vmatprep.subr.mxu0 %v846
        %1489 = vmatpush1.msra.mxu0 %v845
        %1490 = vmatprep.subr.mxu0 %v851
        %1491 = vmatpush1.msra.mxu0 %v850
        %1492 = vmatprep.subr.mxu0 %v856
        %1493 = vmatpush1.msra.mxu0 %v855
        %1494 = vmatprep.subr.mxu0 %v861
        %1495 = vmatpush1.msra.mxu0 %v860
        %1496 = vmatprep.subr.mxu0 %v866
        %1497 = vmatpush1.msra.mxu0 %v865
        %1498 = vmatprep.subr.mxu0 %v871
        %1499 = vmatpush1.msra.mxu0 %v870
        %1500 = vmatprep.subr.mxu0 %v876
        %1501 = vmatpush1.msra.mxu0 %v875
        %1502 = vmatprep.subr.mxu0 %v881
        %1503 = vmatpush1.msra.mxu0 %v880
        %1504 = vmatprep.subr.mxu0 %v886
        %1505 = vmatpush1.msra.mxu0 %v885
        %1506 = vmatprep.subr.mxu0 %v891
        %1507 = vmatpush1.msra.mxu0 %v890
        %1508 = vmatprep.subr.mxu0 %v896
        %1509 = vmatpush1.msra.mxu0 %v895
        %1510 = vmatprep.subr.mxu0 %v901
        %1511 = vmatpush1.msra.mxu0 %v900
        %1512 = vmatprep.subr.mxu0 %v906
        %1513 = vmatpush1.msra.mxu0 %v905
        %1514 = vmatprep.subr.mxu0 %v911
        %1515 = vmatpush1.msra.mxu0 %v910
        %1516 = vmatprep.subr.mxu0 0.0
        %1517 = vmatpush1.msra.mxu0 0.0
        %1518 = vmatprep.subr.mxu0 0.0
        %1519 = vmatpush1.msra.mxu0 0.0
        %1520 = vmatprep.subr.mxu0 0.0
        %1521 = vmatpush1.msra.mxu0 0.0
        %1522 = vmatprep.subr.mxu0 0.0
        %1523 = vmatpush1.msra.mxu0 0.0
        %1524 = vmatprep.subr.mxu0 0.0
        %1525 = vmatpush1.msra.mxu0 0.0
        %1526 = vmatprep.subr.mxu0 0.0
        %1527 = vmatpush1.msra.mxu0 0.0
        %1528 = vmatprep.subr.mxu0 0.0
        %1529 = vmatpush1.msra.mxu0 0.0
        %1530 = vmatprep.subr.mxu0 0.0
        %1531 = vmatpush1.msra.mxu0 0.0
        %1532 = vmatprep.subr.mxu0 0.0
        %1533 = vmatpush1.msra.mxu0 0.0
        %1534 = vmatprep.subr.mxu0 0.0
        %1535 = vmatpush1.msra.mxu0 0.0
        %1536 = vmatprep.subr.mxu0 0.0
        %1537 = vmatpush1.msra.mxu0 0.0
        %1538 = vmatprep.subr.mxu0 0.0
        %1539 = vmatpush1.msra.mxu0 0.0
        %1540 = vmatprep.subr.mxu0 0.0
        %1541 = vmatpush1.msra.mxu0 0.0
        %1542 = vmatprep.subr.mxu0 0.0
        %1543 = vmatpush1.msra.mxu0 0.0
        %1544 = vmatprep.subr.mxu0 0.0
        %1545 = vmatpush1.msra.mxu0 0.0
        %1546 = vmatprep.subr.mxu0 0.0
        %1547 = vmatpush1.msra.mxu0 0.0
        %1548 = vmatprep.mubr.f32.mxu0 0.0
        %1549 = vmatmul.mubr.f32.gmra.mrb[0].mxu0 %v1405
        %v1550 = vpop.f32.mrb[0].mxu0
        %v1551 = vadd.f32 0.0, %v1550
        %v1552 = vpop.f32.mrb[0].mxu0
        %v1553 = vadd.f32 0.0, %v1552
        %1554 = vmatprep.mubr.f32.mxu0 0.0
        %1555 = vmatmul.mubr.f32.gmra.mrb[0].mxu0 %v1406
        %v1556 = vpop.f32.mrb[0].mxu0
        %v1557 = vadd.f32 0.0, %v1556
        %v1558 = vpop.f32.mrb[0].mxu0
        %v1559 = vadd.f32 0.0, %v1558
        %1560 = vdwg.mxu0
        %1561 = vmatprep.subr.mxu0 0.0
        %1562 = vmatpush1.msra.mxu0 %v837
        %1563 = vmatprep.subr.mxu0 0.0
        %1564 = vmatpush1.msra.mxu0 %v842
        %1565 = vmatprep.subr.mxu0 0.0
        %1566 = vmatpush1.msra.mxu0 %v847
        %1567 = vmatprep.subr.mxu0 0.0
        %1568 = vmatpush1.msra.mxu0 %v852
        %1569 = vmatprep.subr.mxu0 0.0
        %1570 = vmatpush1.msra.mxu0 %v857
        %1571 = vmatprep.subr.mxu0 0.0
        %1572 = vmatpush1.msra.mxu0 %v862
        %1573 = vmatprep.subr.mxu0 0.0
        %1574 = vmatpush1.msra.mxu0 %v867
        %1575 = vmatprep.subr.mxu0 0.0
        %1576 = vmatpush1.msra.mxu0 %v872
        %1577 = vmatprep.subr.mxu0 0.0
        %1578 = vmatpush1.msra.mxu0 %v877
        %1579 = vmatprep.subr.mxu0 0.0
        %1580 = vmatpush1.msra.mxu0 %v882
        %1581 = vmatprep.subr.mxu0 0.0
        %1582 = vmatpush1.msra.mxu0 %v887
        %1583 = vmatprep.subr.mxu0 0.0
        %1584 = vmatpush1.msra.mxu0 %v892
        %1585 = vmatprep.subr.mxu0 0.0
        %1586 = vmatpush1.msra.mxu0 %v897
        %1587 = vmatprep.subr.mxu0 0.0
        %1588 = vmatpush1.msra.mxu0 %v902
        %1589 = vmatprep.subr.mxu0 0.0
        %1590 = vmatpush1.msra.mxu0 %v907
        %1591 = vmatprep.subr.mxu0 0.0
        %1592 = vmatpush1.msra.mxu0 %v912
        %1593 = vmatprep.subr.mxu0 0.0
        %1594 = vmatpush1.msra.mxu0 0.0
        %1595 = vmatprep.subr.mxu0 0.0
        %1596 = vmatpush1.msra.mxu0 0.0
        %1597 = vmatprep.subr.mxu0 0.0
        %1598 = vmatpush1.msra.mxu0 0.0
        %1599 = vmatprep.subr.mxu0 0.0
        %1600 = vmatpush1.msra.mxu0 0.0
        %1601 = vmatprep.subr.mxu0 0.0
        %1602 = vmatpush1.msra.mxu0 0.0
        %1603 = vmatprep.subr.mxu0 0.0
        %1604 = vmatpush1.msra.mxu0 0.0
        %1605 = vmatprep.subr.mxu0 0.0
        %1606 = vmatpush1.msra.mxu0 0.0
        %1607 = vmatprep.subr.mxu0 0.0
        %1608 = vmatpush1.msra.mxu0 0.0
        %1609 = vmatprep.subr.mxu0 0.0
        %1610 = vmatpush1.msra.mxu0 0.0
        %1611 = vmatprep.subr.mxu0 0.0
        %1612 = vmatpush1.msra.mxu0 0.0
        %1613 = vmatprep.subr.mxu0 0.0
        %1614 = vmatpush1.msra.mxu0 0.0
        %1615 = vmatprep.subr.mxu0 0.0
        %1616 = vmatpush1.msra.mxu0 0.0
        %1617 = vmatprep.subr.mxu0 0.0
        %1618 = vmatpush1.msra.mxu0 0.0
        %1619 = vmatprep.subr.mxu0 0.0
        %1620 = vmatpush1.msra.mxu0 0.0
        %1621 = vmatprep.subr.mxu0 0.0
        %1622 = vmatpush1.msra.mxu0 0.0
        %1623 = vmatprep.subr.mxu0 0.0
        %1624 = vmatpush1.msra.mxu0 0.0
        %1625 = vmatprep.mubr.f32.mxu0 0.0
        %1626 = vmatmul.mubr.f32.gmra.mrb[0].mxu0 %v1405
        %v1627 = vpop.f32.mrb[0].mxu0
        %v1628 = vadd.f32 0.0, %v1627
        %v1629 = vpop.f32.mrb[0].mxu0
        %1630 = vmatprep.mubr.f32.mxu0 0.0
        %1631 = vmatmul.mubr.f32.gmra.mrb[0].mxu0 %v1406
        %v1632 = vpop.f32.mrb[0].mxu0
        %v1633 = vadd.f32 0.0, %v1632
        %v1634 = vpop.f32.mrb[0].mxu0
        %1635 = vdwg.mxu0
        %v1636 = vld [vmem:[#allocation10] sm:$0xff]
        %v1637 = vld [vmem:[#allocation10 + $0x8] sm:$0xff]
        %v1638 = vld [vmem:[#allocation10 + $0x10] sm:$0xff]
        %v1639 = vld [vmem:[#allocation10 + $0x18] sm:$0xff]
        %v1640 = vld [vmem:[#allocation10 + $0x20] sm:$0xff]
        %v1641 = vld [vmem:[#allocation10 + $0x28] sm:$0xff]
        %v1642 = vld [vmem:[#allocation10 + $0x30] sm:$0xff]
        %v1643 = vld [vmem:[#allocation10 + $0x38] sm:$0xff]
        %v1644 = vld [vmem:[#allocation10 + $0x40] sm:$0xff]
        %v1645 = vld [vmem:[#allocation10 + $0x48] sm:$0xff]
        %v1646 = vld [vmem:[#allocation10 + $0x50] sm:$0xff]
        %v1647 = vld [vmem:[#allocation10 + $0x58] sm:$0xff]
        %v1648 = vld [vmem:[#allocation10 + $0x60] sm:$0xff]
        %v1649 = vld [vmem:[#allocation10 + $0x68] sm:$0xff]
        %v1650 = vld [vmem:[#allocation10 + $0x70] sm:$0xff]
        %v1651 = vld [vmem:[#allocation10 + $0x78] sm:$0xff]
        %v1652 = vld [vmem:[#allocation10 + $0x80] sm:$0xff]
        %v1653 = vld [vmem:[#allocation10 + $0x88] sm:$0xff]
        %v1654 = vld [vmem:[#allocation10 + $0x90] sm:$0xff]
        %v1655 = vld [vmem:[#allocation10 + $0x98] sm:$0xff]
        %v1656 = vld [vmem:[#allocation10 + $0xa0] sm:$0xff]
        %v1657 = vld [vmem:[#allocation10 + $0xa8] sm:$0xff]
        %v1658 = vld [vmem:[#allocation10 + $0xb0] sm:$0xff]
        %v1659 = vld [vmem:[#allocation10 + $0xb8] sm:$0xff]
        %v1660 = vld [vmem:[#allocation10 + $0xc0] sm:$0xff]
        %v1661 = vld [vmem:[#allocation10 + $0xc8] sm:$0xff]
        %v1662 = vld [vmem:[#allocation10 + $0xd0] sm:$0xff]
        %v1663 = vld [vmem:[#allocation10 + $0xd8] sm:$0xff]
        %v1664 = vld [vmem:[#allocation10 + $0xe0] sm:$0xff]
        %v1665 = vld [vmem:[#allocation10 + $0xe8] sm:$0xff]
        %v1666 = vld [vmem:[#allocation10 + $0xf0] sm:$0xff]
        %v1667 = vld [vmem:[#allocation10 + $0xf8] sm:$0xff]
        %1668 = vmatprep.subr.mxu0 %v1095
        %1669 = vmatpush1.msra.mxu0 %v1094
        %1670 = vmatprep.subr.mxu0 %v1100
        %1671 = vmatpush1.msra.mxu0 %v1099
        %1672 = vmatprep.subr.mxu0 %v1105
        %1673 = vmatpush1.msra.mxu0 %v1104
        %1674 = vmatprep.subr.mxu0 %v1110
        %1675 = vmatpush1.msra.mxu0 %v1109
        %1676 = vmatprep.subr.mxu0 %v1115
        %1677 = vmatpush1.msra.mxu0 %v1114
        %1678 = vmatprep.subr.mxu0 %v1120
        %1679 = vmatpush1.msra.mxu0 %v1119
        %1680 = vmatprep.subr.mxu0 %v1125
        %1681 = vmatpush1.msra.mxu0 %v1124
        %1682 = vmatprep.subr.mxu0 %v1130
        %1683 = vmatpush1.msra.mxu0 %v1129
        %1684 = vmatprep.subr.mxu0 %v1135
        %1685 = vmatpush1.msra.mxu0 %v1134
        %1686 = vmatprep.subr.mxu0 %v1140
        %1687 = vmatpush1.msra.mxu0 %v1139
        %1688 = vmatprep.subr.mxu0 %v1145
        %1689 = vmatpush1.msra.mxu0 %v1144
        %1690 = vmatprep.subr.mxu0 %v1150
        %1691 = vmatpush1.msra.mxu0 %v1149
        %1692 = vmatprep.subr.mxu0 %v1155
        %1693 = vmatpush1.msra.mxu0 %v1154
        %1694 = vmatprep.subr.mxu0 %v1160
        %1695 = vmatpush1.msra.mxu0 %v1159
        %1696 = vmatprep.subr.mxu0 %v1165
        %1697 = vmatpush1.msra.mxu0 %v1164
        %1698 = vmatprep.subr.mxu0 %v1170
        %1699 = vmatpush1.msra.mxu0 %v1169
        %1700 = vmatprep.subr.mxu0 0.0
        %1701 = vmatpush1.msra.mxu0 0.0
        %1702 = vmatprep.subr.mxu0 0.0
        %1703 = vmatpush1.msra.mxu0 0.0
        %1704 = vmatprep.subr.mxu0 0.0
        %1705 = vmatpush1.msra.mxu0 0.0
        %1706 = vmatprep.subr.mxu0 0.0
        %1707 = vmatpush1.msra.mxu0 0.0
        %1708 = vmatprep.subr.mxu0 0.0
        %1709 = vmatpush1.msra.mxu0 0.0
        %1710 = vmatprep.subr.mxu0 0.0
        %1711 = vmatpush1.msra.mxu0 0.0
        %1712 = vmatprep.subr.mxu0 0.0
        %1713 = vmatpush1.msra.mxu0 0.0
        %1714 = vmatprep.subr.mxu0 0.0
        %1715 = vmatpush1.msra.mxu0 0.0
        %1716 = vmatprep.subr.mxu0 0.0
        %1717 = vmatpush1.msra.mxu0 0.0
        %1718 = vmatprep.subr.mxu0 0.0
        %1719 = vmatpush1.msra.mxu0 0.0
        %1720 = vmatprep.subr.mxu0 0.0
        %1721 = vmatpush1.msra.mxu0 0.0
        %1722 = vmatprep.subr.mxu0 0.0
        %1723 = vmatpush1.msra.mxu0 0.0
        %1724 = vmatprep.subr.mxu0 0.0
        %1725 = vmatpush1.msra.mxu0 0.0
        %1726 = vmatprep.subr.mxu0 0.0
        %1727 = vmatpush1.msra.mxu0 0.0
        %1728 = vmatprep.subr.mxu0 0.0
        %1729 = vmatpush1.msra.mxu0 0.0
        %1730 = vmatprep.subr.mxu0 0.0
        %1731 = vmatpush1.msra.mxu0 0.0
        %1732 = vmatprep.mubr.f32.mxu0 0.0
        %1733 = vmatmul.mubr.f32.gmra.mrb[0].mxu0 %v1636
        %v1734 = vpop.f32.mrb[0].mxu0
        %v1735 = vadd.f32 0.0, %v1734
        %v1736 = vpop.f32.mrb[0].mxu0
        %v1737 = vadd.f32 0.0, %v1736
        %1738 = vmatprep.mubr.f32.mxu0 0.0
        %1739 = vmatmul.mubr.f32.gmra.mrb[0].mxu0 %v1637
        %v1740 = vpop.f32.mrb[0].mxu0
        %v1741 = vadd.f32 0.0, %v1740
        %v1742 = vpop.f32.mrb[0].mxu0
        %v1743 = vadd.f32 0.0, %v1742
        %1744 = vmatprep.mubr.f32.mxu0 0.0
        %1745 = vmatmul.mubr.f32.gmra.mrb[0].mxu0 %v1638
        %v1746 = vpop.f32.mrb[0].mxu0
        %v1747 = vadd.f32 0.0, %v1746
        %v1748 = vpop.f32.mrb[0].mxu0
        %v1749 = vadd.f32 0.0, %v1748
        %1750 = vmatprep.mubr.f32.mxu0 0.0
        %1751 = vmatmul.mubr.f32.gmra.mrb[0].mxu0 %v1639
        %v1752 = vpop.f32.mrb[0].mxu0
        %v1753 = vadd.f32 0.0, %v1752
        %v1754 = vpop.f32.mrb[0].mxu0
        %v1755 = vadd.f32 0.0, %v1754
        %1756 = vmatprep.mubr.f32.mxu0 0.0
        %1757 = vmatmul.mubr.f32.gmra.mrb[0].mxu0 %v1640
        %v1758 = vpop.f32.mrb[0].mxu0
        %v1759 = vadd.f32 0.0, %v1758
        %v1760 = vpop.f32.mrb[0].mxu0
        %v1761 = vadd.f32 0.0, %v1760
        %1762 = vmatprep.mubr.f32.mxu0 0.0
        %1763 = vmatmul.mubr.f32.gmra.mrb[0].mxu0 %v1641
        %v1764 = vpop.f32.mrb[0].mxu0
        %v1765 = vadd.f32 0.0, %v1764
        %v1766 = vpop.f32.mrb[0].mxu0
        %v1767 = vadd.f32 0.0, %v1766
        %1768 = vmatprep.mubr.f32.mxu0 0.0
        %1769 = vmatmul.mubr.f32.gmra.mrb[0].mxu0 %v1642
        %v1770 = vpop.f32.mrb[0].mxu0
        %v1771 = vadd.f32 0.0, %v1770
        %v1772 = vpop.f32.mrb[0].mxu0
        %v1773 = vadd.f32 0.0, %v1772
        %1774 = vmatprep.mubr.f32.mxu0 0.0
        %1775 = vmatmul.mubr.f32.gmra.mrb[0].mxu0 %v1643
        %v1776 = vpop.f32.mrb[0].mxu0
        %v1777 = vadd.f32 0.0, %v1776
        %v1778 = vpop.f32.mrb[0].mxu0
        %v1779 = vadd.f32 0.0, %v1778
        %1780 = vmatprep.mubr.f32.mxu0 0.0
        %1781 = vmatmul.mubr.f32.gmra.mrb[0].mxu0 %v1644
        %v1782 = vpop.f32.mrb[0].mxu0
        %v1783 = vadd.f32 0.0, %v1782
        %v1784 = vpop.f32.mrb[0].mxu0
        %v1785 = vadd.f32 0.0, %v1784
        %1786 = vmatprep.mubr.f32.mxu0 0.0
        %1787 = vmatmul.mubr.f32.gmra.mrb[0].mxu0 %v1645
        %v1788 = vpop.f32.mrb[0].mxu0
        %v1789 = vadd.f32 0.0, %v1788
        %v1790 = vpop.f32.mrb[0].mxu0
        %v1791 = vadd.f32 0.0, %v1790
        %1792 = vmatprep.mubr.f32.mxu0 0.0
        %1793 = vmatmul.mubr.f32.gmra.mrb[0].mxu0 %v1646
        %v1794 = vpop.f32.mrb[0].mxu0
        %v1795 = vadd.f32 0.0, %v1794
        %v1796 = vpop.f32.mrb[0].mxu0
        %v1797 = vadd.f32 0.0, %v1796
        %1798 = vmatprep.mubr.f32.mxu0 0.0
        %1799 = vmatmul.mubr.f32.gmra.mrb[0].mxu0 %v1647
        %v1800 = vpop.f32.mrb[0].mxu0
        %v1801 = vadd.f32 0.0, %v1800
        %v1802 = vpop.f32.mrb[0].mxu0
        %v1803 = vadd.f32 0.0, %v1802
        %1804 = vmatprep.mubr.f32.mxu0 0.0
        %1805 = vmatmul.mubr.f32.gmra.mrb[0].mxu0 %v1648
        %v1806 = vpop.f32.mrb[0].mxu0
        %v1807 = vadd.f32 0.0, %v1806
        %v1808 = vpop.f32.mrb[0].mxu0
        %v1809 = vadd.f32 0.0, %v1808
        %1810 = vmatprep.mubr.f32.mxu0 0.0
        %1811 = vmatmul.mubr.f32.gmra.mrb[0].mxu0 %v1649
        %v1812 = vpop.f32.mrb[0].mxu0
        %v1813 = vadd.f32 0.0, %v1812
        %v1814 = vpop.f32.mrb[0].mxu0
        %v1815 = vadd.f32 0.0, %v1814
        %1816 = vmatprep.mubr.f32.mxu0 0.0
        %1817 = vmatmul.mubr.f32.gmra.mrb[0].mxu0 %v1650
        %v1818 = vpop.f32.mrb[0].mxu0
        %v1819 = vadd.f32 0.0, %v1818
        %v1820 = vpop.f32.mrb[0].mxu0
        %v1821 = vadd.f32 0.0, %v1820
        %1822 = vmatprep.mubr.f32.mxu0 0.0
        %1823 = vmatmul.mubr.f32.gmra.mrb[0].mxu0 %v1651
        %v1824 = vpop.f32.mrb[0].mxu0
        %v1825 = vadd.f32 0.0, %v1824
        %v1826 = vpop.f32.mrb[0].mxu0
        %v1827 = vadd.f32 0.0, %v1826
        %1828 = vmatprep.mubr.f32.mxu0 0.0
        %1829 = vmatmul.mubr.f32.gmra.mrb[0].mxu0 %v1652
        %v1830 = vpop.f32.mrb[0].mxu0
        %v1831 = vadd.f32 0.0, %v1830
        %v1832 = vpop.f32.mrb[0].mxu0
        %v1833 = vadd.f32 0.0, %v1832
        %1834 = vmatprep.mubr.f32.mxu0 0.0
        %1835 = vmatmul.mubr.f32.gmra.mrb[0].mxu0 %v1653
        %v1836 = vpop.f32.mrb[0].mxu0
        %v1837 = vadd.f32 0.0, %v1836
        %v1838 = vpop.f32.mrb[0].mxu0
        %v1839 = vadd.f32 0.0, %v1838
        %1840 = vmatprep.mubr.f32.mxu0 0.0
        %1841 = vmatmul.mubr.f32.gmra.mrb[0].mxu0 %v1654
        %v1842 = vpop.f32.mrb[0].mxu0
        %v1843 = vadd.f32 0.0, %v1842
        %v1844 = vpop.f32.mrb[0].mxu0
        %v1845 = vadd.f32 0.0, %v1844
        %1846 = vmatprep.mubr.f32.mxu0 0.0
        %1847 = vmatmul.mubr.f32.gmra.mrb[0].mxu0 %v1655
        %v1848 = vpop.f32.mrb[0].mxu0
        %v1849 = vadd.f32 0.0, %v1848
        %v1850 = vpop.f32.mrb[0].mxu0
        %v1851 = vadd.f32 0.0, %v1850
        %1852 = vmatprep.mubr.f32.mxu0 0.0
        %1853 = vmatmul.mubr.f32.gmra.mrb[0].mxu0 %v1656
        %v1854 = vpop.f32.mrb[0].mxu0
        %v1855 = vadd.f32 0.0, %v1854
        %v1856 = vpop.f32.mrb[0].mxu0
        %v1857 = vadd.f32 0.0, %v1856
        %1858 = vmatprep.mubr.f32.mxu0 0.0
        %1859 = vmatmul.mubr.f32.gmra.mrb[0].mxu0 %v1657
        %v1860 = vpop.f32.mrb[0].mxu0
        %v1861 = vadd.f32 0.0, %v1860
        %v1862 = vpop.f32.mrb[0].mxu0
        %v1863 = vadd.f32 0.0, %v1862
        %1864 = vmatprep.mubr.f32.mxu0 0.0
        %1865 = vmatmul.mubr.f32.gmra.mrb[0].mxu0 %v1658
        %v1866 = vpop.f32.mrb[0].mxu0
        %v1867 = vadd.f32 0.0, %v1866
        %v1868 = vpop.f32.mrb[0].mxu0
        %v1869 = vadd.f32 0.0, %v1868
        %1870 = vmatprep.mubr.f32.mxu0 0.0
        %1871 = vmatmul.mubr.f32.gmra.mrb[0].mxu0 %v1659
        %v1872 = vpop.f32.mrb[0].mxu0
        %v1873 = vadd.f32 0.0, %v1872
        %v1874 = vpop.f32.mrb[0].mxu0
        %v1875 = vadd.f32 0.0, %v1874
        %1876 = vmatprep.mubr.f32.mxu0 0.0
        %1877 = vmatmul.mubr.f32.gmra.mrb[0].mxu0 %v1660
        %v1878 = vpop.f32.mrb[0].mxu0
        %v1879 = vadd.f32 0.0, %v1878
        %v1880 = vpop.f32.mrb[0].mxu0
        %v1881 = vadd.f32 0.0, %v1880
        %1882 = vmatprep.mubr.f32.mxu0 0.0
        %1883 = vmatmul.mubr.f32.gmra.mrb[0].mxu0 %v1661
        %v1884 = vpop.f32.mrb[0].mxu0
        %v1885 = vadd.f32 0.0, %v1884
        %v1886 = vpop.f32.mrb[0].mxu0
        %v1887 = vadd.f32 0.0, %v1886
        %1888 = vmatprep.mubr.f32.mxu0 0.0
        %1889 = vmatmul.mubr.f32.gmra.mrb[0].mxu0 %v1662
        %v1890 = vpop.f32.mrb[0].mxu0
        %v1891 = vadd.f32 0.0, %v1890
        %v1892 = vpop.f32.mrb[0].mxu0
        %v1893 = vadd.f32 0.0, %v1892
        %1894 = vmatprep.mubr.f32.mxu0 0.0
        %1895 = vmatmul.mubr.f32.gmra.mrb[0].mxu0 %v1663
        %v1896 = vpop.f32.mrb[0].mxu0
        %v1897 = vadd.f32 0.0, %v1896
        %v1898 = vpop.f32.mrb[0].mxu0
        %v1899 = vadd.f32 0.0, %v1898
        %1900 = vmatprep.mubr.f32.mxu0 0.0
        %1901 = vmatmul.mubr.f32.gmra.mrb[0].mxu0 %v1664
        %v1902 = vpop.f32.mrb[0].mxu0
        %v1903 = vadd.f32 0.0, %v1902
        %v1904 = vpop.f32.mrb[0].mxu0
        %v1905 = vadd.f32 0.0, %v1904
        %1906 = vmatprep.mubr.f32.mxu0 0.0
        %1907 = vmatmul.mubr.f32.gmra.mrb[0].mxu0 %v1665
        %v1908 = vpop.f32.mrb[0].mxu0
        %v1909 = vadd.f32 0.0, %v1908
        %v1910 = vpop.f32.mrb[0].mxu0
        %v1911 = vadd.f32 0.0, %v1910
        %1912 = vmatprep.mubr.f32.mxu0 0.0
        %1913 = vmatmul.mubr.f32.gmra.mrb[0].mxu0 %v1666
        %v1914 = vpop.f32.mrb[0].mxu0
        %v1915 = vadd.f32 0.0, %v1914
        %v1916 = vpop.f32.mrb[0].mxu0
        %v1917 = vadd.f32 0.0, %v1916
        %1918 = vmatprep.mubr.f32.mxu0 0.0
        %1919 = vmatmul.mubr.f32.gmra.mrb[0].mxu0 %v1667
        %v1920 = vpop.f32.mrb[0].mxu0
        %v1921 = vadd.f32 0.0, %v1920
        %v1922 = vpop.f32.mrb[0].mxu0
        %v1923 = vadd.f32 0.0, %v1922
        %1924 = vdwg.mxu0
        %1925 = vmatprep.subr.mxu0 %v1097
        %1926 = vmatpush1.msra.mxu0 %v1096
        %1927 = vmatprep.subr.mxu0 %v1102
        %1928 = vmatpush1.msra.mxu0 %v1101
        %1929 = vmatprep.subr.mxu0 %v1107
        %1930 = vmatpush1.msra.mxu0 %v1106
        %1931 = vmatprep.subr.mxu0 %v1112
        %1932 = vmatpush1.msra.mxu0 %v1111
        %1933 = vmatprep.subr.mxu0 %v1117
        %1934 = vmatpush1.msra.mxu0 %v1116
        %1935 = vmatprep.subr.mxu0 %v1122
        %1936 = vmatpush1.msra.mxu0 %v1121
        %1937 = vmatprep.subr.mxu0 %v1127
        %1938 = vmatpush1.msra.mxu0 %v1126
        %1939 = vmatprep.subr.mxu0 %v1132
        %1940 = vmatpush1.msra.mxu0 %v1131
        %1941 = vmatprep.subr.mxu0 %v1137
        %1942 = vmatpush1.msra.mxu0 %v1136
        %1943 = vmatprep.subr.mxu0 %v1142
        %1944 = vmatpush1.msra.mxu0 %v1141
        %1945 = vmatprep.subr.mxu0 %v1147
        %1946 = vmatpush1.msra.mxu0 %v1146
        %1947 = vmatprep.subr.mxu0 %v1152
        %1948 = vmatpush1.msra.mxu0 %v1151
        %1949 = vmatprep.subr.mxu0 %v1157
        %1950 = vmatpush1.msra.mxu0 %v1156
        %1951 = vmatprep.subr.mxu0 %v1162
        %1952 = vmatpush1.msra.mxu0 %v1161
        %1953 = vmatprep.subr.mxu0 %v1167
        %1954 = vmatpush1.msra.mxu0 %v1166
        %1955 = vmatprep.subr.mxu0 %v1172
        %1956 = vmatpush1.msra.mxu0 %v1171
        %1957 = vmatprep.subr.mxu0 0.0
        %1958 = vmatpush1.msra.mxu0 0.0
        %1959 = vmatprep.subr.mxu0 0.0
        %1960 = vmatpush1.msra.mxu0 0.0
        %1961 = vmatprep.subr.mxu0 0.0
        %1962 = vmatpush1.msra.mxu0 0.0
        %1963 = vmatprep.subr.mxu0 0.0
        %1964 = vmatpush1.msra.mxu0 0.0
        %1965 = vmatprep.subr.mxu0 0.0
        %1966 = vmatpush1.msra.mxu0 0.0
        %1967 = vmatprep.subr.mxu0 0.0
        %1968 = vmatpush1.msra.mxu0 0.0
        %1969 = vmatprep.subr.mxu0 0.0
        %1970 = vmatpush1.msra.mxu0 0.0
        %1971 = vmatprep.subr.mxu0 0.0
        %1972 = vmatpush1.msra.mxu0 0.0
        %1973 = vmatprep.subr.mxu0 0.0
        %1974 = vmatpush1.msra.mxu0 0.0
        %1975 = vmatprep.subr.mxu0 0.0
        %1976 = vmatpush1.msra.mxu0 0.0
        %1977 = vmatprep.subr.mxu0 0.0
        %1978 = vmatpush1.msra.mxu0 0.0
        %1979 = vmatprep.subr.mxu0 0.0
        %1980 = vmatpush1.msra.mxu0 0.0
        %1981 = vmatprep.subr.mxu0 0.0
        %1982 = vmatpush1.msra.mxu0 0.0
        %1983 = vmatprep.subr.mxu0 0.0
        %1984 = vmatpush1.msra.mxu0 0.0
        %1985 = vmatprep.subr.mxu0 0.0
        %1986 = vmatpush1.msra.mxu0 0.0
        %1987 = vmatprep.subr.mxu0 0.0
        %1988 = vmatpush1.msra.mxu0 0.0
        %1989 = vmatprep.mubr.f32.mxu0 0.0
        %1990 = vmatmul.mubr.f32.gmra.mrb[0].mxu0 %v1636
        %v1991 = vpop.f32.mrb[0].mxu0
        %v1992 = vadd.f32 0.0, %v1991
        %v1993 = vpop.f32.mrb[0].mxu0
        %v1994 = vadd.f32 0.0, %v1993
        %1995 = vmatprep.mubr.f32.mxu0 0.0
        %1996 = vmatmul.mubr.f32.gmra.mrb[0].mxu0 %v1637
        %v1997 = vpop.f32.mrb[0].mxu0
        %v1998 = vadd.f32 0.0, %v1997
        %v1999 = vpop.f32.mrb[0].mxu0
        %v2000 = vadd.f32 0.0, %v1999
        %2001 = vmatprep.mubr.f32.mxu0 0.0
        %2002 = vmatmul.mubr.f32.gmra.mrb[0].mxu0 %v1638
        %v2003 = vpop.f32.mrb[0].mxu0
        %v2004 = vadd.f32 0.0, %v2003
        %v2005 = vpop.f32.mrb[0].mxu0
        %v2006 = vadd.f32 0.0, %v2005
        %2007 = vmatprep.mubr.f32.mxu0 0.0
        %2008 = vmatmul.mubr.f32.gmra.mrb[0].mxu0 %v1639
        %v2009 = vpop.f32.mrb[0].mxu0
        %v2010 = vadd.f32 0.0, %v2009
        %v2011 = vpop.f32.mrb[0].mxu0
        %v2012 = vadd.f32 0.0, %v2011
        %2013 = vmatprep.mubr.f32.mxu0 0.0
        %2014 = vmatmul.mubr.f32.gmra.mrb[0].mxu0 %v1640
        %v2015 = vpop.f32.mrb[0].mxu0
        %v2016 = vadd.f32 0.0, %v2015
        %v2017 = vpop.f32.mrb[0].mxu0
        %v2018 = vadd.f32 0.0, %v2017
        %2019 = vmatprep.mubr.f32.mxu0 0.0
        %2020 = vmatmul.mubr.f32.gmra.mrb[0].mxu0 %v1641
        %v2021 = vpop.f32.mrb[0].mxu0
        %v2022 = vadd.f32 0.0, %v2021
        %v2023 = vpop.f32.mrb[0].mxu0
        %v2024 = vadd.f32 0.0, %v2023
        %2025 = vmatprep.mubr.f32.mxu0 0.0
        %2026 = vmatmul.mubr.f32.gmra.mrb[0].mxu0 %v1642
        %v2027 = vpop.f32.mrb[0].mxu0
        %v2028 = vadd.f32 0.0, %v2027
        %v2029 = vpop.f32.mrb[0].mxu0
        %v2030 = vadd.f32 0.0, %v2029
        %2031 = vmatprep.mubr.f32.mxu0 0.0
        %2032 = vmatmul.mubr.f32.gmra.mrb[0].mxu0 %v1643
        %v2033 = vpop.f32.mrb[0].mxu0
        %v2034 = vadd.f32 0.0, %v2033
        %v2035 = vpop.f32.mrb[0].mxu0
        %v2036 = vadd.f32 0.0, %v2035
        %2037 = vmatprep.mubr.f32.mxu0 0.0
        %2038 = vmatmul.mubr.f32.gmra.mrb[0].mxu0 %v1644
        %v2039 = vpop.f32.mrb[0].mxu0
        %v2040 = vadd.f32 0.0, %v2039
        %v2041 = vpop.f32.mrb[0].mxu0
        %v2042 = vadd.f32 0.0, %v2041
        %2043 = vmatprep.mubr.f32.mxu0 0.0
        %2044 = vmatmul.mubr.f32.gmra.mrb[0].mxu0 %v1645
        %v2045 = vpop.f32.mrb[0].mxu0
        %v2046 = vadd.f32 0.0, %v2045
        %v2047 = vpop.f32.mrb[0].mxu0
        %v2048 = vadd.f32 0.0, %v2047
        %2049 = vmatprep.mubr.f32.mxu0 0.0
        %2050 = vmatmul.mubr.f32.gmra.mrb[0].mxu0 %v1646
        %v2051 = vpop.f32.mrb[0].mxu0
        %v2052 = vadd.f32 0.0, %v2051
        %v2053 = vpop.f32.mrb[0].mxu0
        %v2054 = vadd.f32 0.0, %v2053
        %2055 = vmatprep.mubr.f32.mxu0 0.0
        %2056 = vmatmul.mubr.f32.gmra.mrb[0].mxu0 %v1647
        %v2057 = vpop.f32.mrb[0].mxu0
        %v2058 = vadd.f32 0.0, %v2057
        %v2059 = vpop.f32.mrb[0].mxu0
        %v2060 = vadd.f32 0.0, %v2059
        %2061 = vmatprep.mubr.f32.mxu0 0.0
        %2062 = vmatmul.mubr.f32.gmra.mrb[0].mxu0 %v1648
        %v2063 = vpop.f32.mrb[0].mxu0
        %v2064 = vadd.f32 0.0, %v2063
        %v2065 = vpop.f32.mrb[0].mxu0
        %v2066 = vadd.f32 0.0, %v2065
        %2067 = vmatprep.mubr.f32.mxu0 0.0
        %2068 = vmatmul.mubr.f32.gmra.mrb[0].mxu0 %v1649
        %v2069 = vpop.f32.mrb[0].mxu0
        %v2070 = vadd.f32 0.0, %v2069
        %v2071 = vpop.f32.mrb[0].mxu0
        %v2072 = vadd.f32 0.0, %v2071
        %2073 = vmatprep.mubr.f32.mxu0 0.0
        %2074 = vmatmul.mubr.f32.gmra.mrb[0].mxu0 %v1650
        %v2075 = vpop.f32.mrb[0].mxu0
        %v2076 = vadd.f32 0.0, %v2075
        %v2077 = vpop.f32.mrb[0].mxu0
        %v2078 = vadd.f32 0.0, %v2077
        %2079 = vmatprep.mubr.f32.mxu0 0.0
        %2080 = vmatmul.mubr.f32.gmra.mrb[0].mxu0 %v1651
        %v2081 = vpop.f32.mrb[0].mxu0
        %v2082 = vadd.f32 0.0, %v2081
        %v2083 = vpop.f32.mrb[0].mxu0
        %v2084 = vadd.f32 0.0, %v2083
        %2085 = vmatprep.mubr.f32.mxu0 0.0
        %2086 = vmatmul.mubr.f32.gmra.mrb[0].mxu0 %v1652
        %v2087 = vpop.f32.mrb[0].mxu0
        %v2088 = vadd.f32 0.0, %v2087
        %v2089 = vpop.f32.mrb[0].mxu0
        %v2090 = vadd.f32 0.0, %v2089
        %2091 = vmatprep.mubr.f32.mxu0 0.0
        %2092 = vmatmul.mubr.f32.gmra.mrb[0].mxu0 %v1653
        %v2093 = vpop.f32.mrb[0].mxu0
        %v2094 = vadd.f32 0.0, %v2093
        %v2095 = vpop.f32.mrb[0].mxu0
        %v2096 = vadd.f32 0.0, %v2095
        %2097 = vmatprep.mubr.f32.mxu0 0.0
        %2098 = vmatmul.mubr.f32.gmra.mrb[0].mxu0 %v1654
        %v2099 = vpop.f32.mrb[0].mxu0
        %v2100 = vadd.f32 0.0, %v2099
        %v2101 = vpop.f32.mrb[0].mxu0
        %v2102 = vadd.f32 0.0, %v2101
        %2103 = vmatprep.mubr.f32.mxu0 0.0
        %2104 = vmatmul.mubr.f32.gmra.mrb[0].mxu0 %v1655
        %v2105 = vpop.f32.mrb[0].mxu0
        %v2106 = vadd.f32 0.0, %v2105
        %v2107 = vpop.f32.mrb[0].mxu0
        %v2108 = vadd.f32 0.0, %v2107
        %2109 = vmatprep.mubr.f32.mxu0 0.0
        %2110 = vmatmul.mubr.f32.gmra.mrb[0].mxu0 %v1656
        %v2111 = vpop.f32.mrb[0].mxu0
        %v2112 = vadd.f32 0.0, %v2111
        %v2113 = vpop.f32.mrb[0].mxu0
        %v2114 = vadd.f32 0.0, %v2113
        %2115 = vmatprep.mubr.f32.mxu0 0.0
        %2116 = vmatmul.mubr.f32.gmra.mrb[0].mxu0 %v1657
        %v2117 = vpop.f32.mrb[0].mxu0
        %v2118 = vadd.f32 0.0, %v2117
        %v2119 = vpop.f32.mrb[0].mxu0
        %v2120 = vadd.f32 0.0, %v2119
        %2121 = vmatprep.mubr.f32.mxu0 0.0
        %2122 = vmatmul.mubr.f32.gmra.mrb[0].mxu0 %v1658
        %v2123 = vpop.f32.mrb[0].mxu0
        %v2124 = vadd.f32 0.0, %v2123
        %v2125 = vpop.f32.mrb[0].mxu0
        %v2126 = vadd.f32 0.0, %v2125
        %2127 = vmatprep.mubr.f32.mxu0 0.0
        %2128 = vmatmul.mubr.f32.gmra.mrb[0].mxu0 %v1659
        %v2129 = vpop.f32.mrb[0].mxu0
        %v2130 = vadd.f32 0.0, %v2129
        %v2131 = vpop.f32.mrb[0].mxu0
        %v2132 = vadd.f32 0.0, %v2131
        %2133 = vmatprep.mubr.f32.mxu0 0.0
        %2134 = vmatmul.mubr.f32.gmra.mrb[0].mxu0 %v1660
        %v2135 = vpop.f32.mrb[0].mxu0
        %v2136 = vadd.f32 0.0, %v2135
        %v2137 = vpop.f32.mrb[0].mxu0
        %v2138 = vadd.f32 0.0, %v2137
        %2139 = vmatprep.mubr.f32.mxu0 0.0
        %2140 = vmatmul.mubr.f32.gmra.mrb[0].mxu0 %v1661
        %v2141 = vpop.f32.mrb[0].mxu0
        %v2142 = vadd.f32 0.0, %v2141
        %v2143 = vpop.f32.mrb[0].mxu0
        %v2144 = vadd.f32 0.0, %v2143
        %2145 = vmatprep.mubr.f32.mxu0 0.0
        %2146 = vmatmul.mubr.f32.gmra.mrb[0].mxu0 %v1662
        %v2147 = vpop.f32.mrb[0].mxu0
        %v2148 = vadd.f32 0.0, %v2147
        %v2149 = vpop.f32.mrb[0].mxu0
        %v2150 = vadd.f32 0.0, %v2149
        %2151 = vmatprep.mubr.f32.mxu0 0.0
        %2152 = vmatmul.mubr.f32.gmra.mrb[0].mxu0 %v1663
        %v2153 = vpop.f32.mrb[0].mxu0
        %v2154 = vadd.f32 0.0, %v2153
        %v2155 = vpop.f32.mrb[0].mxu0
        %v2156 = vadd.f32 0.0, %v2155
        %2157 = vmatprep.mubr.f32.mxu0 0.0
        %2158 = vmatmul.mubr.f32.gmra.mrb[0].mxu0 %v1664
        %v2159 = vpop.f32.mrb[0].mxu0
        %v2160 = vadd.f32 0.0, %v2159
        %v2161 = vpop.f32.mrb[0].mxu0
        %v2162 = vadd.f32 0.0, %v2161
        %2163 = vmatprep.mubr.f32.mxu0 0.0
        %2164 = vmatmul.mubr.f32.gmra.mrb[0].mxu0 %v1665
        %v2165 = vpop.f32.mrb[0].mxu0
        %v2166 = vadd.f32 0.0, %v2165
        %v2167 = vpop.f32.mrb[0].mxu0
        %v2168 = vadd.f32 0.0, %v2167
        %2169 = vmatprep.mubr.f32.mxu0 0.0
        %2170 = vmatmul.mubr.f32.gmra.mrb[0].mxu0 %v1666
        %v2171 = vpop.f32.mrb[0].mxu0
        %v2172 = vadd.f32 0.0, %v2171
        %v2173 = vpop.f32.mrb[0].mxu0
        %v2174 = vadd.f32 0.0, %v2173
        %2175 = vmatprep.mubr.f32.mxu0 0.0
        %2176 = vmatmul.mubr.f32.gmra.mrb[0].mxu0 %v1667
        %v2177 = vpop.f32.mrb[0].mxu0
        %v2178 = vadd.f32 0.0, %v2177
        %v2179 = vpop.f32.mrb[0].mxu0
        %v2180 = vadd.f32 0.0, %v2179
        %2181 = vdwg.mxu0
        %2182 = vmatprep.subr.mxu0 0.0
        %2183 = vmatpush1.msra.mxu0 %v1098
        %2184 = vmatprep.subr.mxu0 0.0
        %2185 = vmatpush1.msra.mxu0 %v1103
        %2186 = vmatprep.subr.mxu0 0.0
        %2187 = vmatpush1.msra.mxu0 %v1108
        %2188 = vmatprep.subr.mxu0 0.0
        %2189 = vmatpush1.msra.mxu0 %v1113
        %2190 = vmatprep.subr.mxu0 0.0
        %2191 = vmatpush1.msra.mxu0 %v1118
        %2192 = vmatprep.subr.mxu0 0.0
        %2193 = vmatpush1.msra.mxu0 %v1123
        %2194 = vmatprep.subr.mxu0 0.0
        %2195 = vmatpush1.msra.mxu0 %v1128
        %2196 = vmatprep.subr.mxu0 0.0
        %2197 = vmatpush1.msra.mxu0 %v1133
        %2198 = vmatprep.subr.mxu0 0.0
        %2199 = vmatpush1.msra.mxu0 %v1138
        %2200 = vmatprep.subr.mxu0 0.0
        %2201 = vmatpush1.msra.mxu0 %v1143
        %2202 = vmatprep.subr.mxu0 0.0
        %2203 = vmatpush1.msra.mxu0 %v1148
        %2204 = vmatprep.subr.mxu0 0.0
        %2205 = vmatpush1.msra.mxu0 %v1153
        %2206 = vmatprep.subr.mxu0 0.0
        %2207 = vmatpush1.msra.mxu0 %v1158
        %2208 = vmatprep.subr.mxu0 0.0
        %2209 = vmatpush1.msra.mxu0 %v1163
        %2210 = vmatprep.subr.mxu0 0.0
        %2211 = vmatpush1.msra.mxu0 %v1168
        %2212 = vmatprep.subr.mxu0 0.0
        %2213 = vmatpush1.msra.mxu0 %v1173
        %2214 = vmatprep.subr.mxu0 0.0
        %2215 = vmatpush1.msra.mxu0 0.0
        %2216 = vmatprep.subr.mxu0 0.0
        %2217 = vmatpush1.msra.mxu0 0.0
        %2218 = vmatprep.subr.mxu0 0.0
        %2219 = vmatpush1.msra.mxu0 0.0
        %2220 = vmatprep.subr.mxu0 0.0
        %2221 = vmatpush1.msra.mxu0 0.0
        %2222 = vmatprep.subr.mxu0 0.0
        %2223 = vmatpush1.msra.mxu0 0.0
        %2224 = vmatprep.subr.mxu0 0.0
        %2225 = vmatpush1.msra.mxu0 0.0
        %2226 = vmatprep.subr.mxu0 0.0
        %2227 = vmatpush1.msra.mxu0 0.0
        %2228 = vmatprep.subr.mxu0 0.0
        %2229 = vmatpush1.msra.mxu0 0.0
        %2230 = vmatprep.subr.mxu0 0.0
        %2231 = vmatpush1.msra.mxu0 0.0
        %2232 = vmatprep.subr.mxu0 0.0
        %2233 = vmatpush1.msra.mxu0 0.0
        %2234 = vmatprep.subr.mxu0 0.0
        %2235 = vmatpush1.msra.mxu0 0.0
        %2236 = vmatprep.subr.mxu0 0.0
        %2237 = vmatpush1.msra.mxu0 0.0
        %2238 = vmatprep.subr.mxu0 0.0
        %2239 = vmatpush1.msra.mxu0 0.0
        %2240 = vmatprep.subr.mxu0 0.0
        %2241 = vmatpush1.msra.mxu0 0.0
        %2242 = vmatprep.subr.mxu0 0.0
        %2243 = vmatpush1.msra.mxu0 0.0
        %2244 = vmatprep.subr.mxu0 0.0
        %2245 = vmatpush1.msra.mxu0 0.0
        %2246 = vmatprep.mubr.f32.mxu0 0.0
        %2247 = vmatmul.mubr.f32.gmra.mrb[0].mxu0 %v1636
        %v2248 = vpop.f32.mrb[0].mxu0
        %v2249 = vadd.f32 0.0, %v2248
        %v2250 = vpop.f32.mrb[0].mxu0
        %2251 = vmatprep.mubr.f32.mxu0 0.0
        %2252 = vmatmul.mubr.f32.gmra.mrb[0].mxu0 %v1637
        %v2253 = vpop.f32.mrb[0].mxu0
        %v2254 = vadd.f32 0.0, %v2253
        %v2255 = vpop.f32.mrb[0].mxu0
        %2256 = vmatprep.mubr.f32.mxu0 0.0
        %2257 = vmatmul.mubr.f32.gmra.mrb[0].mxu0 %v1638
        %v2258 = vpop.f32.mrb[0].mxu0
        %v2259 = vadd.f32 0.0, %v2258
        %v2260 = vpop.f32.mrb[0].mxu0
        %2261 = vmatprep.mubr.f32.mxu0 0.0
        %2262 = vmatmul.mubr.f32.gmra.mrb[0].mxu0 %v1639
        %v2263 = vpop.f32.mrb[0].mxu0
        %v2264 = vadd.f32 0.0, %v2263
        %v2265 = vpop.f32.mrb[0].mxu0
        %2266 = vmatprep.mubr.f32.mxu0 0.0
        %2267 = vmatmul.mubr.f32.gmra.mrb[0].mxu0 %v1640
        %v2268 = vpop.f32.mrb[0].mxu0
        %v2269 = vadd.f32 0.0, %v2268
        %v2270 = vpop.f32.mrb[0].mxu0
        %2271 = vmatprep.mubr.f32.mxu0 0.0
        %2272 = vmatmul.mubr.f32.gmra.mrb[0].mxu0 %v1641
        %v2273 = vpop.f32.mrb[0].mxu0
        %v2274 = vadd.f32 0.0, %v2273
        %v2275 = vpop.f32.mrb[0].mxu0
        %2276 = vmatprep.mubr.f32.mxu0 0.0
        %2277 = vmatmul.mubr.f32.gmra.mrb[0].mxu0 %v1642
        %v2278 = vpop.f32.mrb[0].mxu0
        %v2279 = vadd.f32 0.0, %v2278
        %v2280 = vpop.f32.mrb[0].mxu0
        %2281 = vmatprep.mubr.f32.mxu0 0.0
        %2282 = vmatmul.mubr.f32.gmra.mrb[0].mxu0 %v1643
        %v2283 = vpop.f32.mrb[0].mxu0
        %v2284 = vadd.f32 0.0, %v2283
        %v2285 = vpop.f32.mrb[0].mxu0
        %2286 = vmatprep.mubr.f32.mxu0 0.0
        %2287 = vmatmul.mubr.f32.gmra.mrb[0].mxu0 %v1644
        %v2288 = vpop.f32.mrb[0].mxu0
        %v2289 = vadd.f32 0.0, %v2288
        %v2290 = vpop.f32.mrb[0].mxu0
        %2291 = vmatprep.mubr.f32.mxu0 0.0
        %2292 = vmatmul.mubr.f32.gmra.mrb[0].mxu0 %v1645
        %v2293 = vpop.f32.mrb[0].mxu0
        %v2294 = vadd.f32 0.0, %v2293
        %v2295 = vpop.f32.mrb[0].mxu0
        %2296 = vmatprep.mubr.f32.mxu0 0.0
        %2297 = vmatmul.mubr.f32.gmra.mrb[0].mxu0 %v1646
        %v2298 = vpop.f32.mrb[0].mxu0
        %v2299 = vadd.f32 0.0, %v2298
        %v2300 = vpop.f32.mrb[0].mxu0
        %2301 = vmatprep.mubr.f32.mxu0 0.0
        %2302 = vmatmul.mubr.f32.gmra.mrb[0].mxu0 %v1647
        %v2303 = vpop.f32.mrb[0].mxu0
        %v2304 = vadd.f32 0.0, %v2303
        %v2305 = vpop.f32.mrb[0].mxu0
        %2306 = vmatprep.mubr.f32.mxu0 0.0
        %2307 = vmatmul.mubr.f32.gmra.mrb[0].mxu0 %v1648
        %v2308 = vpop.f32.mrb[0].mxu0
        %v2309 = vadd.f32 0.0, %v2308
        %v2310 = vpop.f32.mrb[0].mxu0
        %2311 = vmatprep.mubr.f32.mxu0 0.0
        %2312 = vmatmul.mubr.f32.gmra.mrb[0].mxu0 %v1649
        %v2313 = vpop.f32.mrb[0].mxu0
        %v2314 = vadd.f32 0.0, %v2313
        %v2315 = vpop.f32.mrb[0].mxu0
        %2316 = vmatprep.mubr.f32.mxu0 0.0
        %2317 = vmatmul.mubr.f32.gmra.mrb[0].mxu0 %v1650
        %v2318 = vpop.f32.mrb[0].mxu0
        %v2319 = vadd.f32 0.0, %v2318
        %v2320 = vpop.f32.mrb[0].mxu0
        %2321 = vmatprep.mubr.f32.mxu0 0.0
        %2322 = vmatmul.mubr.f32.gmra.mrb[0].mxu0 %v1651
        %v2323 = vpop.f32.mrb[0].mxu0
        %v2324 = vadd.f32 0.0, %v2323
        %v2325 = vpop.f32.mrb[0].mxu0
        %2326 = vmatprep.mubr.f32.mxu0 0.0
        %2327 = vmatmul.mubr.f32.gmra.mrb[0].mxu0 %v1652
        %v2328 = vpop.f32.mrb[0].mxu0
        %v2329 = vadd.f32 0.0, %v2328
        %v2330 = vpop.f32.mrb[0].mxu0
        %2331 = vmatprep.mubr.f32.mxu0 0.0
        %2332 = vmatmul.mubr.f32.gmra.mrb[0].mxu0 %v1653
        %v2333 = vpop.f32.mrb[0].mxu0
        %v2334 = vadd.f32 0.0, %v2333
        %v2335 = vpop.f32.mrb[0].mxu0
        %2336 = vmatprep.mubr.f32.mxu0 0.0
        %2337 = vmatmul.mubr.f32.gmra.mrb[0].mxu0 %v1654
        %v2338 = vpop.f32.mrb[0].mxu0
        %v2339 = vadd.f32 0.0, %v2338
        %v2340 = vpop.f32.mrb[0].mxu0
        %2341 = vmatprep.mubr.f32.mxu0 0.0
        %2342 = vmatmul.mubr.f32.gmra.mrb[0].mxu0 %v1655
        %v2343 = vpop.f32.mrb[0].mxu0
        %v2344 = vadd.f32 0.0, %v2343
        %v2345 = vpop.f32.mrb[0].mxu0
        %2346 = vmatprep.mubr.f32.mxu0 0.0
        %2347 = vmatmul.mubr.f32.gmra.mrb[0].mxu0 %v1656
        %v2348 = vpop.f32.mrb[0].mxu0
        %v2349 = vadd.f32 0.0, %v2348
        %v2350 = vpop.f32.mrb[0].mxu0
        %2351 = vmatprep.mubr.f32.mxu0 0.0
        %2352 = vmatmul.mubr.f32.gmra.mrb[0].mxu0 %v1657
        %v2353 = vpop.f32.mrb[0].mxu0
        %v2354 = vadd.f32 0.0, %v2353
        %v2355 = vpop.f32.mrb[0].mxu0
        %2356 = vmatprep.mubr.f32.mxu0 0.0
        %2357 = vmatmul.mubr.f32.gmra.mrb[0].mxu0 %v1658
        %v2358 = vpop.f32.mrb[0].mxu0
        %v2359 = vadd.f32 0.0, %v2358
        %v2360 = vpop.f32.mrb[0].mxu0
        %2361 = vmatprep.mubr.f32.mxu0 0.0
        %2362 = vmatmul.mubr.f32.gmra.mrb[0].mxu0 %v1659
        %v2363 = vpop.f32.mrb[0].mxu0
        %v2364 = vadd.f32 0.0, %v2363
        %v2365 = vpop.f32.mrb[0].mxu0
        %2366 = vmatprep.mubr.f32.mxu0 0.0
        %2367 = vmatmul.mubr.f32.gmra.mrb[0].mxu0 %v1660
        %v2368 = vpop.f32.mrb[0].mxu0
        %v2369 = vadd.f32 0.0, %v2368
        %v2370 = vpop.f32.mrb[0].mxu0
        %2371 = vmatprep.mubr.f32.mxu0 0.0
        %2372 = vmatmul.mubr.f32.gmra.mrb[0].mxu0 %v1661
        %v2373 = vpop.f32.mrb[0].mxu0
        %v2374 = vadd.f32 0.0, %v2373
        %v2375 = vpop.f32.mrb[0].mxu0
        %2376 = vmatprep.mubr.f32.mxu0 0.0
        %2377 = vmatmul.mubr.f32.gmra.mrb[0].mxu0 %v1662
        %v2378 = vpop.f32.mrb[0].mxu0
        %v2379 = vadd.f32 0.0, %v2378
        %v2380 = vpop.f32.mrb[0].mxu0
        %2381 = vmatprep.mubr.f32.mxu0 0.0
        %2382 = vmatmul.mubr.f32.gmra.mrb[0].mxu0 %v1663
        %v2383 = vpop.f32.mrb[0].mxu0
        %v2384 = vadd.f32 0.0, %v2383
        %v2385 = vpop.f32.mrb[0].mxu0
        %2386 = vmatprep.mubr.f32.mxu0 0.0
        %2387 = vmatmul.mubr.f32.gmra.mrb[0].mxu0 %v1664
        %v2388 = vpop.f32.mrb[0].mxu0
        %v2389 = vadd.f32 0.0, %v2388
        %v2390 = vpop.f32.mrb[0].mxu0
        %2391 = vmatprep.mubr.f32.mxu0 0.0
        %2392 = vmatmul.mubr.f32.gmra.mrb[0].mxu0 %v1665
        %v2393 = vpop.f32.mrb[0].mxu0
        %v2394 = vadd.f32 0.0, %v2393
        %v2395 = vpop.f32.mrb[0].mxu0
        %2396 = vmatprep.mubr.f32.mxu0 0.0
        %2397 = vmatmul.mubr.f32.gmra.mrb[0].mxu0 %v1666
        %v2398 = vpop.f32.mrb[0].mxu0
        %v2399 = vadd.f32 0.0, %v2398
        %v2400 = vpop.f32.mrb[0].mxu0
        %2401 = vmatprep.mubr.f32.mxu0 0.0
        %2402 = vmatmul.mubr.f32.gmra.mrb[0].mxu0 %v1667
        %v2403 = vpop.f32.mrb[0].mxu0
        %v2404 = vadd.f32 0.0, %v2403
        %v2405 = vpop.f32.mrb[0].mxu0
        %2406 = vdwg.mxu0
        %v2407 = vlaneseq
        %v2408 = vshrl.u32 %v2407, 7
        %v2409 = vsub.s32 0, %v2408
        %v2410 = vrot.slane %v1474, %v2409
        %v2411 = vlaneseq
        %v2412 = vshrl.u32 %v2411, 7
        %v2413 = vsub.s32 0, %v2412
        %v2414 = vrot.slane %v1476, %v2413
        %v2415 = vlaneseq
        %v2416 = vshrl.u32 %v2415, 7
        %v2417 = vsub.s32 0, %v2416
        %v2418 = vrot.slane %v1551, %v2417
        %v2419 = vlaneseq
        %v2420 = vshrl.u32 %v2419, 7
        %v2421 = vsub.s32 0, %v2420
        %v2422 = vrot.slane %v1553, %v2421
        %v2423 = vlaneseq
        %v2424 = vshrl.u32 %v2423, 7
        %v2425 = vsub.s32 0, %v2424
        %v2426 = vrot.slane %v1628, %v2425
        %v2427 = vmul.f32 %v1735, %v2410
        %v2428 = vmul.f32 %v1737, %v2414
        %v2429 = vmul.f32 %v1992, %v2418
        %v2430 = vmul.f32 %v1994, %v2422
        %v2431 = vmul.f32 %v2249, %v2426
        %v2432 = vmul.f32 %v1741, %v2410
        %v2433 = vmul.f32 %v1743, %v2414
        %v2434 = vmul.f32 %v1998, %v2418
        %v2435 = vmul.f32 %v2000, %v2422
        %v2436 = vmul.f32 %v2254, %v2426
        %v2437 = vadd.f32 %v2427, 0.0
        %v2438 = vadd.f32 %v2428, 0.0
        %v2439 = vadd.f32 %v2429, 0.0
        %v2440 = vadd.f32 %v2430, 0.0
        %v2441 = vadd.f32 %v2431, 0.0
        %v2442 = vadd.f32 %v2432, 0.0
        %v2443 = vadd.f32 %v2433, 0.0
        %v2444 = vadd.f32 %v2434, 0.0
        %v2445 = vadd.f32 %v2435, 0.0
        %v2446 = vadd.f32 %v2436, 0.0
        %v2447 = vlaneseq
        %v2448 = vshrl.u32 %v2447, 7
        %v2449 = vsub.s32 1, %v2448
        %v2450 = vrot.slane %v1474, %v2449
        %v2451 = vlaneseq
        %v2452 = vshrl.u32 %v2451, 7
        %v2453 = vsub.s32 1, %v2452
        %v2454 = vrot.slane %v1476, %v2453
        %v2455 = vlaneseq
        %v2456 = vshrl.u32 %v2455, 7
        %v2457 = vsub.s32 1, %v2456
        %v2458 = vrot.slane %v1551, %v2457
        %v2459 = vlaneseq
        %v2460 = vshrl.u32 %v2459, 7
        %v2461 = vsub.s32 1, %v2460
        %v2462 = vrot.slane %v1553, %v2461
        %v2463 = vlaneseq
        %v2464 = vshrl.u32 %v2463, 7
        %v2465 = vsub.s32 1, %v2464
        %v2466 = vrot.slane %v1628, %v2465
        %v2467 = vmul.f32 %v1747, %v2450
        %v2468 = vmul.f32 %v1749, %v2454
        %v2469 = vmul.f32 %v2004, %v2458
        %v2470 = vmul.f32 %v2006, %v2462
        %v2471 = vmul.f32 %v2259, %v2466
        %v2472 = vmul.f32 %v1753, %v2450
        %v2473 = vmul.f32 %v1755, %v2454
        %v2474 = vmul.f32 %v2010, %v2458
        %v2475 = vmul.f32 %v2012, %v2462
        %v2476 = vmul.f32 %v2264, %v2466
        %v2477 = vadd.f32 %v2437, %v2467
        %v2478 = vadd.f32 %v2438, %v2468
        %v2479 = vadd.f32 %v2439, %v2469
        %v2480 = vadd.f32 %v2440, %v2470
        %v2481 = vadd.f32 %v2441, %v2471
        %v2482 = vadd.f32 %v2442, %v2472
        %v2483 = vadd.f32 %v2443, %v2473
        %v2484 = vadd.f32 %v2444, %v2474
        %v2485 = vadd.f32 %v2445, %v2475
        %v2486 = vadd.f32 %v2446, %v2476
        %v2487 = vlaneseq
        %v2488 = vshrl.u32 %v2487, 7
        %v2489 = vsub.s32 2, %v2488
        %v2490 = vrot.slane %v1474, %v2489
        %v2491 = vlaneseq
        %v2492 = vshrl.u32 %v2491, 7
        %v2493 = vsub.s32 2, %v2492
        %v2494 = vrot.slane %v1476, %v2493
        %v2495 = vlaneseq
        %v2496 = vshrl.u32 %v2495, 7
        %v2497 = vsub.s32 2, %v2496
        %v2498 = vrot.slane %v1551, %v2497
        %v2499 = vlaneseq
        %v2500 = vshrl.u32 %v2499, 7
        %v2501 = vsub.s32 2, %v2500
        %v2502 = vrot.slane %v1553, %v2501
        %v2503 = vlaneseq
        %v2504 = vshrl.u32 %v2503, 7
        %v2505 = vsub.s32 2, %v2504
        %v2506 = vrot.slane %v1628, %v2505
        %v2507 = vmul.f32 %v1759, %v2490
        %v2508 = vmul.f32 %v1761, %v2494
        %v2509 = vmul.f32 %v2016, %v2498
        %v2510 = vmul.f32 %v2018, %v2502
        %v2511 = vmul.f32 %v2269, %v2506
        %v2512 = vmul.f32 %v1765, %v2490
        %v2513 = vmul.f32 %v1767, %v2494
        %v2514 = vmul.f32 %v2022, %v2498
        %v2515 = vmul.f32 %v2024, %v2502
        %v2516 = vmul.f32 %v2274, %v2506
        %v2517 = vadd.f32 %v2477, %v2507
        %v2518 = vadd.f32 %v2478, %v2508
        %v2519 = vadd.f32 %v2479, %v2509
        %v2520 = vadd.f32 %v2480, %v2510
        %v2521 = vadd.f32 %v2481, %v2511
        %v2522 = vadd.f32 %v2482, %v2512
        %v2523 = vadd.f32 %v2483, %v2513
        %v2524 = vadd.f32 %v2484, %v2514
        %v2525 = vadd.f32 %v2485, %v2515
        %v2526 = vadd.f32 %v2486, %v2516
        %v2527 = vlaneseq
        %v2528 = vshrl.u32 %v2527, 7
        %v2529 = vsub.s32 3, %v2528
        %v2530 = vrot.slane %v1474, %v2529
        %v2531 = vlaneseq
        %v2532 = vshrl.u32 %v2531, 7
        %v2533 = vsub.s32 3, %v2532
        %v2534 = vrot.slane %v1476, %v2533
        %v2535 = vlaneseq
        %v2536 = vshrl.u32 %v2535, 7
        %v2537 = vsub.s32 3, %v2536
        %v2538 = vrot.slane %v1551, %v2537
        %v2539 = vlaneseq
        %v2540 = vshrl.u32 %v2539, 7
        %v2541 = vsub.s32 3, %v2540
        %v2542 = vrot.slane %v1553, %v2541
        %v2543 = vlaneseq
        %v2544 = vshrl.u32 %v2543, 7
        %v2545 = vsub.s32 3, %v2544
        %v2546 = vrot.slane %v1628, %v2545
        %v2547 = vmul.f32 %v1771, %v2530
        %v2548 = vmul.f32 %v1773, %v2534
        %v2549 = vmul.f32 %v2028, %v2538
        %v2550 = vmul.f32 %v2030, %v2542
        %v2551 = vmul.f32 %v2279, %v2546
        %v2552 = vmul.f32 %v1777, %v2530
        %v2553 = vmul.f32 %v1779, %v2534
        %v2554 = vmul.f32 %v2034, %v2538
        %v2555 = vmul.f32 %v2036, %v2542
        %v2556 = vmul.f32 %v2284, %v2546
        %v2557 = vadd.f32 %v2517, %v2547
        %v2558 = vadd.f32 %v2518, %v2548
        %v2559 = vadd.f32 %v2519, %v2549
        %v2560 = vadd.f32 %v2520, %v2550
        %v2561 = vadd.f32 %v2521, %v2551
        %v2562 = vadd.f32 %v2522, %v2552
        %v2563 = vadd.f32 %v2523, %v2553
        %v2564 = vadd.f32 %v2524, %v2554
        %v2565 = vadd.f32 %v2525, %v2555
        %v2566 = vadd.f32 %v2526, %v2556
        %v2567 = vlaneseq
        %v2568 = vshrl.u32 %v2567, 7
        %v2569 = vsub.s32 4, %v2568
        %v2570 = vrot.slane %v1474, %v2569
        %v2571 = vlaneseq
        %v2572 = vshrl.u32 %v2571, 7
        %v2573 = vsub.s32 4, %v2572
        %v2574 = vrot.slane %v1476, %v2573
        %v2575 = vlaneseq
        %v2576 = vshrl.u32 %v2575, 7
        %v2577 = vsub.s32 4, %v2576
        %v2578 = vrot.slane %v1551, %v2577
        %v2579 = vlaneseq
        %v2580 = vshrl.u32 %v2579, 7
        %v2581 = vsub.s32 4, %v2580
        %v2582 = vrot.slane %v1553, %v2581
        %v2583 = vlaneseq
        %v2584 = vshrl.u32 %v2583, 7
        %v2585 = vsub.s32 4, %v2584
        %v2586 = vrot.slane %v1628, %v2585
        %v2587 = vmul.f32 %v1783, %v2570
        %v2588 = vmul.f32 %v1785, %v2574
        %v2589 = vmul.f32 %v2040, %v2578
        %v2590 = vmul.f32 %v2042, %v2582
        %v2591 = vmul.f32 %v2289, %v2586
        %v2592 = vmul.f32 %v1789, %v2570
        %v2593 = vmul.f32 %v1791, %v2574
        %v2594 = vmul.f32 %v2046, %v2578
        %v2595 = vmul.f32 %v2048, %v2582
        %v2596 = vmul.f32 %v2294, %v2586
        %v2597 = vadd.f32 %v2557, %v2587
        %v2598 = vadd.f32 %v2558, %v2588
        %v2599 = vadd.f32 %v2559, %v2589
        %v2600 = vadd.f32 %v2560, %v2590
        %v2601 = vadd.f32 %v2561, %v2591
        %v2602 = vadd.f32 %v2562, %v2592
        %v2603 = vadd.f32 %v2563, %v2593
        %v2604 = vadd.f32 %v2564, %v2594
        %v2605 = vadd.f32 %v2565, %v2595
        %v2606 = vadd.f32 %v2566, %v2596
        %v2607 = vlaneseq
        %v2608 = vshrl.u32 %v2607, 7
        %v2609 = vsub.s32 5, %v2608
        %v2610 = vrot.slane %v1474, %v2609
        %v2611 = vlaneseq
        %v2612 = vshrl.u32 %v2611, 7
        %v2613 = vsub.s32 5, %v2612
        %v2614 = vrot.slane %v1476, %v2613
        %v2615 = vlaneseq
        %v2616 = vshrl.u32 %v2615, 7
        %v2617 = vsub.s32 5, %v2616
        %v2618 = vrot.slane %v1551, %v2617
        %v2619 = vlaneseq
        %v2620 = vshrl.u32 %v2619, 7
        %v2621 = vsub.s32 5, %v2620
        %v2622 = vrot.slane %v1553, %v2621
        %v2623 = vlaneseq
        %v2624 = vshrl.u32 %v2623, 7
        %v2625 = vsub.s32 5, %v2624
        %v2626 = vrot.slane %v1628, %v2625
        %v2627 = vmul.f32 %v1795, %v2610
        %v2628 = vmul.f32 %v1797, %v2614
        %v2629 = vmul.f32 %v2052, %v2618
        %v2630 = vmul.f32 %v2054, %v2622
        %v2631 = vmul.f32 %v2299, %v2626
        %v2632 = vmul.f32 %v1801, %v2610
        %v2633 = vmul.f32 %v1803, %v2614
        %v2634 = vmul.f32 %v2058, %v2618
        %v2635 = vmul.f32 %v2060, %v2622
        %v2636 = vmul.f32 %v2304, %v2626
        %v2637 = vadd.f32 %v2597, %v2627
        %v2638 = vadd.f32 %v2598, %v2628
        %v2639 = vadd.f32 %v2599, %v2629
        %v2640 = vadd.f32 %v2600, %v2630
        %v2641 = vadd.f32 %v2601, %v2631
        %v2642 = vadd.f32 %v2602, %v2632
        %v2643 = vadd.f32 %v2603, %v2633
        %v2644 = vadd.f32 %v2604, %v2634
        %v2645 = vadd.f32 %v2605, %v2635
        %v2646 = vadd.f32 %v2606, %v2636
        %v2647 = vlaneseq
        %v2648 = vshrl.u32 %v2647, 7
        %v2649 = vsub.s32 6, %v2648
        %v2650 = vrot.slane %v1474, %v2649
        %v2651 = vlaneseq
        %v2652 = vshrl.u32 %v2651, 7
        %v2653 = vsub.s32 6, %v2652
        %v2654 = vrot.slane %v1476, %v2653
        %v2655 = vlaneseq
        %v2656 = vshrl.u32 %v2655, 7
        %v2657 = vsub.s32 6, %v2656
        %v2658 = vrot.slane %v1551, %v2657
        %v2659 = vlaneseq
        %v2660 = vshrl.u32 %v2659, 7
        %v2661 = vsub.s32 6, %v2660
        %v2662 = vrot.slane %v1553, %v2661
        %v2663 = vlaneseq
        %v2664 = vshrl.u32 %v2663, 7
        %v2665 = vsub.s32 6, %v2664
        %v2666 = vrot.slane %v1628, %v2665
        %v2667 = vmul.f32 %v1807, %v2650
        %v2668 = vmul.f32 %v1809, %v2654
        %v2669 = vmul.f32 %v2064, %v2658
        %v2670 = vmul.f32 %v2066, %v2662
        %v2671 = vmul.f32 %v2309, %v2666
        %v2672 = vmul.f32 %v1813, %v2650
        %v2673 = vmul.f32 %v1815, %v2654
        %v2674 = vmul.f32 %v2070, %v2658
        %v2675 = vmul.f32 %v2072, %v2662
        %v2676 = vmul.f32 %v2314, %v2666
        %v2677 = vadd.f32 %v2637, %v2667
        %v2678 = vadd.f32 %v2638, %v2668
        %v2679 = vadd.f32 %v2639, %v2669
        %v2680 = vadd.f32 %v2640, %v2670
        %v2681 = vadd.f32 %v2641, %v2671
        %v2682 = vadd.f32 %v2642, %v2672
        %v2683 = vadd.f32 %v2643, %v2673
        %v2684 = vadd.f32 %v2644, %v2674
        %v2685 = vadd.f32 %v2645, %v2675
        %v2686 = vadd.f32 %v2646, %v2676
        %v2687 = vlaneseq
        %v2688 = vshrl.u32 %v2687, 7
        %v2689 = vsub.s32 7, %v2688
        %v2690 = vrot.slane %v1474, %v2689
        %v2691 = vlaneseq
        %v2692 = vshrl.u32 %v2691, 7
        %v2693 = vsub.s32 7, %v2692
        %v2694 = vrot.slane %v1476, %v2693
        %v2695 = vlaneseq
        %v2696 = vshrl.u32 %v2695, 7
        %v2697 = vsub.s32 7, %v2696
        %v2698 = vrot.slane %v1551, %v2697
        %v2699 = vlaneseq
        %v2700 = vshrl.u32 %v2699, 7
        %v2701 = vsub.s32 7, %v2700
        %v2702 = vrot.slane %v1553, %v2701
        %v2703 = vlaneseq
        %v2704 = vshrl.u32 %v2703, 7
        %v2705 = vsub.s32 7, %v2704
        %v2706 = vrot.slane %v1628, %v2705
        %v2707 = vmul.f32 %v1819, %v2690
        %v2708 = vmul.f32 %v1821, %v2694
        %v2709 = vmul.f32 %v2076, %v2698
        %v2710 = vmul.f32 %v2078, %v2702
        %v2711 = vmul.f32 %v2319, %v2706
        %v2712 = vmul.f32 %v1825, %v2690
        %v2713 = vmul.f32 %v1827, %v2694
        %v2714 = vmul.f32 %v2082, %v2698
        %v2715 = vmul.f32 %v2084, %v2702
        %v2716 = vmul.f32 %v2324, %v2706
        %v2717 = vadd.f32 %v2677, %v2707
        %v2718 = vadd.f32 %v2678, %v2708
        %v2719 = vadd.f32 %v2679, %v2709
        %v2720 = vadd.f32 %v2680, %v2710
        %v2721 = vadd.f32 %v2681, %v2711
        %v2722 = vadd.f32 %v2682, %v2712
        %v2723 = vadd.f32 %v2683, %v2713
        %v2724 = vadd.f32 %v2684, %v2714
        %v2725 = vadd.f32 %v2685, %v2715
        %v2726 = vadd.f32 %v2686, %v2716
        %v2727 = vlaneseq
        %v2728 = vshrl.u32 %v2727, 7
        %v2729 = vsub.s32 0, %v2728
        %v2730 = vrot.slane %v1480, %v2729
        %v2731 = vlaneseq
        %v2732 = vshrl.u32 %v2731, 7
        %v2733 = vsub.s32 0, %v2732
        %v2734 = vrot.slane %v1482, %v2733
        %v2735 = vlaneseq
        %v2736 = vshrl.u32 %v2735, 7
        %v2737 = vsub.s32 0, %v2736
        %v2738 = vrot.slane %v1557, %v2737
        %v2739 = vlaneseq
        %v2740 = vshrl.u32 %v2739, 7
        %v2741 = vsub.s32 0, %v2740
        %v2742 = vrot.slane %v1559, %v2741
        %v2743 = vlaneseq
        %v2744 = vshrl.u32 %v2743, 7
        %v2745 = vsub.s32 0, %v2744
        %v2746 = vrot.slane %v1633, %v2745
        %v2747 = vmul.f32 %v1831, %v2730
        %v2748 = vmul.f32 %v1833, %v2734
        %v2749 = vmul.f32 %v2088, %v2738
        %v2750 = vmul.f32 %v2090, %v2742
        %v2751 = vmul.f32 %v2329, %v2746
        %v2752 = vmul.f32 %v1837, %v2730
        %v2753 = vmul.f32 %v1839, %v2734
        %v2754 = vmul.f32 %v2094, %v2738
        %v2755 = vmul.f32 %v2096, %v2742
        %v2756 = vmul.f32 %v2334, %v2746
        %v2757 = vadd.f32 %v2717, %v2747
        %v2758 = vadd.f32 %v2718, %v2748
        %v2759 = vadd.f32 %v2719, %v2749
        %v2760 = vadd.f32 %v2720, %v2750
        %v2761 = vadd.f32 %v2721, %v2751
        %v2762 = vadd.f32 %v2722, %v2752
        %v2763 = vadd.f32 %v2723, %v2753
        %v2764 = vadd.f32 %v2724, %v2754
        %v2765 = vadd.f32 %v2725, %v2755
        %v2766 = vadd.f32 %v2726, %v2756
        %v2767 = vlaneseq
        %v2768 = vshrl.u32 %v2767, 7
        %v2769 = vsub.s32 1, %v2768
        %v2770 = vrot.slane %v1480, %v2769
        %v2771 = vlaneseq
        %v2772 = vshrl.u32 %v2771, 7
        %v2773 = vsub.s32 1, %v2772
        %v2774 = vrot.slane %v1482, %v2773
        %v2775 = vlaneseq
        %v2776 = vshrl.u32 %v2775, 7
        %v2777 = vsub.s32 1, %v2776
        %v2778 = vrot.slane %v1557, %v2777
        %v2779 = vlaneseq
        %v2780 = vshrl.u32 %v2779, 7
        %v2781 = vsub.s32 1, %v2780
        %v2782 = vrot.slane %v1559, %v2781
        %v2783 = vlaneseq
        %v2784 = vshrl.u32 %v2783, 7
        %v2785 = vsub.s32 1, %v2784
        %v2786 = vrot.slane %v1633, %v2785
        %v2787 = vmul.f32 %v1843, %v2770
        %v2788 = vmul.f32 %v1845, %v2774
        %v2789 = vmul.f32 %v2100, %v2778
        %v2790 = vmul.f32 %v2102, %v2782
        %v2791 = vmul.f32 %v2339, %v2786
        %v2792 = vmul.f32 %v1849, %v2770
        %v2793 = vmul.f32 %v1851, %v2774
        %v2794 = vmul.f32 %v2106, %v2778
        %v2795 = vmul.f32 %v2108, %v2782
        %v2796 = vmul.f32 %v2344, %v2786
        %v2797 = vadd.f32 %v2757, %v2787
        %v2798 = vadd.f32 %v2758, %v2788
        %v2799 = vadd.f32 %v2759, %v2789
        %v2800 = vadd.f32 %v2760, %v2790
        %v2801 = vadd.f32 %v2761, %v2791
        %v2802 = vadd.f32 %v2762, %v2792
        %v2803 = vadd.f32 %v2763, %v2793
        %v2804 = vadd.f32 %v2764, %v2794
        %v2805 = vadd.f32 %v2765, %v2795
        %v2806 = vadd.f32 %v2766, %v2796
        %v2807 = vlaneseq
        %v2808 = vshrl.u32 %v2807, 7
        %v2809 = vsub.s32 2, %v2808
        %v2810 = vrot.slane %v1480, %v2809
        %v2811 = vlaneseq
        %v2812 = vshrl.u32 %v2811, 7
        %v2813 = vsub.s32 2, %v2812
        %v2814 = vrot.slane %v1482, %v2813
        %v2815 = vlaneseq
        %v2816 = vshrl.u32 %v2815, 7
        %v2817 = vsub.s32 2, %v2816
        %v2818 = vrot.slane %v1557, %v2817
        %v2819 = vlaneseq
        %v2820 = vshrl.u32 %v2819, 7
        %v2821 = vsub.s32 2, %v2820
        %v2822 = vrot.slane %v1559, %v2821
        %v2823 = vlaneseq
        %v2824 = vshrl.u32 %v2823, 7
        %v2825 = vsub.s32 2, %v2824
        %v2826 = vrot.slane %v1633, %v2825
        %v2827 = vmul.f32 %v1855, %v2810
        %v2828 = vmul.f32 %v1857, %v2814
        %v2829 = vmul.f32 %v2112, %v2818
        %v2830 = vmul.f32 %v2114, %v2822
        %v2831 = vmul.f32 %v2349, %v2826
        %v2832 = vmul.f32 %v1861, %v2810
        %v2833 = vmul.f32 %v1863, %v2814
        %v2834 = vmul.f32 %v2118, %v2818
        %v2835 = vmul.f32 %v2120, %v2822
        %v2836 = vmul.f32 %v2354, %v2826
        %v2837 = vadd.f32 %v2797, %v2827
        %v2838 = vadd.f32 %v2798, %v2828
        %v2839 = vadd.f32 %v2799, %v2829
        %v2840 = vadd.f32 %v2800, %v2830
        %v2841 = vadd.f32 %v2801, %v2831
        %v2842 = vadd.f32 %v2802, %v2832
        %v2843 = vadd.f32 %v2803, %v2833
        %v2844 = vadd.f32 %v2804, %v2834
        %v2845 = vadd.f32 %v2805, %v2835
        %v2846 = vadd.f32 %v2806, %v2836
        %v2847 = vlaneseq
        %v2848 = vshrl.u32 %v2847, 7
        %v2849 = vsub.s32 3, %v2848
        %v2850 = vrot.slane %v1480, %v2849
        %v2851 = vlaneseq
        %v2852 = vshrl.u32 %v2851, 7
        %v2853 = vsub.s32 3, %v2852
        %v2854 = vrot.slane %v1482, %v2853
        %v2855 = vlaneseq
        %v2856 = vshrl.u32 %v2855, 7
        %v2857 = vsub.s32 3, %v2856
        %v2858 = vrot.slane %v1557, %v2857
        %v2859 = vlaneseq
        %v2860 = vshrl.u32 %v2859, 7
        %v2861 = vsub.s32 3, %v2860
        %v2862 = vrot.slane %v1559, %v2861
        %v2863 = vlaneseq
        %v2864 = vshrl.u32 %v2863, 7
        %v2865 = vsub.s32 3, %v2864
        %v2866 = vrot.slane %v1633, %v2865
        %v2867 = vmul.f32 %v1867, %v2850
        %v2868 = vmul.f32 %v1869, %v2854
        %v2869 = vmul.f32 %v2124, %v2858
        %v2870 = vmul.f32 %v2126, %v2862
        %v2871 = vmul.f32 %v2359, %v2866
        %v2872 = vmul.f32 %v1873, %v2850
        %v2873 = vmul.f32 %v1875, %v2854
        %v2874 = vmul.f32 %v2130, %v2858
        %v2875 = vmul.f32 %v2132, %v2862
        %v2876 = vmul.f32 %v2364, %v2866
        %v2877 = vadd.f32 %v2837, %v2867
        %v2878 = vadd.f32 %v2838, %v2868
        %v2879 = vadd.f32 %v2839, %v2869
        %v2880 = vadd.f32 %v2840, %v2870
        %v2881 = vadd.f32 %v2841, %v2871
        %v2882 = vadd.f32 %v2842, %v2872
        %v2883 = vadd.f32 %v2843, %v2873
        %v2884 = vadd.f32 %v2844, %v2874
        %v2885 = vadd.f32 %v2845, %v2875
        %v2886 = vadd.f32 %v2846, %v2876
        %v2887 = vlaneseq
        %v2888 = vshrl.u32 %v2887, 7
        %v2889 = vsub.s32 4, %v2888
        %v2890 = vrot.slane %v1480, %v2889
        %v2891 = vlaneseq
        %v2892 = vshrl.u32 %v2891, 7
        %v2893 = vsub.s32 4, %v2892
        %v2894 = vrot.slane %v1482, %v2893
        %v2895 = vlaneseq
        %v2896 = vshrl.u32 %v2895, 7
        %v2897 = vsub.s32 4, %v2896
        %v2898 = vrot.slane %v1557, %v2897
        %v2899 = vlaneseq
        %v2900 = vshrl.u32 %v2899, 7
        %v2901 = vsub.s32 4, %v2900
        %v2902 = vrot.slane %v1559, %v2901
        %v2903 = vlaneseq
        %v2904 = vshrl.u32 %v2903, 7
        %v2905 = vsub.s32 4, %v2904
        %v2906 = vrot.slane %v1633, %v2905
        %v2907 = vmul.f32 %v1879, %v2890
        %v2908 = vmul.f32 %v1881, %v2894
        %v2909 = vmul.f32 %v2136, %v2898
        %v2910 = vmul.f32 %v2138, %v2902
        %v2911 = vmul.f32 %v2369, %v2906
        %v2912 = vmul.f32 %v1885, %v2890
        %v2913 = vmul.f32 %v1887, %v2894
        %v2914 = vmul.f32 %v2142, %v2898
        %v2915 = vmul.f32 %v2144, %v2902
        %v2916 = vmul.f32 %v2374, %v2906
        %v2917 = vadd.f32 %v2877, %v2907
        %v2918 = vadd.f32 %v2878, %v2908
        %v2919 = vadd.f32 %v2879, %v2909
        %v2920 = vadd.f32 %v2880, %v2910
        %v2921 = vadd.f32 %v2881, %v2911
        %v2922 = vadd.f32 %v2882, %v2912
        %v2923 = vadd.f32 %v2883, %v2913
        %v2924 = vadd.f32 %v2884, %v2914
        %v2925 = vadd.f32 %v2885, %v2915
        %v2926 = vadd.f32 %v2886, %v2916
        %v2927 = vlaneseq
        %v2928 = vshrl.u32 %v2927, 7
        %v2929 = vsub.s32 5, %v2928
        %v2930 = vrot.slane %v1480, %v2929
        %v2931 = vlaneseq
        %v2932 = vshrl.u32 %v2931, 7
        %v2933 = vsub.s32 5, %v2932
        %v2934 = vrot.slane %v1482, %v2933
        %v2935 = vlaneseq
        %v2936 = vshrl.u32 %v2935, 7
        %v2937 = vsub.s32 5, %v2936
        %v2938 = vrot.slane %v1557, %v2937
        %v2939 = vlaneseq
        %v2940 = vshrl.u32 %v2939, 7
        %v2941 = vsub.s32 5, %v2940
        %v2942 = vrot.slane %v1559, %v2941
        %v2943 = vlaneseq
        %v2944 = vshrl.u32 %v2943, 7
        %v2945 = vsub.s32 5, %v2944
        %v2946 = vrot.slane %v1633, %v2945
        %v2947 = vmul.f32 %v1891, %v2930
        %v2948 = vmul.f32 %v1893, %v2934
        %v2949 = vmul.f32 %v2148, %v2938
        %v2950 = vmul.f32 %v2150, %v2942
        %v2951 = vmul.f32 %v2379, %v2946
        %v2952 = vmul.f32 %v1897, %v2930
        %v2953 = vmul.f32 %v1899, %v2934
        %v2954 = vmul.f32 %v2154, %v2938
        %v2955 = vmul.f32 %v2156, %v2942
        %v2956 = vmul.f32 %v2384, %v2946
        %v2957 = vadd.f32 %v2917, %v2947
        %v2958 = vadd.f32 %v2918, %v2948
        %v2959 = vadd.f32 %v2919, %v2949
        %v2960 = vadd.f32 %v2920, %v2950
        %v2961 = vadd.f32 %v2921, %v2951
        %v2962 = vadd.f32 %v2922, %v2952
        %v2963 = vadd.f32 %v2923, %v2953
        %v2964 = vadd.f32 %v2924, %v2954
        %v2965 = vadd.f32 %v2925, %v2955
        %v2966 = vadd.f32 %v2926, %v2956
        %v2967 = vlaneseq
        %v2968 = vshrl.u32 %v2967, 7
        %v2969 = vsub.s32 6, %v2968
        %v2970 = vrot.slane %v1480, %v2969
        %v2971 = vlaneseq
        %v2972 = vshrl.u32 %v2971, 7
        %v2973 = vsub.s32 6, %v2972
        %v2974 = vrot.slane %v1482, %v2973
        %v2975 = vlaneseq
        %v2976 = vshrl.u32 %v2975, 7
        %v2977 = vsub.s32 6, %v2976
        %v2978 = vrot.slane %v1557, %v2977
        %v2979 = vlaneseq
        %v2980 = vshrl.u32 %v2979, 7
        %v2981 = vsub.s32 6, %v2980
        %v2982 = vrot.slane %v1559, %v2981
        %v2983 = vlaneseq
        %v2984 = vshrl.u32 %v2983, 7
        %v2985 = vsub.s32 6, %v2984
        %v2986 = vrot.slane %v1633, %v2985
        %v2987 = vmul.f32 %v1903, %v2970
        %v2988 = vmul.f32 %v1905, %v2974
        %v2989 = vmul.f32 %v2160, %v2978
        %v2990 = vmul.f32 %v2162, %v2982
        %v2991 = vmul.f32 %v2389, %v2986
        %v2992 = vmul.f32 %v1909, %v2970
        %v2993 = vmul.f32 %v1911, %v2974
        %v2994 = vmul.f32 %v2166, %v2978
        %v2995 = vmul.f32 %v2168, %v2982
        %v2996 = vmul.f32 %v2394, %v2986
        %v2997 = vadd.f32 %v2957, %v2987
        %v2998 = vadd.f32 %v2958, %v2988
        %v2999 = vadd.f32 %v2959, %v2989
        %v3000 = vadd.f32 %v2960, %v2990
        %v3001 = vadd.f32 %v2961, %v2991
        %v3002 = vadd.f32 %v2962, %v2992
        %v3003 = vadd.f32 %v2963, %v2993
        %v3004 = vadd.f32 %v2964, %v2994
        %v3005 = vadd.f32 %v2965, %v2995
        %v3006 = vadd.f32 %v2966, %v2996
        %v3007 = vlaneseq
        %v3008 = vshrl.u32 %v3007, 7
        %v3009 = vsub.s32 7, %v3008
        %v3010 = vrot.slane %v1480, %v3009
        %v3011 = vlaneseq
        %v3012 = vshrl.u32 %v3011, 7
        %v3013 = vsub.s32 7, %v3012
        %v3014 = vrot.slane %v1482, %v3013
        %v3015 = vlaneseq
        %v3016 = vshrl.u32 %v3015, 7
        %v3017 = vsub.s32 7, %v3016
        %v3018 = vrot.slane %v1557, %v3017
        %v3019 = vlaneseq
        %v3020 = vshrl.u32 %v3019, 7
        %v3021 = vsub.s32 7, %v3020
        %v3022 = vrot.slane %v1559, %v3021
        %v3023 = vlaneseq
        %v3024 = vshrl.u32 %v3023, 7
        %v3025 = vsub.s32 7, %v3024
        %v3026 = vrot.slane %v1633, %v3025
        %v3027 = vmul.f32 %v1915, %v3010
        %v3028 = vmul.f32 %v1917, %v3014
        %v3029 = vmul.f32 %v2172, %v3018
        %v3030 = vmul.f32 %v2174, %v3022
        %v3031 = vmul.f32 %v2399, %v3026
        %v3032 = vmul.f32 %v1921, %v3010
        %v3033 = vmul.f32 %v1923, %v3014
        %v3034 = vmul.f32 %v2178, %v3018
        %v3035 = vmul.f32 %v2180, %v3022
        %v3036 = vmul.f32 %v2404, %v3026
        %v3037 = vadd.f32 %v2997, %v3027
        %v3038 = vadd.f32 %v2998, %v3028
        %v3039 = vadd.f32 %v2999, %v3029
        %v3040 = vadd.f32 %v3000, %v3030
        %v3041 = vadd.f32 %v3001, %v3031
        %v3042 = vadd.f32 %v3002, %v3032
        %v3043 = vadd.f32 %v3003, %v3033
        %v3044 = vadd.f32 %v3004, %v3034
        %v3045 = vadd.f32 %v3005, %v3035
        %v3046 = vadd.f32 %v3006, %v3036
        %v3047 = vmul.f32 %v3037, %v1243
        %v3048 = vmul.f32 %v3038, %v1245
        %v3049 = vmul.f32 %v3039, %v1320
        %v3050 = vmul.f32 %v3040, %v1322
        %v3051 = vmul.f32 %v3041, %v1397
        %v3052 = vmul.f32 %v3042, %v1249
        %v3053 = vmul.f32 %v3043, %v1251
        %v3054 = vmul.f32 %v3044, %v1326
        %v3055 = vmul.f32 %v3045, %v1328
        %v3056 = vmul.f32 %v3046, %v1402
        %v3057 = vadd.f32 %v3047, %v3052
        %v3058 = vrot.slane %v3057, 4
        %v3059 = vadd.f32 %v3057, %v3058
        %v3060 = vrot.slane %v3059, 2
        %v3061 = vadd.f32 %v3059, %v3060
        %v3062 = vrot.slane %v3061, 1
        %v3063 = vadd.f32 %v3061, %v3062
        %v3064 = vadd.f32 %v3048, %v3053
        %v3065 = vrot.slane %v3064, 4
        %v3066 = vadd.f32 %v3064, %v3065
        %v3067 = vrot.slane %v3066, 2
        %v3068 = vadd.f32 %v3066, %v3067
        %v3069 = vrot.slane %v3068, 1
        %v3070 = vadd.f32 %v3068, %v3069
        %v3071 = vadd.f32 %v3049, %v3054
        %v3072 = vrot.slane %v3071, 4
        %v3073 = vadd.f32 %v3071, %v3072
        %v3074 = vrot.slane %v3073, 2
        %v3075 = vadd.f32 %v3073, %v3074
        %v3076 = vrot.slane %v3075, 1
        %v3077 = vadd.f32 %v3075, %v3076
        %v3078 = vadd.f32 %v3050, %v3055
        %v3079 = vrot.slane %v3078, 4
        %v3080 = vadd.f32 %v3078, %v3079
        %v3081 = vrot.slane %v3080, 2
        %v3082 = vadd.f32 %v3080, %v3081
        %v3083 = vrot.slane %v3082, 1
        %v3084 = vadd.f32 %v3082, %v3083
        %v3085 = vadd.f32 %v3051, %v3056
        %v3086 = vrot.slane %v3085, 4
        %v3087 = vadd.f32 %v3085, %v3086
        %v3088 = vrot.slane %v3087, 2
        %v3089 = vadd.f32 %v3087, %v3088
        %v3090 = vrot.slane %v3089, 1
        %v3091 = vadd.f32 %v3089, %v3090
        %v3097 = vcombine.low %v3063, %v3070
        %v3098 = vcombine.low %v3077, %v3084
        %v3100 = vunpack.c.l.s4 1966171168
        %v3101 = vunpack.c.0.s8 %v3100
        %v3102 = vlaneseq
        %v3103 = vshrl.u32 %v3102, 7
        %v3104 = vsub.s32 %v3101, %v3103
        %v3105 = vrot.slane %v3097, %v3104
        %v3107 = vunpack.c.l.s4 1966171168
        %v3108 = vunpack.c.0.s8 %v3107
        %v3109 = vlaneseq
        %v3110 = vshrl.u32 %v3109, 7
        %v3111 = vsub.s32 %v3108, %v3110
        %v3112 = vrot.slane %v3098, %v3111
        %v3114 = vunpack.c.l.s4 1966171168
        %v3115 = vunpack.c.0.s8 %v3114
        %v3116 = vlaneseq
        %v3117 = vshrl.u32 %v3116, 7
        %v3118 = vsub.s32 %v3115, %v3117
        %v3119 = vrot.slane %v3091, %v3118
        %v3120 = vcombine.low %v3105, %v3112
        %v3122 = vunpack.c.l.s4 1966171168
        %v3123 = vunpack.c.0.s8 %v3122
        %v3124 = vlaneseq
        %v3125 = vshrl.u32 %v3124, 7
        %v3126 = vsub.s32 %v3123, %v3125
        %v3127 = vrot.slane %v3120, %v3126
        %v3129 = vunpack.c.l.s4 1966171168
        %v3130 = vunpack.c.0.s8 %v3129
        %v3131 = vlaneseq
        %v3132 = vshrl.u32 %v3131, 7
        %v3133 = vsub.s32 %v3130, %v3132
        %v3134 = vrot.slane %v3119, %v3133
        %v3135 = vcombine.low %v3127, %v3134
        %v3137 = vlaneseq
        %vm3138 = vcmp.ge.s32.totalorder %v3137, 0
        %vm3139 = vcmp.lt.s32.totalorder %v3137, 640
        %vm3140 = vmand %vm3138, %vm3139
        %3141 = vst.msk [vmem:[%s369] sm:$0x1f] %vm3140, %v3135
        %s3142 = sand.u32 %s176, 1
        %s3143 = scalar_lea.sflag [#allocation4], %s3142
        %s3144 = sand.u32 %s176, 1
        %s3145 = smul.addr %s3144, 5
        %s3146 = scalar_lea.vmem [#allocation11], %s3145
        // Predicated region
        $region65: #{tpu_custom_call.1} parent=43 // pred_check
          %p3147 = pneg %p186
        $region66: #{tpu_custom_call.1} parent=43 // pred_check_branch
          %3149 = sbr.rel (%p3147) target = $region68
        $region67: #{tpu_custom_call.1} parent=43 // pred_region
          %s3150 = smul.u32 5, %s27
          %s3152 = ssub.s32 80, 80
          %3153 = vsyncadd %s3143, %s3152
          %s3154 = smul.addr %s3150, 16
          %s3155 = scalar_lea.hbm %s6, %s3154
          %s3157 = sshll.u32 %s3146, 4
          %s3158 = int_to_ptr.vmem [resolvable:$true] %s3157
          %3160 = dma.vmem_to_hbm [thread:$0]  %s3158, 80, %s3155, %s3143
        $region68: #{tpu_custom_call.1} parent=43 // pred_fallthru
          _
      $region44: #{tpu_custom_call.1} parent=5 // pred_fallthru
        _
      %p3161 = scmp.le.s32.totalorder 2, %s22
      // Predicated region
      $region69: #{tpu_custom_call.1} parent=5 // pred_check
        %p3162 = pneg %p3161
      $region70: #{tpu_custom_call.1} parent=5 // pred_check_branch
        %3164 = sbr.rel (%p3162) target = $region72
      $region71: #{tpu_custom_call.1} parent=5 // pred_region
        %s3165 = ssub.s32 %s22, 2
        // Predicated region
        $region73: #{tpu_custom_call.1} parent=71 // pred_check
          %p3166 = pneg %p192
        $region74: #{tpu_custom_call.1} parent=71 // pred_check_branch
          %3168 = sbr.rel (%p3166) target = $region76
        $region75: #{tpu_custom_call.1} parent=71 // pred_region
          %s3169 = sand.u32 %s177, 1
          %s3170 = scalar_lea.sflag [#allocation4], %s3169
          %s3171 = sand.u32 %s177, 1
          %s3172 = smul.addr %s3171, 5
          %s3173 = scalar_lea.vmem [#allocation11], %s3172
          %3174 = dma.done %s3170, 80
        $region76: #{tpu_custom_call.1} parent=71 // pred_fallthru
          _
      $region72: #{tpu_custom_call.1} parent=5 // pred_fallthru
        _
    $region6: #{tpu_custom_call.1} parent=1 // loop_footer
      %s26 = sadd.s32 1, %s22
    $region7: #{tpu_custom_call.1} parent=1 // loop_footer_branch
      %21 = sbr.rel target = $region3
    $region8: #{tpu_custom_call.1} parent=1 // loop_exit
      _
    %3175 = vsyncpa [#allocation3], 1
    %s3176 = scalar_lea.sflag [#allocation3], 1
    %3177 = vsyncpa %s3176, 1
    %3178 = vsyncpa [#allocation6], 1
    %s3179 = scalar_lea.sflag [#allocation6], 1
    %3180 = vsyncpa %s3179, 1
    %3181 = vsyncpa [#allocation9], 1
    %3182 = vsyncpa [#allocation4], 1
    %s3183 = scalar_lea.sflag [#allocation4], 1
    %3184 = vsyncpa %s3183, 1

</llo_original>
